<compile_context>
chip_gen: v7x
topology: tpu7x:2x2x1
jax: 0.10.0
libtpu: 0.0.40
codegen_flags: <defaults>
</compile_context>

<pallas_src>
import functools

import numpy as np
import jax
import jax.numpy as jnp
from jax.experimental import pallas as pl
from jax.experimental.pallas import tpu as pltpu

PAD = 0
NEG_BIAS = -1e30    # large finite negative mask bias (avoids inf-inf -> NaN)
NEG_INIT = -3.0e38  # finite "-inf" init for the online-softmax running max


# ----------------------------------------------------------------------------
# Tiling helper
# ----------------------------------------------------------------------------
def _pick_tile(dim, target, align):
    """Largest tile <= target that is an `align`-multiple divisor of `dim`, else full dim.
    (Awkward dims fall back to a full-extent block; fine for the sizes used here.)"""
    if dim <= target:
        return dim
    t = (target // align) * align
    while t >= align:
        if dim % t == 0:
            return t
        t -= align
    return dim


# ----------------------------------------------------------------------------
# Tiled linear:  (M,K) @ (K,N) + b  [+ ReLU]   -- bf16 in/out, f32 accumulate
# ----------------------------------------------------------------------------
def _linear_kernel(x_ref, w_ref, b_ref, o_ref, acc_ref, *, relu):
    @pl.when(pl.program_id(2) == 0)
    def _init():
        acc_ref[...] = jnp.zeros_like(acc_ref)

    acc_ref[...] += jnp.dot(x_ref[...], w_ref[...], preferred_element_type=jnp.float32)

    @pl.when(pl.program_id(2) == pl.num_programs(2) - 1)
    def _finalize():
        y = acc_ref[...] + b_ref[...]           # f32 epilogue math (VPU)
        if relu:
            y = jnp.maximum(y, 0.0)
        o_ref[...] = y.astype(o_ref.dtype)      # bf16 store: half the store bundles


def linear(x2d, w, b, relu=False):
    """x2d:(M,K) bf16, w:(K,N) bf16, b:(N,) f32 -> (M,N) bf16."""
    x2d = x2d.astype(jnp.bfloat16)
    w = w.astype(jnp.bfloat16)
    M, K = x2d.shape
    K2, N = w.shape
    assert K == K2
    tm = _pick_tile(M, 512, 16)       # bf16 packs 2 rows / sublane
    tn = _pick_tile(N, 512, 128)
    tk = _pick_tile(K, 1024, 128)
    grid = (M // tm, N // tn, K // tk)
    cost = pl.CostEstimate(flops=2 * M * N * K, transcendentals=0,
                           bytes_accessed=2 * (M * K + K * N + M * N) + 4 * N)
    return pl.pallas_call(
        functools.partial(_linear_kernel, relu=relu),
        out_shape=jax.ShapeDtypeStruct((M, N), jnp.bfloat16),
        grid=grid,
        in_specs=[
            pl.BlockSpec((tm, tk), lambda i, j, k: (i, k)),
            pl.BlockSpec((tk, tn), lambda i, j, k: (k, j)),
            pl.BlockSpec((1, tn), lambda i, j, k: (0, j)),
        ],
        out_specs=pl.BlockSpec((tm, tn), lambda i, j, k: (i, j)),
        scratch_shapes=[pltpu.VMEM((tm, tn), jnp.float32)],
        compiler_params=pltpu.CompilerParams(
            dimension_semantics=("parallel", "parallel", "arbitrary")),
        cost_estimate=cost,
    )(x2d, w, b.reshape(1, N).astype(jnp.float32))


# ----------------------------------------------------------------------------
# Fused multi-output projection (Q|K|V or K|V): one activation read, separate outputs.
# Removes the per-layer weight concat and the HBM-materialized qkv slices.
# ----------------------------------------------------------------------------
def _proj_kernel(x_ref, *refs, n_out, relu):
    w_refs = refs[0:n_out]
    b_refs = refs[n_out:2 * n_out]
    o_refs = refs[2 * n_out:3 * n_out]
    acc_refs = refs[3 * n_out:4 * n_out]
    k = pl.program_id(1)

    @pl.when(k == 0)
    def _init():
        for acc in acc_refs:
            acc[...] = jnp.zeros_like(acc)

    x = x_ref[...]                              # activation tile read ONCE for all heads
    for i in range(n_out):
        acc_refs[i][...] += jnp.dot(x, w_refs[i][...],
                                    preferred_element_type=jnp.float32)

    @pl.when(k == pl.num_programs(1) - 1)
    def _finalize():
        for i in range(n_out):
            y = acc_refs[i][...] + b_refs[i][...]
            if relu:
                y = jnp.maximum(y, 0.0)
            o_refs[i][...] = y.astype(o_refs[i].dtype)


def project(x2d, ws, bs, relu=False):
    """x2d:(M,K); ws: list of (K,N_i); bs: list of (N_i,). Returns tuple of (M,N_i) bf16."""
    x2d = x2d.astype(jnp.bfloat16)
    ws = [w.astype(jnp.bfloat16) for w in ws]
    M, K = x2d.shape
    n_out = len(ws)
    ns = [int(w.shape[1]) for w in ws]
    tm = _pick_tile(M, 256, 16)
    tk = _pick_tile(K, 1024, 128)
    grid = (M // tm, K // tk)
    in_specs = [pl.BlockSpec((tm, tk), lambda i, k: (i, k))]
    in_specs += [pl.BlockSpec((tk, n), lambda i, k: (k, 0)) for n in ns]
    in_specs += [pl.BlockSpec((1, n), lambda i, k: (0, 0)) for n in ns]
    out_shape = tuple(jax.ShapeDtypeStruct((M, n), jnp.bfloat16) for n in ns)
    out_specs = tuple(pl.BlockSpec((tm, n), lambda i, k: (i, 0)) for n in ns)
    scratch = [pltpu.VMEM((tm, n), jnp.float32) for n in ns]
    cost = pl.CostEstimate(
        flops=2 * M * K * sum(ns), transcendentals=0,
        bytes_accessed=2 * (M * K + K * sum(ns) + M * sum(ns)) + 4 * sum(ns))
    return pl.pallas_call(
        functools.partial(_proj_kernel, n_out=n_out, relu=relu),
        out_shape=out_shape, grid=grid,
        in_specs=in_specs, out_specs=out_specs,
        scratch_shapes=scratch,
        compiler_params=pltpu.CompilerParams(
            dimension_semantics=("parallel", "arbitrary")),
        cost_estimate=cost,
    )(x2d, *ws, *[b.reshape(1, -1).astype(jnp.float32) for b in bs])


# ----------------------------------------------------------------------------
# Flash-style attention over head-interleaved (B, L, H*d) activations.
# Online softmax over Lk tiles; causal mask built in-kernel from iota; key-pad
# bias passed as a tiny (B, 1, Lk) additive vector.
# ----------------------------------------------------------------------------
def _flash_attn_kernel(q_ref, k_ref, v_ref, kb_ref, o_ref, m_scr, l_scr, acc_scr,
                       *, n_head, d_k, d_v, tq, tk, causal):
    ki = pl.program_id(2)

    @pl.when(ki == 0)
    def _init():
        m_scr[...] = jnp.full(m_scr.shape, NEG_INIT, m_scr.dtype)
        l_scr[...] = jnp.zeros_like(l_scr)
        acc_scr[...] = jnp.zeros_like(acc_scr)

    q = q_ref[0]                                  # (tq, H*dk) bf16 (1/sqrt(dk) folded in Wq)
    k = k_ref[0]                                  # (tk, H*dk)
    v = v_ref[0]                                  # (tk, H*dv)
    bias = kb_ref[0].astype(jnp.float32)          # (1, tk) additive key-pad bias

    if causal:
        rows = pl.program_id(1) * tq + jax.lax.broadcasted_iota(jnp.int32, (tq, tk), 0)
        cols = ki * tk + jax.lax.broadcasted_iota(jnp.int32, (tq, tk), 1)
        bias = bias + jnp.where(cols > rows, NEG_BIAS, 0.0).astype(jnp.float32)

    for h in range(n_head):                       # static unroll over heads (in-VMEM split)
        q_h = q[:, h * d_k:(h + 1) * d_k]
        k_h = k[:, h * d_k:(h + 1) * d_k]
        v_h = v[:, h * d_v:(h + 1) * d_v]
        # q_h @ k_h.T without an explicit transpose (MXU handles trans_b).
        s = jax.lax.dot_general(q_h, k_h, (((1,), (1,)), ((), ())),
                                preferred_element_type=jnp.float32)     # (tq, tk)
        s = s + bias
        m_prev = m_scr[h]                                               # (tq, 1) f32
        m_new = jnp.maximum(m_prev, jnp.max(s, axis=-1, keepdims=True))
        alpha = jnp.exp(m_prev - m_new)
        p = jnp.exp(s - m_new)
        l_scr[h] = alpha * l_scr[h] + jnp.sum(p, axis=-1, keepdims=True)
        acc_scr[h] = alpha * acc_scr[h] + jnp.dot(p.astype(v_h.dtype), v_h,
                                                  preferred_element_type=jnp.float32)
        m_scr[h] = m_new

    @pl.when(ki == pl.num_programs(2) - 1)
    def _finalize():
        outs = [acc_scr[h] * pl.reciprocal(l_scr[h], approx=True) for h in range(n_head)]
        # Single lane-dense store of the head-interleaved output (no transpose needed later).
        o_ref[0] = jnp.concatenate(outs, axis=-1).astype(o_ref.dtype)


def flash_attention(q, k, v, key_bias, *, n_head, d_k, d_v, causal):
    """q:(B,Lq,H*dk), k:(B,Lk,H*dk), v:(B,Lk,H*dv) bf16; key_bias:(B,1,Lk) f32 additive."""
    B, Lq, Hdk = q.shape
    _, Lk, Hdv = v.shape
    tq = _pick_tile(Lq, 256, 16)
    tk = _pick_tile(Lk, 512, 128)
    grid = (B, Lq // tq, Lk // tk)
    cost = pl.CostEstimate(
        flops=2 * B * n_head * Lq * Lk * (d_k + d_v),
        transcendentals=B * n_head * Lq * Lk,
        bytes_accessed=2 * (B * Lq * Hdk + B * Lk * Hdk + B * Lk * Hdv + B * Lq * Hdv)
                       + 4 * B * Lk)
    return pl.pallas_call(
        functools.partial(_flash_attn_kernel, n_head=n_head, d_k=d_k, d_v=d_v,
                          tq=tq, tk=tk, causal=causal),
        out_shape=jax.ShapeDtypeStruct((B, Lq, Hdv), jnp.bfloat16),
        grid=grid,
        in_specs=[
            pl.BlockSpec((1, tq, Hdk), lambda b, qi, ki: (b, qi, 0)),
            pl.BlockSpec((1, tk, Hdk), lambda b, qi, ki: (b, ki, 0)),
            pl.BlockSpec((1, tk, Hdv), lambda b, qi, ki: (b, ki, 0)),
            pl.BlockSpec((1, 1, tk), lambda b, qi, ki: (b, 0, ki)),
        ],
        out_specs=pl.BlockSpec((1, tq, Hdv), lambda b, qi, ki: (b, qi, 0)),
        scratch_shapes=[pltpu.VMEM((n_head, tq, 1), jnp.float32),
                        pltpu.VMEM((n_head, tq, 1), jnp.float32),
                        pltpu.VMEM((n_head, tq, d_v), jnp.float32)],
        compiler_params=pltpu.CompilerParams(
            dimension_semantics=("parallel", "parallel", "arbitrary")),
        cost_estimate=cost,
    )(q.astype(jnp.bfloat16), k.astype(jnp.bfloat16), v.astype(jnp.bfloat16), key_bias)


# ----------------------------------------------------------------------------
# Fused residual-add + LayerNorm + non-pad row mask (single-pass moments, bf16 I/O)
# ----------------------------------------------------------------------------
def _add_ln_kernel(x_ref, r_ref, g_ref, b_ref, m_ref, o_ref):
    x = x_ref[...].astype(jnp.float32) + r_ref[...].astype(jnp.float32)
    mean = jnp.mean(x, axis=-1, keepdims=True)
    meansq = jnp.mean(x * x, axis=-1, keepdims=True)      # single-pass: var = E[x^2]-E[x]^2
    var = meansq - mean * mean
    xn = (x - mean) * jax.lax.rsqrt(var + 1e-5)           # nn.LayerNorm(eps=1e-5)
    o_ref[...] = ((xn * g_ref[...] + b_ref[...]) * m_ref[...]).astype(o_ref.dtype)


def add_layernorm_masked(x, residual, gamma, beta, row_mask):
    """x,residual:(B,L,D) bf16; gamma,beta:(D,) f32; row_mask:(B*L,1) f32 -> (B,L,D) bf16."""
    B, L, D = x.shape
    BL = B * L
    tm = _pick_tile(BL, 512, 16)
    cost = pl.CostEstimate(flops=8 * BL * D, transcendentals=BL,
                           bytes_accessed=2 * 3 * BL * D + 4 * BL + 8 * D)
    out = pl.pallas_call(
        _add_ln_kernel,
        out_shape=jax.ShapeDtypeStruct((BL, D), jnp.bfloat16),
        grid=(BL // tm,),
        in_specs=[
            pl.BlockSpec((tm, D), lambda i: (i, 0)),
            pl.BlockSpec((tm, D), lambda i: (i, 0)),
            pl.BlockSpec((1, D), lambda i: (0, 0)),
            pl.BlockSpec((1, D), lambda i: (0, 0)),
            pl.BlockSpec((tm, 1), lambda i: (i, 0)),
        ],
        out_specs=pl.BlockSpec((tm, D), lambda i: (i, 0)),
        compiler_params=pltpu.CompilerParams(dimension_semantics=("parallel",)),
        cost_estimate=cost,
    )(x.reshape(BL, D).astype(jnp.bfloat16),
      residual.reshape(BL, D).astype(jnp.bfloat16),
      gamma.reshape(1, D).astype(jnp.float32),
      beta.reshape(1, D).astype(jnp.float32),
      row_mask)
    return out.reshape(B, L, D)


# ----------------------------------------------------------------------------
# Model pieces (JAX glue calling the Pallas kernels)
# ----------------------------------------------------------------------------
def multi_head_attention(q_in, kv_in, key_bias, non_pad, p, n_head, d_k, d_v,
                         causal, self_attn):
    B, Lq, D = q_in.shape
    _, Lk, _ = kv_in.shape
    residual = q_in
    if self_attn:
        q2, k2, v2 = project(q_in.reshape(B * Lq, D),
                             [p["w_qs"], p["w_ks"], p["w_vs"]],
                             [p["b_qs"], p["b_ks"], p["b_vs"]])
    else:
        (q2,) = project(q_in.reshape(B * Lq, D), [p["w_qs"]], [p["b_qs"]])
        k2, v2 = project(kv_in.reshape(B * Lk, D),
                         [p["w_ks"], p["w_vs"]], [p["b_ks"], p["b_vs"]])

    # Stay in (B, L, H*d) head-interleaved layout: no HBM transposes around attention.
    attn = flash_attention(q2.reshape(B, Lq, n_head * d_k),
                           k2.reshape(B, Lk, n_head * d_k),
                           v2.reshape(B, Lk, n_head * d_v),
                           key_bias, n_head=n_head, d_k=d_k, d_v=d_v, causal=causal)
    out = linear(attn.reshape(B * Lq, n_head * d_v), p["fc_w"], p["fc_b"]).reshape(B, Lq, D)
    # dropout -> identity (eval mode); non-pad row mask fused into the LN epilogue.
    return add_layernorm_masked(out, residual, p["ln_g"], p["ln_b"], non_pad)


def positionwise_ffn(x, p, non_pad):
    # Conv1d(d_model, d_inner, 1) + ReLU + Conv1d(d_inner, d_model, 1), channel-last.
    B, L, D = x.shape
    residual = x
    h = linear(x.reshape(B * L, D), p["w1"], p["b1"], relu=True)
    o = linear(h, p["w2"], p["b2"]).reshape(B, L, D)
    return add_layernorm_masked(o, residual, p["ln_g"], p["ln_b"], non_pad)


def pgen_forward(params, tgt_seq, tgt_pos, src_seq, enc_output, *, n_head, d_k, d_v):
    B, L = tgt_seq.shape
    S = src_seq.shape[1]

    non_pad = (tgt_seq != PAD).astype(jnp.float32).reshape(B * L, 1)
    # Only O(B*L) key-pad biases go to HBM; the causal part is built in-kernel from iota.
    slf_key_bias = jnp.where(tgt_seq == PAD, NEG_BIAS, 0.0).astype(jnp.float32).reshape(B, 1, L)
    enc_key_bias = jnp.where(src_seq == PAD, NEG_BIAS, 0.0).astype(jnp.float32).reshape(B, 1, S)

    dec = (params["tgt_word_emb"][tgt_seq] + params["pos_table"][tgt_pos]).astype(jnp.bfloat16)
    enc = enc_output.astype(jnp.bfloat16)

    for lp in params["layers"]:
        dec = multi_head_attention(dec, dec, slf_key_bias, non_pad, lp["slf"],
                                   n_head, d_k, d_v, causal=True, self_attn=True)
        dec = multi_head_attention(dec, enc, enc_key_bias, non_pad, lp["enc"],
                                   n_head, d_k, d_v, causal=False, self_attn=False)
        dec = positionwise_ffn(dec, lp["ffn"], non_pad)
    # TODO(synk): return_attns=True path (per-layer attention maps) not wired out.
    return (dec.astype(jnp.float32),)


# ----------------------------------------------------------------------------
# Parameter init (PyTorch-style f32) and one-time prep (fold q scale, cast to bf16)
# ----------------------------------------------------------------------------
def get_sinusoid_encoding_table(n_position, d_hid, padding_idx=None):
    def cal_angle(position, hid_idx):
        return position / np.power(10000, 2 * (hid_idx // 2) / d_hid)

    table = np.array([[cal_angle(pos, j) for j in range(d_hid)]
                      for pos in range(n_position)], dtype=np.float64)
    table[:, 0::2] = np.sin(table[:, 0::2])
    table[:, 1::2] = np.cos(table[:, 1::2])
    if padding_idx is not None:
        table[padding_idx] = 0.0
    return jnp.asarray(table, dtype=jnp.float32)


def init_params(key, *, n_vocab, n_position, d_model, d_inner, n_layers, n_head, d_k, d_v):
    def normal(k, shape, std):
        return (jax.random.normal(k, shape, jnp.float32) * std).astype(jnp.float32)

    keys = jax.random.split(key, 1 + n_layers)
    emb = normal(keys[0], (n_vocab, d_model), 0.02).at[PAD].set(0.0)
    params = {
        "tgt_word_emb": emb,
        "pos_table": get_sinusoid_encoding_table(n_position, d_model, padding_idx=0),
        "layers": [],
    }
    for li in range(n_layers):
        lk = jax.random.split(keys[1 + li], 16)

        def mha(ks):
            std_qk = np.sqrt(2.0 / (d_model + d_k))
            std_v = np.sqrt(2.0 / (d_model + d_v))
            std_fc = np.sqrt(2.0 / (n_head * d_v + d_model))
            return {
                "w_qs": normal(ks[0], (d_model, n_head * d_k), std_qk),
                "b_qs": jnp.zeros((n_head * d_k,), jnp.float32),
                "w_ks": normal(ks[1], (d_model, n_head * d_k), std_qk),
                "b_ks": jnp.zeros((n_head * d_k,), jnp.float32),
                "w_vs": normal(ks[2], (d_model, n_head * d_v), std_v),
                "b_vs": jnp.zeros((n_head * d_v,), jnp.float32),
                "fc_w": normal(ks[3], (n_head * d_v, d_model), std_fc),
                "fc_b": jnp.zeros((d_model,), jnp.float32),
                "ln_g": jnp.ones((d_model,), jnp.float32),
                "ln_b": jnp.zeros((d_model,), jnp.float32),
            }

        ffn = {
            "w1": normal(lk[8], (d_model, d_inner), 1.0 / np.sqrt(d_model)),
            "b1": jnp.zeros((d_inner,), jnp.float32),
            "w2": normal(lk[9], (d_inner, d_model), 1.0 / np.sqrt(d_inner)),
            "b2": jnp.zeros((d_model,), jnp.float32),
            "ln_g": jnp.ones((d_model,), jnp.float32),
            "ln_b": jnp.zeros((d_model,), jnp.float32),
        }
        params["layers"].append({"slf": mha(lk[0:4]), "enc": mha(lk[4:8]), "ffn": ffn})
    return params


def prepare_params(params, d_k):
    """One-time prep: fold 1/sqrt(d_k) into Wq/bq, cast matmul weights to bf16."""
    scale = 1.0 / float(d_k) ** 0.5

    def prep_mha(m):
        return {
            "w_qs": (m["w_qs"] * scale).astype(jnp.bfloat16),
            "b_qs": (m["b_qs"] * scale).astype(jnp.float32),
            "w_ks": m["w_ks"].astype(jnp.bfloat16), "b_ks": m["b_ks"],
            "w_vs": m["w_vs"].astype(jnp.bfloat16), "b_vs": m["b_vs"],
            "fc_w": m["fc_w"].astype(jnp.bfloat16), "fc_b": m["fc_b"],
            "ln_g": m["ln_g"], "ln_b": m["ln_b"],
        }

    def prep_ffn(f):
        return {"w1": f["w1"].astype(jnp.bfloat16), "b1": f["b1"],
                "w2": f["w2"].astype(jnp.bfloat16), "b2": f["b2"],
                "ln_g": f["ln_g"], "ln_b": f["ln_b"]}

    return {
        "tgt_word_emb": params["tgt_word_emb"],
        "pos_table": params["pos_table"],
        "layers": [{"slf": prep_mha(l["slf"]), "enc": prep_mha(l["enc"]),
                    "ffn": prep_ffn(l["ffn"])} for l in params["layers"]],
    }


# ----------------------------------------------------------------------------
if __name__ == "__main__":
    # Small, self-consistent shapes.
    B, L, S = 2, 8, 8
    n_tgt_vocab = 50
    len_max_seq = 16
    d_word_vec = d_model = 32
    n_layers = 2
    n_head = 2
    d_k = d_v = 16
    d_inner = 64
    n_position = len_max_seq + 1

    key = jax.random.PRNGKey(0)
    k_par, k_tgt, k_src, k_enc = jax.random.split(key, 4)

    raw_params = init_params(
        k_par, n_vocab=n_tgt_vocab, n_position=n_position, d_model=d_model,
        d_inner=d_inner, n_layers=n_layers, n_head=n_head, d_k=d_k, d_v=d_v)
    params = prepare_params(raw_params, d_k)   # one-time: scale fold + bf16 cast

    # Target / source token ids with trailing PAD on the second example.
    tgt_seq = jax.random.randint(k_tgt, (B, L), 1, n_tgt_vocab, dtype=jnp.int32)
    tgt_seq = tgt_seq.at[1, L - 2:].set(PAD)
    src_seq = jax.random.randint(k_src, (B, S), 1, n_tgt_vocab, dtype=jnp.int32)
    src_seq = src_seq.at[1, S - 3:].set(PAD)
    # Positions: 1..L for real tokens, 0 for pads (position_enc padding_idx=0).
    tgt_pos = jnp.where(tgt_seq != PAD,
                        jnp.arange(1, L + 1, dtype=jnp.int32)[None, :], 0)
    enc_output = jax.random.normal(k_enc, (B, S, d_model), jnp.float32)

    fwd = jax.jit(functools.partial(pgen_forward, n_head=n_head, d_k=d_k, d_v=d_v))
    (dec_output,) = fwd(params, tgt_seq, tgt_pos, src_seq, enc_output)
    dec_output = jax.block_until_ready(dec_output)
    assert dec_output.shape == (B, L, d_model)
    assert bool(jnp.all(jnp.isfinite(dec_output)))
    print("KERNEL_OK")
</pallas_src>

<mosaic_0001>
module attributes {stable_mosaic.version = 11 : i64} {
  func.func @_proj_kernel(%arg0: i32, %arg1: i32, %arg2: memref<16x32xbf16, #tpu.memory_space<vmem>>, %arg3: memref<32x32xbf16, #tpu.memory_space<vmem>>, %arg4: memref<32x32xbf16, #tpu.memory_space<vmem>>, %arg5: memref<32x32xbf16, #tpu.memory_space<vmem>>, %arg6: memref<1x32xf32, #tpu.memory_space<vmem>>, %arg7: memref<1x32xf32, #tpu.memory_space<vmem>>, %arg8: memref<1x32xf32, #tpu.memory_space<vmem>>, %arg9: memref<16x32xbf16, #tpu.memory_space<vmem>>, %arg10: memref<16x32xbf16, #tpu.memory_space<vmem>>, %arg11: memref<16x32xbf16, #tpu.memory_space<vmem>>, %arg12: memref<16x32xf32, #tpu.memory_space<vmem>>, %arg13: memref<16x32xf32, #tpu.memory_space<vmem>>, %arg14: memref<16x32xf32, #tpu.memory_space<vmem>>) attributes {dimension_semantics = [#tpu.dimension_semantics<parallel>, #tpu.dimension_semantics<arbitrary>], iteration_bounds = array<i64: 1, 1>, scalar_prefetch = 0 : i64, scratch_operands = 3 : i64, tpu.core_type = #tpu.core_type<tc>, window_params = [{transform_indices = @transform_0, window_bounds = array<i64: 16, 32>}, {transform_indices = @transform_1, window_bounds = array<i64: 32, 32>}, {transform_indices = @transform_2, window_bounds = array<i64: 32, 32>}, {transform_indices = @transform_3, window_bounds = array<i64: 32, 32>}, {pipeline_mode = #tpu.pipeline_mode<synchronous>, transform_indices = @transform_4, window_bounds = array<i64: 1, 32>}, {pipeline_mode = #tpu.pipeline_mode<synchronous>, transform_indices = @transform_5, window_bounds = array<i64: 1, 32>}, {pipeline_mode = #tpu.pipeline_mode<synchronous>, transform_indices = @transform_6, window_bounds = array<i64: 1, 32>}, {transform_indices = @transform_7, window_bounds = array<i64: 16, 32>}, {transform_indices = @transform_8, window_bounds = array<i64: 16, 32>}, {transform_indices = @transform_9, window_bounds = array<i64: 16, 32>}]} {
    %c0_i32 = arith.constant 0 : i32
    %0 = arith.cmpi eq, %arg1, %c0_i32 : i32
    %1 = arith.extui %0 : i1 to i32
    %c0_i32_0 = arith.constant 0 : i32
    %2 = arith.cmpi ne, %1, %c0_i32_0 : i32
    scf.if %2 {
      %cst_24 = arith.constant 0.000000e+00 : f32
      %22 = vector.broadcast %cst_24 : f32 to vector<16x32xf32>
      %c0_25 = arith.constant 0 : index
      %c0_26 = arith.constant 0 : index
      %23 = vector.load %arg12[%c0_25, %c0_26] : memref<16x32xf32, #tpu.memory_space<vmem>>, vector<16x32xf32>
      tpu.vector_store %arg12[%c0_25, %c0_26], %22 {strides = array<i32>} : memref<16x32xf32, #tpu.memory_space<vmem>>, vector<16x32xf32>,
      %cst_27 = arith.constant 0.000000e+00 : f32
      %24 = vector.broadcast %cst_27 : f32 to vector<16x32xf32>
      %c0_28 = arith.constant 0 : index
      %c0_29 = arith.constant 0 : index
      %25 = vector.load %arg13[%c0_28, %c0_29] : memref<16x32xf32, #tpu.memory_space<vmem>>, vector<16x32xf32>
      tpu.vector_store %arg13[%c0_28, %c0_29], %24 {strides = array<i32>} : memref<16x32xf32, #tpu.memory_space<vmem>>, vector<16x32xf32>,
      %cst_30 = arith.constant 0.000000e+00 : f32
      %26 = vector.broadcast %cst_30 : f32 to vector<16x32xf32>
      %c0_31 = arith.constant 0 : index
      %c0_32 = arith.constant 0 : index
      %27 = vector.load %arg14[%c0_31, %c0_32] : memref<16x32xf32, #tpu.memory_space<vmem>>, vector<16x32xf32>
      tpu.vector_store %arg14[%c0_31, %c0_32], %26 {strides = array<i32>} : memref<16x32xf32, #tpu.memory_space<vmem>>, vector<16x32xf32>,
    } else {
    }
    %c0 = arith.constant 0 : index
    %c0_1 = arith.constant 0 : index
    %3 = vector.load %arg2[%c0, %c0_1] : memref<16x32xbf16, #tpu.memory_space<vmem>>, vector<16x32xbf16>
    %c0_2 = arith.constant 0 : index
    %c0_3 = arith.constant 0 : index
    %4 = vector.load %arg12[%c0_2, %c0_3] : memref<16x32xf32, #tpu.memory_space<vmem>>, vector<16x32xf32>
    %c0_4 = arith.constant 0 : index
    %c0_5 = arith.constant 0 : index
    %5 = vector.load %arg3[%c0_4, %c0_5] : memref<32x32xbf16, #tpu.memory_space<vmem>>, vector<32x32xbf16>
    %cst = arith.constant dense<0.000000e+00> : vector<16x32xf32>
    %6 = tpu.matmul %3, %5, %cst {dimension_numbers = #tpu.dot_dimension_numbers<[1], [0], [0], [1], [0, 0, 1, 1], [], []>} : vector<16x32xbf16>, vector<32x32xbf16>, vector<16x32xf32> -> vector<16x32xf32>
    %7 = arith.addf %4, %6 : vector<16x32xf32>
    %c0_6 = arith.constant 0 : index
    %c0_7 = arith.constant 0 : index
    %8 = vector.load %arg12[%c0_6, %c0_7] : memref<16x32xf32, #tpu.memory_space<vmem>>, vector<16x32xf32>
    tpu.vector_store %arg12[%c0_6, %c0_7], %7 {strides = array<i32>} : memref<16x32xf32, #tpu.memory_space<vmem>>, vector<16x32xf32>,
    %c0_8 = arith.constant 0 : index
    %c0_9 = arith.constant 0 : index
    %9 = vector.load %arg13[%c0_8, %c0_9] : memref<16x32xf32, #tpu.memory_space<vmem>>, vector<16x32xf32>
    %c0_10 = arith.constant 0 : index
    %c0_11 = arith.constant 0 : index
    %10 = vector.load %arg4[%c0_10, %c0_11] : memref<32x32xbf16, #tpu.memory_space<vmem>>, vector<32x32xbf16>
    %cst_12 = arith.constant dense<0.000000e+00> : vector<16x32xf32>
    %11 = tpu.matmul %3, %10, %cst_12 {dimension_numbers = #tpu.dot_dimension_numbers<[1], [0], [0], [1], [0, 0, 1, 1], [], []>} : vector<16x32xbf16>, vector<32x32xbf16>, vector<16x32xf32> -> vector<16x32xf32>
    %12 = arith.addf %9, %11 : vector<16x32xf32>
    %c0_13 = arith.constant 0 : index
    %c0_14 = arith.constant 0 : index
    %13 = vector.load %arg13[%c0_13, %c0_14] : memref<16x32xf32, #tpu.memory_space<vmem>>, vector<16x32xf32>
    tpu.vector_store %arg13[%c0_13, %c0_14], %12 {strides = array<i32>} : memref<16x32xf32, #tpu.memory_space<vmem>>, vector<16x32xf32>,
    %c0_15 = arith.constant 0 : index
    %c0_16 = arith.constant 0 : index
    %14 = vector.load %arg14[%c0_15, %c0_16] : memref<16x32xf32, #tpu.memory_space<vmem>>, vector<16x32xf32>
    %c0_17 = arith.constant 0 : index
    %c0_18 = arith.constant 0 : index
    %15 = vector.load %arg5[%c0_17, %c0_18] : memref<32x32xbf16, #tpu.memory_space<vmem>>, vector<32x32xbf16>
    %cst_19 = arith.constant dense<0.000000e+00> : vector<16x32xf32>
    %16 = tpu.matmul %3, %15, %cst_19 {dimension_numbers = #tpu.dot_dimension_numbers<[1], [0], [0], [1], [0, 0, 1, 1], [], []>} : vector<16x32xbf16>, vector<32x32xbf16>, vector<16x32xf32> -> vector<16x32xf32>
    %17 = arith.addf %14, %16 : vector<16x32xf32>
    %c0_20 = arith.constant 0 : index
    %c0_21 = arith.constant 0 : index
    %18 = vector.load %arg14[%c0_20, %c0_21] : memref<16x32xf32, #tpu.memory_space<vmem>>, vector<16x32xf32>
    tpu.vector_store %arg14[%c0_20, %c0_21], %17 {strides = array<i32>} : memref<16x32xf32, #tpu.memory_space<vmem>>, vector<16x32xf32>,
    %c0_i32_22 = arith.constant 0 : i32
    %19 = arith.cmpi eq, %arg1, %c0_i32_22 : i32
    %20 = arith.extui %19 : i1 to i32
    %c0_i32_23 = arith.constant 0 : i32
    %21 = arith.cmpi ne, %20, %c0_i32_23 : i32
    scf.if %21 {
      %c0_24 = arith.constant 0 : index
      %c0_25 = arith.constant 0 : index
      %22 = vector.load %arg12[%c0_24, %c0_25] : memref<16x32xf32, #tpu.memory_space<vmem>>, vector<16x32xf32>
      %c0_26 = arith.constant 0 : index
      %c0_27 = arith.constant 0 : index
      %23 = vector.load %arg6[%c0_26, %c0_27] : memref<1x32xf32, #tpu.memory_space<vmem>>, vector<1x32xf32>
      %24 = vector.broadcast %23 : vector<1x32xf32> to vector<16x32xf32>
      %25 = arith.addf %22, %24 : vector<16x32xf32>
      %26 = arith.truncf %25 : vector<16x32xf32> to vector<16x32xbf16>
      %c0_28 = arith.constant 0 : index
      %c0_29 = arith.constant 0 : index
      %27 = vector.load %arg9[%c0_28, %c0_29] : memref<16x32xbf16, #tpu.memory_space<vmem>>, vector<16x32xbf16>
      tpu.vector_store %arg9[%c0_28, %c0_29], %26 {strides = array<i32>} : memref<16x32xbf16, #tpu.memory_space<vmem>>, vector<16x32xbf16>,
      %c0_30 = arith.constant 0 : index
      %c0_31 = arith.constant 0 : index
      %28 = vector.load %arg13[%c0_30, %c0_31] : memref<16x32xf32, #tpu.memory_space<vmem>>, vector<16x32xf32>
      %c0_32 = arith.constant 0 : index
      %c0_33 = arith.constant 0 : index
      %29 = vector.load %arg7[%c0_32, %c0_33] : memref<1x32xf32, #tpu.memory_space<vmem>>, vector<1x32xf32>
      %30 = vector.broadcast %29 : vector<1x32xf32> to vector<16x32xf32>
      %31 = arith.addf %28, %30 : vector<16x32xf32>
      %32 = arith.truncf %31 : vector<16x32xf32> to vector<16x32xbf16>
      %c0_34 = arith.constant 0 : index
      %c0_35 = arith.constant 0 : index
      %33 = vector.load %arg10[%c0_34, %c0_35] : memref<16x32xbf16, #tpu.memory_space<vmem>>, vector<16x32xbf16>
      tpu.vector_store %arg10[%c0_34, %c0_35], %32 {strides = array<i32>} : memref<16x32xbf16, #tpu.memory_space<vmem>>, vector<16x32xbf16>,
      %c0_36 = arith.constant 0 : index
      %c0_37 = arith.constant 0 : index
      %34 = vector.load %arg14[%c0_36, %c0_37] : memref<16x32xf32, #tpu.memory_space<vmem>>, vector<16x32xf32>
      %c0_38 = arith.constant 0 : index
      %c0_39 = arith.constant 0 : index
      %35 = vector.load %arg8[%c0_38, %c0_39] : memref<1x32xf32, #tpu.memory_space<vmem>>, vector<1x32xf32>
      %36 = vector.broadcast %35 : vector<1x32xf32> to vector<16x32xf32>
      %37 = arith.addf %34, %36 : vector<16x32xf32>
      %38 = arith.truncf %37 : vector<16x32xf32> to vector<16x32xbf16>
      %c0_40 = arith.constant 0 : index
      %c0_41 = arith.constant 0 : index
      %39 = vector.load %arg11[%c0_40, %c0_41] : memref<16x32xbf16, #tpu.memory_space<vmem>>, vector<16x32xbf16>
      tpu.vector_store %arg11[%c0_40, %c0_41], %38 {strides = array<i32>} : memref<16x32xbf16, #tpu.memory_space<vmem>>, vector<16x32xbf16>,
    } else {
    }
    return
  }
  func.func @transform_0(%arg0: i32, %arg1: i32) -> (i32, i32) {
    %c0_i32 = arith.constant 0 : i32
    return %arg0, %arg1 : i32, i32
  }
  func.func @transform_1(%arg0: i32, %arg1: i32) -> (i32, i32) {
    %c0_i32 = arith.constant 0 : i32
    %c0_i32_0 = arith.constant 0 : i32
    return %arg1, %c0_i32 : i32, i32
  }
  func.func @transform_2(%arg0: i32, %arg1: i32) -> (i32, i32) {
    %c0_i32 = arith.constant 0 : i32
    %c0_i32_0 = arith.constant 0 : i32
    return %arg1, %c0_i32 : i32, i32
  }
  func.func @transform_3(%arg0: i32, %arg1: i32) -> (i32, i32) {
    %c0_i32 = arith.constant 0 : i32
    %c0_i32_0 = arith.constant 0 : i32
    return %arg1, %c0_i32 : i32, i32
  }
  func.func @transform_4(%arg0: i32, %arg1: i32) -> (i32, i32) {
    %c0_i32 = arith.constant 0 : i32
    %c0_i32_0 = arith.constant 0 : i32
    %c0_i32_1 = arith.constant 0 : i32
    return %c0_i32, %c0_i32_0 : i32, i32
  }
  func.func @transform_5(%arg0: i32, %arg1: i32) -> (i32, i32) {
    %c0_i32 = arith.constant 0 : i32
    %c0_i32_0 = arith.constant 0 : i32
    %c0_i32_1 = arith.constant 0 : i32
    return %c0_i32, %c0_i32_0 : i32, i32
  }
  func.func @transform_6(%arg0: i32, %arg1: i32) -> (i32, i32) {
    %c0_i32 = arith.constant 0 : i32
    %c0_i32_0 = arith.constant 0 : i32
    %c0_i32_1 = arith.constant 0 : i32
    return %c0_i32, %c0_i32_0 : i32, i32
  }
  func.func @transform_7(%arg0: i32, %arg1: i32) -> (i32, i32) {
    %c0_i32 = arith.constant 0 : i32
    %c0_i32_0 = arith.constant 0 : i32
    return %arg0, %c0_i32 : i32, i32
  }
  func.func @transform_8(%arg0: i32, %arg1: i32) -> (i32, i32) {
    %c0_i32 = arith.constant 0 : i32
    %c0_i32_0 = arith.constant 0 : i32
    return %arg0, %c0_i32 : i32, i32
  }
  func.func @transform_9(%arg0: i32, %arg1: i32) -> (i32, i32) {
    %c0_i32 = arith.constant 0 : i32
    %c0_i32_0 = arith.constant 0 : i32
    return %arg0, %c0_i32 : i32, i32
  }
}

module attributes {stable_mosaic.version = 11 : i64} {
  func.func @_linear_kernel(%arg0: i32, %arg1: i32, %arg2: i32, %arg3: memref<16x32xbf16, #tpu.memory_space<vmem>>, %arg4: memref<32x32xbf16, #tpu.memory_space<vmem>>, %arg5: memref<1x32xf32, #tpu.memory_space<vmem>>, %arg6: memref<16x32xbf16, #tpu.memory_space<vmem>>, %arg7: memref<16x32xf32, #tpu.memory_space<vmem>>) attributes {dimension_semantics = [#tpu.dimension_semantics<parallel>, #tpu.dimension_semantics<parallel>, #tpu.dimension_semantics<arbitrary>], iteration_bounds = array<i64: 1, 1, 1>, scalar_prefetch = 0 : i64, scratch_operands = 1 : i64, tpu.core_type = #tpu.core_type<tc>, window_params = [{transform_indices = @transform_0, window_bounds = array<i64: 16, 32>}, {transform_indices = @transform_1, window_bounds = array<i64: 32, 32>}, {transform_indices = @transform_2, window_bounds = array<i64: 1, 32>}, {transform_indices = @transform_3, window_bounds = array<i64: 16, 32>}]} {
    %c0_i32 = arith.constant 0 : i32
    %0 = arith.cmpi eq, %arg2, %c0_i32 : i32
    %1 = arith.extui %0 : i1 to i32
    %c0_i32_0 = arith.constant 0 : i32
    %2 = arith.cmpi ne, %1, %c0_i32_0 : i32
    scf.if %2 {
      %cst_10 = arith.constant 0.000000e+00 : f32
      %12 = vector.broadcast %cst_10 : f32 to vector<16x32xf32>
      %c0_11 = arith.constant 0 : index
      %c0_12 = arith.constant 0 : index
      %13 = vector.load %arg7[%c0_11, %c0_12] : memref<16x32xf32, #tpu.memory_space<vmem>>, vector<16x32xf32>
      tpu.vector_store %arg7[%c0_11, %c0_12], %12 {strides = array<i32>} : memref<16x32xf32, #tpu.memory_space<vmem>>, vector<16x32xf32>,
    } else {
    }
    %c0 = arith.constant 0 : index
    %c0_1 = arith.constant 0 : index
    %3 = vector.load %arg7[%c0, %c0_1] : memref<16x32xf32, #tpu.memory_space<vmem>>, vector<16x32xf32>
    %c0_2 = arith.constant 0 : index
    %c0_3 = arith.constant 0 : index
    %4 = vector.load %arg3[%c0_2, %c0_3] : memref<16x32xbf16, #tpu.memory_space<vmem>>, vector<16x32xbf16>
    %c0_4 = arith.constant 0 : index
    %c0_5 = arith.constant 0 : index
    %5 = vector.load %arg4[%c0_4, %c0_5] : memref<32x32xbf16, #tpu.memory_space<vmem>>, vector<32x32xbf16>
    %cst = arith.constant dense<0.000000e+00> : vector<16x32xf32>
    %6 = tpu.matmul %4, %5, %cst {dimension_numbers = #tpu.dot_dimension_numbers<[1], [0], [0], [1], [0, 0, 1, 1], [], []>} : vector<16x32xbf16>, vector<32x32xbf16>, vector<16x32xf32> -> vector<16x32xf32>
    %7 = arith.addf %3, %6 : vector<16x32xf32>
    %c0_6 = arith.constant 0 : index
    %c0_7 = arith.constant 0 : index
    %8 = vector.load %arg7[%c0_6, %c0_7] : memref<16x32xf32, #tpu.memory_space<vmem>>, vector<16x32xf32>
    tpu.vector_store %arg7[%c0_6, %c0_7], %7 {strides = array<i32>} : memref<16x32xf32, #tpu.memory_space<vmem>>, vector<16x32xf32>,
    %c0_i32_8 = arith.constant 0 : i32
    %9 = arith.cmpi eq, %arg2, %c0_i32_8 : i32
    %10 = arith.extui %9 : i1 to i32
    %c0_i32_9 = arith.constant 0 : i32
    %11 = arith.cmpi ne, %10, %c0_i32_9 : i32
    scf.if %11 {
      %c0_10 = arith.constant 0 : index
      %c0_11 = arith.constant 0 : index
      %12 = vector.load %arg7[%c0_10, %c0_11] : memref<16x32xf32, #tpu.memory_space<vmem>>, vector<16x32xf32>
      %c0_12 = arith.constant 0 : index
      %c0_13 = arith.constant 0 : index
      %13 = vector.load %arg5[%c0_12, %c0_13] : memref<1x32xf32, #tpu.memory_space<vmem>>, vector<1x32xf32>
      %14 = vector.broadcast %13 : vector<1x32xf32> to vector<16x32xf32>
      %15 = arith.addf %12, %14 : vector<16x32xf32>
      %16 = arith.truncf %15 : vector<16x32xf32> to vector<16x32xbf16>
      %c0_14 = arith.constant 0 : index
      %c0_15 = arith.constant 0 : index
      %17 = vector.load %arg6[%c0_14, %c0_15] : memref<16x32xbf16, #tpu.memory_space<vmem>>, vector<16x32xbf16>
      tpu.vector_store %arg6[%c0_14, %c0_15], %16 {strides = array<i32>} : memref<16x32xbf16, #tpu.memory_space<vmem>>, vector<16x32xbf16>,
    } else {
    }
    return
  }
  func.func @transform_0(%arg0: i32, %arg1: i32, %arg2: i32) -> (i32, i32) {
    %c0_i32 = arith.constant 0 : i32
    return %arg0, %arg2 : i32, i32
  }
  func.func @transform_1(%arg0: i32, %arg1: i32, %arg2: i32) -> (i32, i32) {
    %c0_i32 = arith.constant 0 : i32
    return %arg2, %arg1 : i32, i32
  }
  func.func @transform_2(%arg0: i32, %arg1: i32, %arg2: i32) -> (i32, i32) {
    %c0_i32 = arith.constant 0 : i32
    %c0_i32_0 = arith.constant 0 : i32
    return %c0_i32, %arg1 : i32, i32
  }
  func.func @transform_3(%arg0: i32, %arg1: i32, %arg2: i32) -> (i32, i32) {
    %c0_i32 = arith.constant 0 : i32
    return %arg0, %arg1 : i32, i32
  }
}

module attributes {stable_mosaic.version = 11 : i64} {
  func.func @_flash_attn_kernel(%arg0: i32, %arg1: i32, %arg2: i32, %arg3: memref<1x8x32xbf16, #tpu.memory_space<vmem>>, %arg4: memref<1x8x32xbf16, #tpu.memory_space<vmem>>, %arg5: memref<1x8x32xbf16, #tpu.memory_space<vmem>>, %arg6: memref<1x1x8xf32, #tpu.memory_space<vmem>>, %arg7: memref<1x8x32xbf16, #tpu.memory_space<vmem>>, %arg8: memref<2x8x1xf32, #tpu.memory_space<vmem>>, %arg9: memref<2x8x1xf32, #tpu.memory_space<vmem>>, %arg10: memref<2x8x16xf32, #tpu.memory_space<vmem>>) attributes {dimension_semantics = [#tpu.dimension_semantics<parallel>, #tpu.dimension_semantics<parallel>, #tpu.dimension_semantics<arbitrary>], iteration_bounds = array<i64: 2, 1, 1>, scalar_prefetch = 0 : i64, scratch_operands = 3 : i64, tpu.core_type = #tpu.core_type<tc>, window_params = [{transform_indices = @transform_0, window_bounds = array<i64: 1, 8, 32>}, {transform_indices = @transform_1, window_bounds = array<i64: 1, 8, 32>}, {transform_indices = @transform_2, window_bounds = array<i64: 1, 8, 32>}, {transform_indices = @transform_3, window_bounds = array<i64: 1, 1, 8>}, {transform_indices = @transform_4, window_bounds = array<i64: 1, 8, 32>}]} {
    %c0_i32 = arith.constant 0 : i32
    %0 = arith.cmpi eq, %arg2, %c0_i32 : i32
    %1 = arith.extui %0 : i1 to i32
    %c0_i32_0 = arith.constant 0 : i32
    %2 = arith.cmpi ne, %1, %c0_i32_0 : i32
    scf.if %2 {
      %cst_59 = arith.constant -3.000000e+38 : f32
      %102 = vector.broadcast %cst_59 : f32 to vector<2x8x1xf32>
      %c0_60 = arith.constant 0 : index
      %c0_61 = arith.constant 0 : index
      %c0_62 = arith.constant 0 : index
      %103 = vector.load %arg8[%c0_60, %c0_61, %c0_62] : memref<2x8x1xf32, #tpu.memory_space<vmem>>, vector<2x8x1xf32>
      tpu.vector_store %arg8[%c0_60, %c0_61, %c0_62], %102 {strides = array<i32>} : memref<2x8x1xf32, #tpu.memory_space<vmem>>, vector<2x8x1xf32>,
      %cst_63 = arith.constant 0.000000e+00 : f32
      %104 = vector.broadcast %cst_63 : f32 to vector<2x8x1xf32>
      %c0_64 = arith.constant 0 : index
      %c0_65 = arith.constant 0 : index
      %c0_66 = arith.constant 0 : index
      %105 = vector.load %arg9[%c0_64, %c0_65, %c0_66] : memref<2x8x1xf32, #tpu.memory_space<vmem>>, vector<2x8x1xf32>
      tpu.vector_store %arg9[%c0_64, %c0_65, %c0_66], %104 {strides = array<i32>} : memref<2x8x1xf32, #tpu.memory_space<vmem>>, vector<2x8x1xf32>,
      %cst_67 = arith.constant 0.000000e+00 : f32
      %106 = vector.broadcast %cst_67 : f32 to vector<2x8x16xf32>
      %c0_68 = arith.constant 0 : index
      %c0_69 = arith.constant 0 : index
      %c0_70 = arith.constant 0 : index
      %107 = vector.load %arg10[%c0_68, %c0_69, %c0_70] : memref<2x8x16xf32, #tpu.memory_space<vmem>>, vector<2x8x16xf32>
      tpu.vector_store %arg10[%c0_68, %c0_69, %c0_70], %106 {strides = array<i32>} : memref<2x8x16xf32, #tpu.memory_space<vmem>>, vector<2x8x16xf32>,
    } else {
    }
    %c0 = arith.constant 0 : index
    %c0_1 = arith.constant 0 : index
    %c0_2 = arith.constant 0 : index
    %3 = vector.load %arg3[%c0, %c0_1, %c0_2] : memref<1x8x32xbf16, #tpu.memory_space<vmem>>, vector<1x8x32xbf16>
    %4 = vector.shape_cast %3 : vector<1x8x32xbf16> to vector<8x32xbf16>
    %c0_3 = arith.constant 0 : index
    %c0_4 = arith.constant 0 : index
    %c0_5 = arith.constant 0 : index
    %5 = vector.load %arg4[%c0_3, %c0_4, %c0_5] : memref<1x8x32xbf16, #tpu.memory_space<vmem>>, vector<1x8x32xbf16>
    %6 = vector.shape_cast %5 : vector<1x8x32xbf16> to vector<8x32xbf16>
    %c0_6 = arith.constant 0 : index
    %c0_7 = arith.constant 0 : index
    %c0_8 = arith.constant 0 : index
    %7 = vector.load %arg5[%c0_6, %c0_7, %c0_8] : memref<1x8x32xbf16, #tpu.memory_space<vmem>>, vector<1x8x32xbf16>
    %8 = vector.shape_cast %7 : vector<1x8x32xbf16> to vector<8x32xbf16>
    %c0_9 = arith.constant 0 : index
    %c0_10 = arith.constant 0 : index
    %c0_11 = arith.constant 0 : index
    %9 = vector.load %arg6[%c0_9, %c0_10, %c0_11] : memref<1x1x8xf32, #tpu.memory_space<vmem>>, vector<1x1x8xf32>
    %10 = vector.shape_cast %9 : vector<1x1x8xf32> to vector<1x8xf32>
    %c8_i32 = arith.constant 8 : i32
    %11 = arith.muli %arg1, %c8_i32 : i32
    %12 = tpu.iota {dimensions = array<i32: 0>} : vector<8x8xi32>
    %13 = vector.broadcast %11 : i32 to vector<8x8xi32>
    %14 = arith.addi %13, %12 : vector<8x8xi32>
    %c8_i32_12 = arith.constant 8 : i32
    %15 = arith.muli %arg2, %c8_i32_12 : i32
    %16 = tpu.iota {dimensions = array<i32: 1>} : vector<8x8xi32>
    %17 = vector.broadcast %15 : i32 to vector<8x8xi32>
    %18 = arith.addi %17, %16 : vector<8x8xi32>
    %19 = arith.cmpi sgt, %18, %14 : vector<8x8xi32>
    %cst = arith.constant -1.000000e+30 : f32
    %cst_13 = arith.constant 0.000000e+00 : f32
    %20 = vector.broadcast %cst : f32 to vector<8x8xf32>
    %21 = vector.broadcast %cst_13 : f32 to vector<8x8xf32>
    %22 = arith.select %19, %20, %21 : vector<8x8xi1>, vector<8x8xf32>
    %23 = vector.broadcast %10 : vector<1x8xf32> to vector<8x8xf32>
    %24 = arith.addf %23, %22 : vector<8x8xf32>
    %25 = vector.extract_strided_slice %4 {offsets = [0, 0], sizes = [8, 16], strides = [1, 1]} : vector<8x32xbf16> to vector<8x16xbf16>
    %26 = vector.extract_strided_slice %6 {offsets = [0, 0], sizes = [8, 16], strides = [1, 1]} : vector<8x32xbf16> to vector<8x16xbf16>
    %27 = vector.extract_strided_slice %8 {offsets = [0, 0], sizes = [8, 16], strides = [1, 1]} : vector<8x32xbf16> to vector<8x16xbf16>
    %cst_14 = arith.constant dense<0.000000e+00> : vector<8x8xf32>
    %28 = tpu.matmul %25, %26, %cst_14 {dimension_numbers = #tpu.dot_dimension_numbers<[1], [1], [0], [0], [0, 0, 1, 0], [], []>} : vector<8x16xbf16>, vector<8x16xbf16>, vector<8x8xf32> -> vector<8x8xf32>
    %29 = arith.addf %28, %24 : vector<8x8xf32>
    %c0_15 = arith.constant 0 : index
    %c0_16 = arith.constant 0 : index
    %c0_17 = arith.constant 0 : index
    %30 = vector.load %arg8[%c0_15, %c0_16, %c0_17] : memref<2x8x1xf32, #tpu.memory_space<vmem>>, vector<1x8x1xf32>
    %31 = vector.shape_cast %30 : vector<1x8x1xf32> to vector<8x1xf32>
    %cst_18 = arith.constant dense<0xFF800000> : vector<8xf32>
    %32 = vector.multi_reduction <maximumf>, %29, %cst_18 [1] : vector<8x8xf32> to vector<8xf32>
    %33 = vector.shape_cast %32 : vector<8xf32> to vector<8x1xf32>
    %34 = arith.maximumf %31, %33 : vector<8x1xf32>
    %35 = arith.subf %31, %34 : vector<8x1xf32>
    %36 = math.exp %35 : vector<8x1xf32>
    %37 = vector.broadcast %34 : vector<8x1xf32> to vector<8x8xf32>
    %38 = arith.subf %29, %37 : vector<8x8xf32>
    %39 = math.exp %38 : vector<8x8xf32>
    %c0_19 = arith.constant 0 : index
    %c0_20 = arith.constant 0 : index
    %c0_21 = arith.constant 0 : index
    %40 = vector.load %arg9[%c0_19, %c0_20, %c0_21] : memref<2x8x1xf32, #tpu.memory_space<vmem>>, vector<1x8x1xf32>
    %41 = vector.shape_cast %40 : vector<1x8x1xf32> to vector<8x1xf32>
    %42 = arith.mulf %36, %41 : vector<8x1xf32>
    %cst_22 = arith.constant dense<0.000000e+00> : vector<8xf32>
    %43 = vector.multi_reduction <add>, %39, %cst_22 [1] : vector<8x8xf32> to vector<8xf32>
    %44 = vector.shape_cast %43 : vector<8xf32> to vector<8x1xf32>
    %45 = arith.addf %42, %44 : vector<8x1xf32>
    %c0_23 = arith.constant 0 : index
    %c0_24 = arith.constant 0 : index
    %c0_25 = arith.constant 0 : index
    %46 = vector.load %arg9[%c0_23, %c0_24, %c0_25] : memref<2x8x1xf32, #tpu.memory_space<vmem>>, vector<1x8x1xf32>
    %47 = vector.shape_cast %46 : vector<1x8x1xf32> to vector<8x1xf32>
    %48 = vector.shape_cast %45 : vector<8x1xf32> to vector<1x8x1xf32>
    tpu.vector_store %arg9[%c0_23, %c0_24, %c0_25], %48 {strides = array<i32>} : memref<2x8x1xf32, #tpu.memory_space<vmem>>, vector<1x8x1xf32>,
    %c0_26 = arith.constant 0 : index
    %c0_27 = arith.constant 0 : index
    %c0_28 = arith.constant 0 : index
    %49 = vector.load %arg10[%c0_26, %c0_27, %c0_28] : memref<2x8x16xf32, #tpu.memory_space<vmem>>, vector<1x8x16xf32>
    %50 = vector.shape_cast %49 : vector<1x8x16xf32> to vector<8x16xf32>
    %51 = vector.broadcast %36 : vector<8x1xf32> to vector<8x16xf32>
    %52 = arith.mulf %51, %50 : vector<8x16xf32>
    %53 = arith.truncf %39 : vector<8x8xf32> to vector<8x8xbf16>
    %cst_29 = arith.constant dense<0.000000e+00> : vector<8x16xf32>
    %54 = tpu.matmul %53, %27, %cst_29 {dimension_numbers = #tpu.dot_dimension_numbers<[1], [0], [0], [1], [0, 0, 1, 1], [], []>} : vector<8x8xbf16>, vector<8x16xbf16>, vector<8x16xf32> -> vector<8x16xf32>
    %55 = arith.addf %52, %54 : vector<8x16xf32>
    %c0_30 = arith.constant 0 : index
    %c0_31 = arith.constant 0 : index
    %c0_32 = arith.constant 0 : index
    %56 = vector.load %arg10[%c0_30, %c0_31, %c0_32] : memref<2x8x16xf32, #tpu.memory_space<vmem>>, vector<1x8x16xf32>
    %57 = vector.shape_cast %56 : vector<1x8x16xf32> to vector<8x16xf32>
    %58 = vector.shape_cast %55 : vector<8x16xf32> to vector<1x8x16xf32>
    tpu.vector_store %arg10[%c0_30, %c0_31, %c0_32], %58 {strides = array<i32>} : memref<2x8x16xf32, #tpu.memory_space<vmem>>, vector<1x8x16xf32>,
    %c0_33 = arith.constant 0 : index
    %c0_34 = arith.constant 0 : index
    %c0_35 = arith.constant 0 : index
    %59 = vector.load %arg8[%c0_33, %c0_34, %c0_35] : memref<2x8x1xf32, #tpu.memory_space<vmem>>, vector<1x8x1xf32>
    %60 = vector.shape_cast %59 : vector<1x8x1xf32> to vector<8x1xf32>
    %61 = vector.shape_cast %34 : vector<8x1xf32> to vector<1x8x1xf32>
    tpu.vector_store %arg8[%c0_33, %c0_34, %c0_35], %61 {strides = array<i32>} : memref<2x8x1xf32, #tpu.memory_space<vmem>>, vector<1x8x1xf32>,
    %62 = vector.extract_strided_slice %4 {offsets = [0, 16], sizes = [8, 16], strides = [1, 1]} : vector<8x32xbf16> to vector<8x16xbf16>
    %63 = vector.extract_strided_slice %6 {offsets = [0, 16], sizes = [8, 16], strides = [1, 1]} : vector<8x32xbf16> to vector<8x16xbf16>
    %64 = vector.extract_strided_slice %8 {offsets = [0, 16], sizes = [8, 16], strides = [1, 1]} : vector<8x32xbf16> to vector<8x16xbf16>
    %cst_36 = arith.constant dense<0.000000e+00> : vector<8x8xf32>
    %65 = tpu.matmul %62, %63, %cst_36 {dimension_numbers = #tpu.dot_dimension_numbers<[1], [1], [0], [0], [0, 0, 1, 0], [], []>} : vector<8x16xbf16>, vector<8x16xbf16>, vector<8x8xf32> -> vector<8x8xf32>
    %66 = arith.addf %65, %24 : vector<8x8xf32>
    %c1 = arith.constant 1 : index
    %c0_37 = arith.constant 0 : index
    %c0_38 = arith.constant 0 : index
    %67 = vector.load %arg8[%c1, %c0_37, %c0_38] : memref<2x8x1xf32, #tpu.memory_space<vmem>>, vector<1x8x1xf32>
    %68 = vector.shape_cast %67 : vector<1x8x1xf32> to vector<8x1xf32>
    %cst_39 = arith.constant dense<0xFF800000> : vector<8xf32>
    %69 = vector.multi_reduction <maximumf>, %66, %cst_39 [1] : vector<8x8xf32> to vector<8xf32>
    %70 = vector.shape_cast %69 : vector<8xf32> to vector<8x1xf32>
    %71 = arith.maximumf %68, %70 : vector<8x1xf32>
    %72 = arith.subf %68, %71 : vector<8x1xf32>
    %73 = math.exp %72 : vector<8x1xf32>
    %74 = vector.broadcast %71 : vector<8x1xf32> to vector<8x8xf32>
    %75 = arith.subf %66, %74 : vector<8x8xf32>
    %76 = math.exp %75 : vector<8x8xf32>
    %c1_40 = arith.constant 1 : index
    %c0_41 = arith.constant 0 : index
    %c0_42 = arith.constant 0 : index
    %77 = vector.load %arg9[%c1_40, %c0_41, %c0_42] : memref<2x8x1xf32, #tpu.memory_space<vmem>>, vector<1x8x1xf32>
    %78 = vector.shape_cast %77 : vector<1x8x1xf32> to vector<8x1xf32>
    %79 = arith.mulf %73, %78 : vector<8x1xf32>
    %cst_43 = arith.constant dense<0.000000e+00> : vector<8xf32>
    %80 = vector.multi_reduction <add>, %76, %cst_43 [1] : vector<8x8xf32> to vector<8xf32>
    %81 = vector.shape_cast %80 : vector<8xf32> to vector<8x1xf32>
    %82 = arith.addf %79, %81 : vector<8x1xf32>
    %c1_44 = arith.constant 1 : index
    %c0_45 = arith.constant 0 : index
    %c0_46 = arith.constant 0 : index
    %83 = vector.load %arg9[%c1_44, %c0_45, %c0_46] : memref<2x8x1xf32, #tpu.memory_space<vmem>>, vector<1x8x1xf32>
    %84 = vector.shape_cast %83 : vector<1x8x1xf32> to vector<8x1xf32>
    %85 = vector.shape_cast %82 : vector<8x1xf32> to vector<1x8x1xf32>
    tpu.vector_store %arg9[%c1_44, %c0_45, %c0_46], %85 {strides = array<i32>} : memref<2x8x1xf32, #tpu.memory_space<vmem>>, vector<1x8x1xf32>,
    %c1_47 = arith.constant 1 : index
    %c0_48 = arith.constant 0 : index
    %c0_49 = arith.constant 0 : index
    %86 = vector.load %arg10[%c1_47, %c0_48, %c0_49] : memref<2x8x16xf32, #tpu.memory_space<vmem>>, vector<1x8x16xf32>
    %87 = vector.shape_cast %86 : vector<1x8x16xf32> to vector<8x16xf32>
    %88 = vector.broadcast %73 : vector<8x1xf32> to vector<8x16xf32>
    %89 = arith.mulf %88, %87 : vector<8x16xf32>
    %90 = arith.truncf %76 : vector<8x8xf32> to vector<8x8xbf16>
    %cst_50 = arith.constant dense<0.000000e+00> : vector<8x16xf32>
    %91 = tpu.matmul %90, %64, %cst_50 {dimension_numbers = #tpu.dot_dimension_numbers<[1], [0], [0], [1], [0, 0, 1, 1], [], []>} : vector<8x8xbf16>, vector<8x16xbf16>, vector<8x16xf32> -> vector<8x16xf32>
    %92 = arith.addf %89, %91 : vector<8x16xf32>
    %c1_51 = arith.constant 1 : index
    %c0_52 = arith.constant 0 : index
    %c0_53 = arith.constant 0 : index
    %93 = vector.load %arg10[%c1_51, %c0_52, %c0_53] : memref<2x8x16xf32, #tpu.memory_space<vmem>>, vector<1x8x16xf32>
    %94 = vector.shape_cast %93 : vector<1x8x16xf32> to vector<8x16xf32>
    %95 = vector.shape_cast %92 : vector<8x16xf32> to vector<1x8x16xf32>
    tpu.vector_store %arg10[%c1_51, %c0_52, %c0_53], %95 {strides = array<i32>} : memref<2x8x16xf32, #tpu.memory_space<vmem>>, vector<1x8x16xf32>,
    %c1_54 = arith.constant 1 : index
    %c0_55 = arith.constant 0 : index
    %c0_56 = arith.constant 0 : index
    %96 = vector.load %arg8[%c1_54, %c0_55, %c0_56] : memref<2x8x1xf32, #tpu.memory_space<vmem>>, vector<1x8x1xf32>
    %97 = vector.shape_cast %96 : vector<1x8x1xf32> to vector<8x1xf32>
    %98 = vector.shape_cast %71 : vector<8x1xf32> to vector<1x8x1xf32>
    tpu.vector_store %arg8[%c1_54, %c0_55, %c0_56], %98 {strides = array<i32>} : memref<2x8x1xf32, #tpu.memory_space<vmem>>, vector<1x8x1xf32>,
    %c0_i32_57 = arith.constant 0 : i32
    %99 = arith.cmpi eq, %arg2, %c0_i32_57 : i32
    %100 = arith.extui %99 : i1 to i32
    %c0_i32_58 = arith.constant 0 : i32
    %101 = arith.cmpi ne, %100, %c0_i32_58 : i32
    scf.if %101 {
      %c0_59 = arith.constant 0 : index
      %c0_60 = arith.constant 0 : index
      %c0_61 = arith.constant 0 : index
      %102 = vector.load %arg10[%c0_59, %c0_60, %c0_61] : memref<2x8x16xf32, #tpu.memory_space<vmem>>, vector<1x8x16xf32>
      %103 = vector.shape_cast %102 : vector<1x8x16xf32> to vector<8x16xf32>
      %c0_62 = arith.constant 0 : index
      %c0_63 = arith.constant 0 : index
      %c0_64 = arith.constant 0 : index
      %104 = vector.load %arg9[%c0_62, %c0_63, %c0_64] : memref<2x8x1xf32, #tpu.memory_space<vmem>>, vector<1x8x1xf32>
      %105 = vector.shape_cast %104 : vector<1x8x1xf32> to vector<8x1xf32>
      %106 = tpu.reciprocal %105 {approx = true} : vector<8x1xf32> -> vector<8x1xf32>
      %107 = vector.broadcast %106 : vector<8x1xf32> to vector<8x16xf32>
      %108 = arith.mulf %103, %107 : vector<8x16xf32>
      %c1_65 = arith.constant 1 : index
      %c0_66 = arith.constant 0 : index
      %c0_67 = arith.constant 0 : index
      %109 = vector.load %arg10[%c1_65, %c0_66, %c0_67] : memref<2x8x16xf32, #tpu.memory_space<vmem>>, vector<1x8x16xf32>
      %110 = vector.shape_cast %109 : vector<1x8x16xf32> to vector<8x16xf32>
      %c1_68 = arith.constant 1 : index
      %c0_69 = arith.constant 0 : index
      %c0_70 = arith.constant 0 : index
      %111 = vector.load %arg9[%c1_68, %c0_69, %c0_70] : memref<2x8x1xf32, #tpu.memory_space<vmem>>, vector<1x8x1xf32>
      %112 = vector.shape_cast %111 : vector<1x8x1xf32> to vector<8x1xf32>
      %113 = tpu.reciprocal %112 {approx = true} : vector<8x1xf32> -> vector<8x1xf32>
      %114 = vector.broadcast %113 : vector<8x1xf32> to vector<8x16xf32>
      %115 = arith.mulf %110, %114 : vector<8x16xf32>
      %116 = tpu.concatenate %108, %115 in 1 : vector<8x16xf32>, vector<8x16xf32> -> vector<8x32xf32>
      %117 = arith.truncf %116 : vector<8x32xf32> to vector<8x32xbf16>
      %c0_71 = arith.constant 0 : index
      %c0_72 = arith.constant 0 : index
      %c0_73 = arith.constant 0 : index
      %118 = vector.load %arg7[%c0_71, %c0_72, %c0_73] : memref<1x8x32xbf16, #tpu.memory_space<vmem>>, vector<1x8x32xbf16>
      %119 = vector.shape_cast %118 : vector<1x8x32xbf16> to vector<8x32xbf16>
      %120 = vector.shape_cast %117 : vector<8x32xbf16> to vector<1x8x32xbf16>
      tpu.vector_store %arg7[%c0_71, %c0_72, %c0_73], %120 {strides = array<i32>} : memref<1x8x32xbf16, #tpu.memory_space<vmem>>, vector<1x8x32xbf16>,
    } else {
    }
    return
  }
  func.func @transform_0(%arg0: i32, %arg1: i32, %arg2: i32) -> (i32, i32, i32) {
    %c0_i32 = arith.constant 0 : i32
    %c0_i32_0 = arith.constant 0 : i32
    return %arg0, %arg1, %c0_i32 : i32, i32, i32
  }
  func.func @transform_1(%arg0: i32, %arg1: i32, %arg2: i32) -> (i32, i32, i32) {
    %c0_i32 = arith.constant 0 : i32
    %c0_i32_0 = arith.constant 0 : i32
    return %arg0, %arg2, %c0_i32 : i32, i32, i32
  }
  func.func @transform_2(%arg0: i32, %arg1: i32, %arg2: i32) -> (i32, i32, i32) {
    %c0_i32 = arith.constant 0 : i32
    %c0_i32_0 = arith.constant 0 : i32
    return %arg0, %arg2, %c0_i32 : i32, i32, i32
  }
  func.func @transform_3(%arg0: i32, %arg1: i32, %arg2: i32) -> (i32, i32, i32) {
    %c0_i32 = arith.constant 0 : i32
    %c0_i32_0 = arith.constant 0 : i32
    return %arg0, %c0_i32, %arg2 : i32, i32, i32
  }
  func.func @transform_4(%arg0: i32, %arg1: i32, %arg2: i32) -> (i32, i32, i32) {
    %c0_i32 = arith.constant 0 : i32
    %c0_i32_0 = arith.constant 0 : i32
    return %arg0, %arg1, %c0_i32 : i32, i32, i32
  }
}

module attributes {stable_mosaic.version = 11 : i64} {
  func.func @_add_ln_kernel(%arg0: i32, %arg1: memref<16x32xbf16, #tpu.memory_space<vmem>>, %arg2: memref<16x32xbf16, #tpu.memory_space<vmem>>, %arg3: memref<1x32xf32, #tpu.memory_space<vmem>>, %arg4: memref<1x32xf32, #tpu.memory_space<vmem>>, %arg5: memref<16x1xf32, #tpu.memory_space<vmem>>, %arg6: memref<16x32xbf16, #tpu.memory_space<vmem>>) attributes {dimension_semantics = [#tpu.dimension_semantics<parallel>], iteration_bounds = array<i64: 1>, scalar_prefetch = 0 : i64, scratch_operands = 0 : i64, tpu.core_type = #tpu.core_type<tc>, window_params = [{transform_indices = @transform_0, window_bounds = array<i64: 16, 32>}, {transform_indices = @transform_1, window_bounds = array<i64: 16, 32>}, {pipeline_mode = #tpu.pipeline_mode<synchronous>, transform_indices = @transform_2, window_bounds = array<i64: 1, 32>}, {pipeline_mode = #tpu.pipeline_mode<synchronous>, transform_indices = @transform_3, window_bounds = array<i64: 1, 32>}, {transform_indices = @transform_4, window_bounds = array<i64: 16, 1>}, {transform_indices = @transform_5, window_bounds = array<i64: 16, 32>}]} {
    %c0 = arith.constant 0 : index
    %c0_0 = arith.constant 0 : index
    %0 = vector.load %arg1[%c0, %c0_0] : memref<16x32xbf16, #tpu.memory_space<vmem>>, vector<16x32xbf16>
    %1 = arith.extf %0 : vector<16x32xbf16> to vector<16x32xf32>
    %c0_1 = arith.constant 0 : index
    %c0_2 = arith.constant 0 : index
    %2 = vector.load %arg2[%c0_1, %c0_2] : memref<16x32xbf16, #tpu.memory_space<vmem>>, vector<16x32xbf16>
    %3 = arith.extf %2 : vector<16x32xbf16> to vector<16x32xf32>
    %4 = arith.addf %1, %3 : vector<16x32xf32>
    %cst = arith.constant dense<0.000000e+00> : vector<16xf32>
    %5 = vector.multi_reduction <add>, %4, %cst [1] : vector<16x32xf32> to vector<16xf32>
    %6 = vector.shape_cast %5 : vector<16xf32> to vector<16x1xf32>
    %cst_3 = arith.constant 3.200000e+01 : f32
    %7 = vector.broadcast %cst_3 : f32 to vector<16x1xf32>
    %8 = arith.divf %6, %7 : vector<16x1xf32>
    %9 = arith.mulf %4, %4 : vector<16x32xf32>
    %cst_4 = arith.constant dense<0.000000e+00> : vector<16xf32>
    %10 = vector.multi_reduction <add>, %9, %cst_4 [1] : vector<16x32xf32> to vector<16xf32>
    %11 = vector.shape_cast %10 : vector<16xf32> to vector<16x1xf32>
    %cst_5 = arith.constant 3.200000e+01 : f32
    %12 = vector.broadcast %cst_5 : f32 to vector<16x1xf32>
    %13 = arith.divf %11, %12 : vector<16x1xf32>
    %14 = arith.mulf %8, %8 : vector<16x1xf32>
    %15 = arith.subf %13, %14 : vector<16x1xf32>
    %16 = vector.broadcast %8 : vector<16x1xf32> to vector<16x32xf32>
    %17 = arith.subf %4, %16 : vector<16x32xf32>
    %cst_6 = arith.constant 9.99999974E-6 : f32
    %18 = vector.broadcast %cst_6 : f32 to vector<16x1xf32>
    %19 = arith.addf %15, %18 : vector<16x1xf32>
    %20 = math.rsqrt %19 : vector<16x1xf32>
    %21 = vector.broadcast %20 : vector<16x1xf32> to vector<16x32xf32>
    %22 = arith.mulf %17, %21 : vector<16x32xf32>
    %c0_7 = arith.constant 0 : index
    %c0_8 = arith.constant 0 : index
    %23 = vector.load %arg3[%c0_7, %c0_8] : memref<1x32xf32, #tpu.memory_space<vmem>>, vector<1x32xf32>
    %24 = vector.broadcast %23 : vector<1x32xf32> to vector<16x32xf32>
    %25 = arith.mulf %22, %24 : vector<16x32xf32>
    %c0_9 = arith.constant 0 : index
    %c0_10 = arith.constant 0 : index
    %26 = vector.load %arg4[%c0_9, %c0_10] : memref<1x32xf32, #tpu.memory_space<vmem>>, vector<1x32xf32>
    %27 = vector.broadcast %26 : vector<1x32xf32> to vector<16x32xf32>
    %28 = arith.addf %25, %27 : vector<16x32xf32>
    %c0_11 = arith.constant 0 : index
    %c0_12 = arith.constant 0 : index
    %29 = vector.load %arg5[%c0_11, %c0_12] : memref<16x1xf32, #tpu.memory_space<vmem>>, vector<16x1xf32>
    %30 = vector.broadcast %29 : vector<16x1xf32> to vector<16x32xf32>
    %31 = arith.mulf %28, %30 : vector<16x32xf32>
    %32 = arith.truncf %31 : vector<16x32xf32> to vector<16x32xbf16>
    %c0_13 = arith.constant 0 : index
    %c0_14 = arith.constant 0 : index
    %33 = vector.load %arg6[%c0_13, %c0_14] : memref<16x32xbf16, #tpu.memory_space<vmem>>, vector<16x32xbf16>
    tpu.vector_store %arg6[%c0_13, %c0_14], %32 {strides = array<i32>} : memref<16x32xbf16, #tpu.memory_space<vmem>>, vector<16x32xbf16>,
    return
  }
  func.func @transform_0(%arg0: i32) -> (i32, i32) {
    %c0_i32 = arith.constant 0 : i32
    %c0_i32_0 = arith.constant 0 : i32
    return %arg0, %c0_i32 : i32, i32
  }
  func.func @transform_1(%arg0: i32) -> (i32, i32) {
    %c0_i32 = arith.constant 0 : i32
    %c0_i32_0 = arith.constant 0 : i32
    return %arg0, %c0_i32 : i32, i32
  }
  func.func @transform_2(%arg0: i32) -> (i32, i32) {
    %c0_i32 = arith.constant 0 : i32
    %c0_i32_0 = arith.constant 0 : i32
    %c0_i32_1 = arith.constant 0 : i32
    return %c0_i32, %c0_i32_0 : i32, i32
  }
  func.func @transform_3(%arg0: i32) -> (i32, i32) {
    %c0_i32 = arith.constant 0 : i32
    %c0_i32_0 = arith.constant 0 : i32
    %c0_i32_1 = arith.constant 0 : i32
    return %c0_i32, %c0_i32_0 : i32, i32
  }
  func.func @transform_4(%arg0: i32) -> (i32, i32) {
    %c0_i32 = arith.constant 0 : i32
    %c0_i32_0 = arith.constant 0 : i32
    return %arg0, %c0_i32 : i32, i32
  }
  func.func @transform_5(%arg0: i32) -> (i32, i32) {
    %c0_i32 = arith.constant 0 : i32
    %c0_i32_0 = arith.constant 0 : i32
    return %arg0, %c0_i32 : i32, i32
  }
}

module attributes {stable_mosaic.version = 11 : i64} {
  func.func @_proj_kernel(%arg0: i32, %arg1: i32, %arg2: memref<16x32xbf16, #tpu.memory_space<vmem>>, %arg3: memref<32x32xbf16, #tpu.memory_space<vmem>>, %arg4: memref<1x32xf32, #tpu.memory_space<vmem>>, %arg5: memref<16x32xbf16, #tpu.memory_space<vmem>>, %arg6: memref<16x32xf32, #tpu.memory_space<vmem>>) attributes {dimension_semantics = [#tpu.dimension_semantics<parallel>, #tpu.dimension_semantics<arbitrary>], iteration_bounds = array<i64: 1, 1>, scalar_prefetch = 0 : i64, scratch_operands = 1 : i64, tpu.core_type = #tpu.core_type<tc>, window_params = [{transform_indices = @transform_0, window_bounds = array<i64: 16, 32>}, {transform_indices = @transform_1, window_bounds = array<i64: 32, 32>}, {pipeline_mode = #tpu.pipeline_mode<synchronous>, transform_indices = @transform_2, window_bounds = array<i64: 1, 32>}, {transform_indices = @transform_3, window_bounds = array<i64: 16, 32>}]} {
    %c0_i32 = arith.constant 0 : i32
    %0 = arith.cmpi eq, %arg1, %c0_i32 : i32
    %1 = arith.extui %0 : i1 to i32
    %c0_i32_0 = arith.constant 0 : i32
    %2 = arith.cmpi ne, %1, %c0_i32_0 : i32
    scf.if %2 {
      %cst_10 = arith.constant 0.000000e+00 : f32
      %12 = vector.broadcast %cst_10 : f32 to vector<16x32xf32>
      %c0_11 = arith.constant 0 : index
      %c0_12 = arith.constant 0 : index
      %13 = vector.load %arg6[%c0_11, %c0_12] : memref<16x32xf32, #tpu.memory_space<vmem>>, vector<16x32xf32>
      tpu.vector_store %arg6[%c0_11, %c0_12], %12 {strides = array<i32>} : memref<16x32xf32, #tpu.memory_space<vmem>>, vector<16x32xf32>,
    } else {
    }
    %c0 = arith.constant 0 : index
    %c0_1 = arith.constant 0 : index
    %3 = vector.load %arg2[%c0, %c0_1] : memref<16x32xbf16, #tpu.memory_space<vmem>>, vector<16x32xbf16>
    %c0_2 = arith.constant 0 : index
    %c0_3 = arith.constant 0 : index
    %4 = vector.load %arg6[%c0_2, %c0_3] : memref<16x32xf32, #tpu.memory_space<vmem>>, vector<16x32xf32>
    %c0_4 = arith.constant 0 : index
    %c0_5 = arith.constant 0 : index
    %5 = vector.load %arg3[%c0_4, %c0_5] : memref<32x32xbf16, #tpu.memory_space<vmem>>, vector<32x32xbf16>
    %cst = arith.constant dense<0.000000e+00> : vector<16x32xf32>
    %6 = tpu.matmul %3, %5, %cst {dimension_numbers = #tpu.dot_dimension_numbers<[1], [0], [0], [1], [0, 0, 1, 1], [], []>} : vector<16x32xbf16>, vector<32x32xbf16>, vector<16x32xf32> -> vector<16x32xf32>
    %7 = arith.addf %4, %6 : vector<16x32xf32>
    %c0_6 = arith.constant 0 : index
    %c0_7 = arith.constant 0 : index
    %8 = vector.load %arg6[%c0_6, %c0_7] : memref<16x32xf32, #tpu.memory_space<vmem>>, vector<16x32xf32>
    tpu.vector_store %arg6[%c0_6, %c0_7], %7 {strides = array<i32>} : memref<16x32xf32, #tpu.memory_space<vmem>>, vector<16x32xf32>,
    %c0_i32_8 = arith.constant 0 : i32
    %9 = arith.cmpi eq, %arg1, %c0_i32_8 : i32
    %10 = arith.extui %9 : i1 to i32
    %c0_i32_9 = arith.constant 0 : i32
    %11 = arith.cmpi ne, %10, %c0_i32_9 : i32
    scf.if %11 {
      %c0_10 = arith.constant 0 : index
      %c0_11 = arith.constant 0 : index
      %12 = vector.load %arg6[%c0_10, %c0_11] : memref<16x32xf32, #tpu.memory_space<vmem>>, vector<16x32xf32>
      %c0_12 = arith.constant 0 : index
      %c0_13 = arith.constant 0 : index
      %13 = vector.load %arg4[%c0_12, %c0_13] : memref<1x32xf32, #tpu.memory_space<vmem>>, vector<1x32xf32>
      %14 = vector.broadcast %13 : vector<1x32xf32> to vector<16x32xf32>
      %15 = arith.addf %12, %14 : vector<16x32xf32>
      %16 = arith.truncf %15 : vector<16x32xf32> to vector<16x32xbf16>
      %c0_14 = arith.constant 0 : index
      %c0_15 = arith.constant 0 : index
      %17 = vector.load %arg5[%c0_14, %c0_15] : memref<16x32xbf16, #tpu.memory_space<vmem>>, vector<16x32xbf16>
      tpu.vector_store %arg5[%c0_14, %c0_15], %16 {strides = array<i32>} : memref<16x32xbf16, #tpu.memory_space<vmem>>, vector<16x32xbf16>,
    } else {
    }
    return
  }
  func.func @transform_0(%arg0: i32, %arg1: i32) -> (i32, i32) {
    %c0_i32 = arith.constant 0 : i32
    return %arg0, %arg1 : i32, i32
  }
  func.func @transform_1(%arg0: i32, %arg1: i32) -> (i32, i32) {
    %c0_i32 = arith.constant 0 : i32
    %c0_i32_0 = arith.constant 0 : i32
    return %arg1, %c0_i32 : i32, i32
  }
  func.func @transform_2(%arg0: i32, %arg1: i32) -> (i32, i32) {
    %c0_i32 = arith.constant 0 : i32
    %c0_i32_0 = arith.constant 0 : i32
    %c0_i32_1 = arith.constant 0 : i32
    return %c0_i32, %c0_i32_0 : i32, i32
  }
  func.func @transform_3(%arg0: i32, %arg1: i32) -> (i32, i32) {
    %c0_i32 = arith.constant 0 : i32
    %c0_i32_0 = arith.constant 0 : i32
    return %arg0, %c0_i32 : i32, i32
  }
}

module attributes {stable_mosaic.version = 11 : i64} {
  func.func @_proj_kernel(%arg0: i32, %arg1: i32, %arg2: memref<16x32xbf16, #tpu.memory_space<vmem>>, %arg3: memref<32x32xbf16, #tpu.memory_space<vmem>>, %arg4: memref<32x32xbf16, #tpu.memory_space<vmem>>, %arg5: memref<1x32xf32, #tpu.memory_space<vmem>>, %arg6: memref<1x32xf32, #tpu.memory_space<vmem>>, %arg7: memref<16x32xbf16, #tpu.memory_space<vmem>>, %arg8: memref<16x32xbf16, #tpu.memory_space<vmem>>, %arg9: memref<16x32xf32, #tpu.memory_space<vmem>>, %arg10: memref<16x32xf32, #tpu.memory_space<vmem>>) attributes {dimension_semantics = [#tpu.dimension_semantics<parallel>, #tpu.dimension_semantics<arbitrary>], iteration_bounds = array<i64: 1, 1>, scalar_prefetch = 0 : i64, scratch_operands = 2 : i64, tpu.core_type = #tpu.core_type<tc>, window_params = [{transform_indices = @transform_0, window_bounds = array<i64: 16, 32>}, {transform_indices = @transform_1, window_bounds = array<i64: 32, 32>}, {transform_indices = @transform_2, window_bounds = array<i64: 32, 32>}, {pipeline_mode = #tpu.pipeline_mode<synchronous>, transform_indices = @transform_3, window_bounds = array<i64: 1, 32>}, {pipeline_mode = #tpu.pipeline_mode<synchronous>, transform_indices = @transform_4, window_bounds = array<i64: 1, 32>}, {transform_indices = @transform_5, window_bounds = array<i64: 16, 32>}, {transform_indices = @transform_6, window_bounds = array<i64: 16, 32>}]} {
    %c0_i32 = arith.constant 0 : i32
    %0 = arith.cmpi eq, %arg1, %c0_i32 : i32
    %1 = arith.extui %0 : i1 to i32
    %c0_i32_0 = arith.constant 0 : i32
    %2 = arith.cmpi ne, %1, %c0_i32_0 : i32
    scf.if %2 {
      %cst_17 = arith.constant 0.000000e+00 : f32
      %17 = vector.broadcast %cst_17 : f32 to vector<16x32xf32>
      %c0_18 = arith.constant 0 : index
      %c0_19 = arith.constant 0 : index
      %18 = vector.load %arg9[%c0_18, %c0_19] : memref<16x32xf32, #tpu.memory_space<vmem>>, vector<16x32xf32>
      tpu.vector_store %arg9[%c0_18, %c0_19], %17 {strides = array<i32>} : memref<16x32xf32, #tpu.memory_space<vmem>>, vector<16x32xf32>,
      %cst_20 = arith.constant 0.000000e+00 : f32
      %19 = vector.broadcast %cst_20 : f32 to vector<16x32xf32>
      %c0_21 = arith.constant 0 : index
      %c0_22 = arith.constant 0 : index
      %20 = vector.load %arg10[%c0_21, %c0_22] : memref<16x32xf32, #tpu.memory_space<vmem>>, vector<16x32xf32>
      tpu.vector_store %arg10[%c0_21, %c0_22], %19 {strides = array<i32>} : memref<16x32xf32, #tpu.memory_space<vmem>>, vector<16x32xf32>,
    } else {
    }
    %c0 = arith.constant 0 : index
    %c0_1 = arith.constant 0 : index
    %3 = vector.load %arg2[%c0, %c0_1] : memref<16x32xbf16, #tpu.memory_space<vmem>>, vector<16x32xbf16>
    %c0_2 = arith.constant 0 : index
    %c0_3 = arith.constant 0 : index
    %4 = vector.load %arg9[%c0_2, %c0_3] : memref<16x32xf32, #tpu.memory_space<vmem>>, vector<16x32xf32>
    %c0_4 = arith.constant 0 : index
    %c0_5 = arith.constant 0 : index
    %5 = vector.load %arg3[%c0_4, %c0_5] : memref<32x32xbf16, #tpu.memory_space<vmem>>, vector<32x32xbf16>
    %cst = arith.constant dense<0.000000e+00> : vector<16x32xf32>
    %6 = tpu.matmul %3, %5, %cst {dimension_numbers = #tpu.dot_dimension_numbers<[1], [0], [0], [1], [0, 0, 1, 1], [], []>} : vector<16x32xbf16>, vector<32x32xbf16>, vector<16x32xf32> -> vector<16x32xf32>
    %7 = arith.addf %4, %6 : vector<16x32xf32>
    %c0_6 = arith.constant 0 : index
    %c0_7 = arith.constant 0 : index
    %8 = vector.load %arg9[%c0_6, %c0_7] : memref<16x32xf32, #tpu.memory_space<vmem>>, vector<16x32xf32>
    tpu.vector_store %arg9[%c0_6, %c0_7], %7 {strides = array<i32>} : memref<16x32xf32, #tpu.memory_space<vmem>>, vector<16x32xf32>,
    %c0_8 = arith.constant 0 : index
    %c0_9 = arith.constant 0 : index
    %9 = vector.load %arg10[%c0_8, %c0_9] : memref<16x32xf32, #tpu.memory_space<vmem>>, vector<16x32xf32>
    %c0_10 = arith.constant 0 : index
    %c0_11 = arith.constant 0 : index
    %10 = vector.load %arg4[%c0_10, %c0_11] : memref<32x32xbf16, #tpu.memory_space<vmem>>, vector<32x32xbf16>
    %cst_12 = arith.constant dense<0.000000e+00> : vector<16x32xf32>
    %11 = tpu.matmul %3, %10, %cst_12 {dimension_numbers = #tpu.dot_dimension_numbers<[1], [0], [0], [1], [0, 0, 1, 1], [], []>} : vector<16x32xbf16>, vector<32x32xbf16>, vector<16x32xf32> -> vector<16x32xf32>
    %12 = arith.addf %9, %11 : vector<16x32xf32>
    %c0_13 = arith.constant 0 : index
    %c0_14 = arith.constant 0 : index
    %13 = vector.load %arg10[%c0_13, %c0_14] : memref<16x32xf32, #tpu.memory_space<vmem>>, vector<16x32xf32>
    tpu.vector_store %arg10[%c0_13, %c0_14], %12 {strides = array<i32>} : memref<16x32xf32, #tpu.memory_space<vmem>>, vector<16x32xf32>,
    %c0_i32_15 = arith.constant 0 : i32
    %14 = arith.cmpi eq, %arg1, %c0_i32_15 : i32
    %15 = arith.extui %14 : i1 to i32
    %c0_i32_16 = arith.constant 0 : i32
    %16 = arith.cmpi ne, %15, %c0_i32_16 : i32
    scf.if %16 {
      %c0_17 = arith.constant 0 : index
      %c0_18 = arith.constant 0 : index
      %17 = vector.load %arg9[%c0_17, %c0_18] : memref<16x32xf32, #tpu.memory_space<vmem>>, vector<16x32xf32>
      %c0_19 = arith.constant 0 : index
      %c0_20 = arith.constant 0 : index
      %18 = vector.load %arg5[%c0_19, %c0_20] : memref<1x32xf32, #tpu.memory_space<vmem>>, vector<1x32xf32>
      %19 = vector.broadcast %18 : vector<1x32xf32> to vector<16x32xf32>
      %20 = arith.addf %17, %19 : vector<16x32xf32>
      %21 = arith.truncf %20 : vector<16x32xf32> to vector<16x32xbf16>
      %c0_21 = arith.constant 0 : index
      %c0_22 = arith.constant 0 : index
      %22 = vector.load %arg7[%c0_21, %c0_22] : memref<16x32xbf16, #tpu.memory_space<vmem>>, vector<16x32xbf16>
      tpu.vector_store %arg7[%c0_21, %c0_22], %21 {strides = array<i32>} : memref<16x32xbf16, #tpu.memory_space<vmem>>, vector<16x32xbf16>,
      %c0_23 = arith.constant 0 : index
      %c0_24 = arith.constant 0 : index
      %23 = vector.load %arg10[%c0_23, %c0_24] : memref<16x32xf32, #tpu.memory_space<vmem>>, vector<16x32xf32>
      %c0_25 = arith.constant 0 : index
      %c0_26 = arith.constant 0 : index
      %24 = vector.load %arg6[%c0_25, %c0_26] : memref<1x32xf32, #tpu.memory_space<vmem>>, vector<1x32xf32>
      %25 = vector.broadcast %24 : vector<1x32xf32> to vector<16x32xf32>
      %26 = arith.addf %23, %25 : vector<16x32xf32>
      %27 = arith.truncf %26 : vector<16x32xf32> to vector<16x32xbf16>
      %c0_27 = arith.constant 0 : index
      %c0_28 = arith.constant 0 : index
      %28 = vector.load %arg8[%c0_27, %c0_28] : memref<16x32xbf16, #tpu.memory_space<vmem>>, vector<16x32xbf16>
      tpu.vector_store %arg8[%c0_27, %c0_28], %27 {strides = array<i32>} : memref<16x32xbf16, #tpu.memory_space<vmem>>, vector<16x32xbf16>,
    } else {
    }
    return
  }
  func.func @transform_0(%arg0: i32, %arg1: i32) -> (i32, i32) {
    %c0_i32 = arith.constant 0 : i32
    return %arg0, %arg1 : i32, i32
  }
  func.func @transform_1(%arg0: i32, %arg1: i32) -> (i32, i32) {
    %c0_i32 = arith.constant 0 : i32
    %c0_i32_0 = arith.constant 0 : i32
    return %arg1, %c0_i32 : i32, i32
  }
  func.func @transform_2(%arg0: i32, %arg1: i32) -> (i32, i32) {
    %c0_i32 = arith.constant 0 : i32
    %c0_i32_0 = arith.constant 0 : i32
    return %arg1, %c0_i32 : i32, i32
  }
  func.func @transform_3(%arg0: i32, %arg1: i32) -> (i32, i32) {
    %c0_i32 = arith.constant 0 : i32
    %c0_i32_0 = arith.constant 0 : i32
    %c0_i32_1 = arith.constant 0 : i32
    return %c0_i32, %c0_i32_0 : i32, i32
  }
  func.func @transform_4(%arg0: i32, %arg1: i32) -> (i32, i32) {
    %c0_i32 = arith.constant 0 : i32
    %c0_i32_0 = arith.constant 0 : i32
    %c0_i32_1 = arith.constant 0 : i32
    return %c0_i32, %c0_i32_0 : i32, i32
  }
  func.func @transform_5(%arg0: i32, %arg1: i32) -> (i32, i32) {
    %c0_i32 = arith.constant 0 : i32
    %c0_i32_0 = arith.constant 0 : i32
    return %arg0, %c0_i32 : i32, i32
  }
  func.func @transform_6(%arg0: i32, %arg1: i32) -> (i32, i32) {
    %c0_i32 = arith.constant 0 : i32
    %c0_i32_0 = arith.constant 0 : i32
    return %arg0, %c0_i32 : i32, i32
  }
}

module attributes {stable_mosaic.version = 11 : i64} {
  func.func @_flash_attn_kernel(%arg0: i32, %arg1: i32, %arg2: i32, %arg3: memref<1x8x32xbf16, #tpu.memory_space<vmem>>, %arg4: memref<1x8x32xbf16, #tpu.memory_space<vmem>>, %arg5: memref<1x8x32xbf16, #tpu.memory_space<vmem>>, %arg6: memref<1x1x8xf32, #tpu.memory_space<vmem>>, %arg7: memref<1x8x32xbf16, #tpu.memory_space<vmem>>, %arg8: memref<2x8x1xf32, #tpu.memory_space<vmem>>, %arg9: memref<2x8x1xf32, #tpu.memory_space<vmem>>, %arg10: memref<2x8x16xf32, #tpu.memory_space<vmem>>) attributes {dimension_semantics = [#tpu.dimension_semantics<parallel>, #tpu.dimension_semantics<parallel>, #tpu.dimension_semantics<arbitrary>], iteration_bounds = array<i64: 2, 1, 1>, scalar_prefetch = 0 : i64, scratch_operands = 3 : i64, tpu.core_type = #tpu.core_type<tc>, window_params = [{transform_indices = @transform_0, window_bounds = array<i64: 1, 8, 32>}, {transform_indices = @transform_1, window_bounds = array<i64: 1, 8, 32>}, {transform_indices = @transform_2, window_bounds = array<i64: 1, 8, 32>}, {transform_indices = @transform_3, window_bounds = array<i64: 1, 1, 8>}, {transform_indices = @transform_4, window_bounds = array<i64: 1, 8, 32>}]} {
    %c0_i32 = arith.constant 0 : i32
    %0 = arith.cmpi eq, %arg2, %c0_i32 : i32
    %1 = arith.extui %0 : i1 to i32
    %c0_i32_0 = arith.constant 0 : i32
    %2 = arith.cmpi ne, %1, %c0_i32_0 : i32
    scf.if %2 {
      %cst_56 = arith.constant -3.000000e+38 : f32
      %90 = vector.broadcast %cst_56 : f32 to vector<2x8x1xf32>
      %c0_57 = arith.constant 0 : index
      %c0_58 = arith.constant 0 : index
      %c0_59 = arith.constant 0 : index
      %91 = vector.load %arg8[%c0_57, %c0_58, %c0_59] : memref<2x8x1xf32, #tpu.memory_space<vmem>>, vector<2x8x1xf32>
      tpu.vector_store %arg8[%c0_57, %c0_58, %c0_59], %90 {strides = array<i32>} : memref<2x8x1xf32, #tpu.memory_space<vmem>>, vector<2x8x1xf32>,
      %cst_60 = arith.constant 0.000000e+00 : f32
      %92 = vector.broadcast %cst_60 : f32 to vector<2x8x1xf32>
      %c0_61 = arith.constant 0 : index
      %c0_62 = arith.constant 0 : index
      %c0_63 = arith.constant 0 : index
      %93 = vector.load %arg9[%c0_61, %c0_62, %c0_63] : memref<2x8x1xf32, #tpu.memory_space<vmem>>, vector<2x8x1xf32>
      tpu.vector_store %arg9[%c0_61, %c0_62, %c0_63], %92 {strides = array<i32>} : memref<2x8x1xf32, #tpu.memory_space<vmem>>, vector<2x8x1xf32>,
      %cst_64 = arith.constant 0.000000e+00 : f32
      %94 = vector.broadcast %cst_64 : f32 to vector<2x8x16xf32>
      %c0_65 = arith.constant 0 : index
      %c0_66 = arith.constant 0 : index
      %c0_67 = arith.constant 0 : index
      %95 = vector.load %arg10[%c0_65, %c0_66, %c0_67] : memref<2x8x16xf32, #tpu.memory_space<vmem>>, vector<2x8x16xf32>
      tpu.vector_store %arg10[%c0_65, %c0_66, %c0_67], %94 {strides = array<i32>} : memref<2x8x16xf32, #tpu.memory_space<vmem>>, vector<2x8x16xf32>,
    } else {
    }
    %c0 = arith.constant 0 : index
    %c0_1 = arith.constant 0 : index
    %c0_2 = arith.constant 0 : index
    %3 = vector.load %arg3[%c0, %c0_1, %c0_2] : memref<1x8x32xbf16, #tpu.memory_space<vmem>>, vector<1x8x32xbf16>
    %4 = vector.shape_cast %3 : vector<1x8x32xbf16> to vector<8x32xbf16>
    %c0_3 = arith.constant 0 : index
    %c0_4 = arith.constant 0 : index
    %c0_5 = arith.constant 0 : index
    %5 = vector.load %arg4[%c0_3, %c0_4, %c0_5] : memref<1x8x32xbf16, #tpu.memory_space<vmem>>, vector<1x8x32xbf16>
    %6 = vector.shape_cast %5 : vector<1x8x32xbf16> to vector<8x32xbf16>
    %c0_6 = arith.constant 0 : index
    %c0_7 = arith.constant 0 : index
    %c0_8 = arith.constant 0 : index
    %7 = vector.load %arg5[%c0_6, %c0_7, %c0_8] : memref<1x8x32xbf16, #tpu.memory_space<vmem>>, vector<1x8x32xbf16>
    %8 = vector.shape_cast %7 : vector<1x8x32xbf16> to vector<8x32xbf16>
    %c0_9 = arith.constant 0 : index
    %c0_10 = arith.constant 0 : index
    %c0_11 = arith.constant 0 : index
    %9 = vector.load %arg6[%c0_9, %c0_10, %c0_11] : memref<1x1x8xf32, #tpu.memory_space<vmem>>, vector<1x1x8xf32>
    %10 = vector.shape_cast %9 : vector<1x1x8xf32> to vector<1x8xf32>
    %11 = vector.extract_strided_slice %4 {offsets = [0, 0], sizes = [8, 16], strides = [1, 1]} : vector<8x32xbf16> to vector<8x16xbf16>
    %12 = vector.extract_strided_slice %6 {offsets = [0, 0], sizes = [8, 16], strides = [1, 1]} : vector<8x32xbf16> to vector<8x16xbf16>
    %13 = vector.extract_strided_slice %8 {offsets = [0, 0], sizes = [8, 16], strides = [1, 1]} : vector<8x32xbf16> to vector<8x16xbf16>
    %cst = arith.constant dense<0.000000e+00> : vector<8x8xf32>
    %14 = tpu.matmul %11, %12, %cst {dimension_numbers = #tpu.dot_dimension_numbers<[1], [1], [0], [0], [0, 0, 1, 0], [], []>} : vector<8x16xbf16>, vector<8x16xbf16>, vector<8x8xf32> -> vector<8x8xf32>
    %15 = vector.broadcast %10 : vector<1x8xf32> to vector<8x8xf32>
    %16 = arith.addf %14, %15 : vector<8x8xf32>
    %c0_12 = arith.constant 0 : index
    %c0_13 = arith.constant 0 : index
    %c0_14 = arith.constant 0 : index
    %17 = vector.load %arg8[%c0_12, %c0_13, %c0_14] : memref<2x8x1xf32, #tpu.memory_space<vmem>>, vector<1x8x1xf32>
    %18 = vector.shape_cast %17 : vector<1x8x1xf32> to vector<8x1xf32>
    %cst_15 = arith.constant dense<0xFF800000> : vector<8xf32>
    %19 = vector.multi_reduction <maximumf>, %16, %cst_15 [1] : vector<8x8xf32> to vector<8xf32>
    %20 = vector.shape_cast %19 : vector<8xf32> to vector<8x1xf32>
    %21 = arith.maximumf %18, %20 : vector<8x1xf32>
    %22 = arith.subf %18, %21 : vector<8x1xf32>
    %23 = math.exp %22 : vector<8x1xf32>
    %24 = vector.broadcast %21 : vector<8x1xf32> to vector<8x8xf32>
    %25 = arith.subf %16, %24 : vector<8x8xf32>
    %26 = math.exp %25 : vector<8x8xf32>
    %c0_16 = arith.constant 0 : index
    %c0_17 = arith.constant 0 : index
    %c0_18 = arith.constant 0 : index
    %27 = vector.load %arg9[%c0_16, %c0_17, %c0_18] : memref<2x8x1xf32, #tpu.memory_space<vmem>>, vector<1x8x1xf32>
    %28 = vector.shape_cast %27 : vector<1x8x1xf32> to vector<8x1xf32>
    %29 = arith.mulf %23, %28 : vector<8x1xf32>
    %cst_19 = arith.constant dense<0.000000e+00> : vector<8xf32>
    %30 = vector.multi_reduction <add>, %26, %cst_19 [1] : vector<8x8xf32> to vector<8xf32>
    %31 = vector.shape_cast %30 : vector<8xf32> to vector<8x1xf32>
    %32 = arith.addf %29, %31 : vector<8x1xf32>
    %c0_20 = arith.constant 0 : index
    %c0_21 = arith.constant 0 : index
    %c0_22 = arith.constant 0 : index
    %33 = vector.load %arg9[%c0_20, %c0_21, %c0_22] : memref<2x8x1xf32, #tpu.memory_space<vmem>>, vector<1x8x1xf32>
    %34 = vector.shape_cast %33 : vector<1x8x1xf32> to vector<8x1xf32>
    %35 = vector.shape_cast %32 : vector<8x1xf32> to vector<1x8x1xf32>
    tpu.vector_store %arg9[%c0_20, %c0_21, %c0_22], %35 {strides = array<i32>} : memref<2x8x1xf32, #tpu.memory_space<vmem>>, vector<1x8x1xf32>,
    %c0_23 = arith.constant 0 : index
    %c0_24 = arith.constant 0 : index
    %c0_25 = arith.constant 0 : index
    %36 = vector.load %arg10[%c0_23, %c0_24, %c0_25] : memref<2x8x16xf32, #tpu.memory_space<vmem>>, vector<1x8x16xf32>
    %37 = vector.shape_cast %36 : vector<1x8x16xf32> to vector<8x16xf32>
    %38 = vector.broadcast %23 : vector<8x1xf32> to vector<8x16xf32>
    %39 = arith.mulf %38, %37 : vector<8x16xf32>
    %40 = arith.truncf %26 : vector<8x8xf32> to vector<8x8xbf16>
    %cst_26 = arith.constant dense<0.000000e+00> : vector<8x16xf32>
    %41 = tpu.matmul %40, %13, %cst_26 {dimension_numbers = #tpu.dot_dimension_numbers<[1], [0], [0], [1], [0, 0, 1, 1], [], []>} : vector<8x8xbf16>, vector<8x16xbf16>, vector<8x16xf32> -> vector<8x16xf32>
    %42 = arith.addf %39, %41 : vector<8x16xf32>
    %c0_27 = arith.constant 0 : index
    %c0_28 = arith.constant 0 : index
    %c0_29 = arith.constant 0 : index
    %43 = vector.load %arg10[%c0_27, %c0_28, %c0_29] : memref<2x8x16xf32, #tpu.memory_space<vmem>>, vector<1x8x16xf32>
    %44 = vector.shape_cast %43 : vector<1x8x16xf32> to vector<8x16xf32>
    %45 = vector.shape_cast %42 : vector<8x16xf32> to vector<1x8x16xf32>
    tpu.vector_store %arg10[%c0_27, %c0_28, %c0_29], %45 {strides = array<i32>} : memref<2x8x16xf32, #tpu.memory_space<vmem>>, vector<1x8x16xf32>,
    %c0_30 = arith.constant 0 : index
    %c0_31 = arith.constant 0 : index
    %c0_32 = arith.constant 0 : index
    %46 = vector.load %arg8[%c0_30, %c0_31, %c0_32] : memref<2x8x1xf32, #tpu.memory_space<vmem>>, vector<1x8x1xf32>
    %47 = vector.shape_cast %46 : vector<1x8x1xf32> to vector<8x1xf32>
    %48 = vector.shape_cast %21 : vector<8x1xf32> to vector<1x8x1xf32>
    tpu.vector_store %arg8[%c0_30, %c0_31, %c0_32], %48 {strides = array<i32>} : memref<2x8x1xf32, #tpu.memory_space<vmem>>, vector<1x8x1xf32>,
    %49 = vector.extract_strided_slice %4 {offsets = [0, 16], sizes = [8, 16], strides = [1, 1]} : vector<8x32xbf16> to vector<8x16xbf16>
    %50 = vector.extract_strided_slice %6 {offsets = [0, 16], sizes = [8, 16], strides = [1, 1]} : vector<8x32xbf16> to vector<8x16xbf16>
    %51 = vector.extract_strided_slice %8 {offsets = [0, 16], sizes = [8, 16], strides = [1, 1]} : vector<8x32xbf16> to vector<8x16xbf16>
    %cst_33 = arith.constant dense<0.000000e+00> : vector<8x8xf32>
    %52 = tpu.matmul %49, %50, %cst_33 {dimension_numbers = #tpu.dot_dimension_numbers<[1], [1], [0], [0], [0, 0, 1, 0], [], []>} : vector<8x16xbf16>, vector<8x16xbf16>, vector<8x8xf32> -> vector<8x8xf32>
    %53 = vector.broadcast %10 : vector<1x8xf32> to vector<8x8xf32>
    %54 = arith.addf %52, %53 : vector<8x8xf32>
    %c1 = arith.constant 1 : index
    %c0_34 = arith.constant 0 : index
    %c0_35 = arith.constant 0 : index
    %55 = vector.load %arg8[%c1, %c0_34, %c0_35] : memref<2x8x1xf32, #tpu.memory_space<vmem>>, vector<1x8x1xf32>
    %56 = vector.shape_cast %55 : vector<1x8x1xf32> to vector<8x1xf32>
    %cst_36 = arith.constant dense<0xFF800000> : vector<8xf32>
    %57 = vector.multi_reduction <maximumf>, %54, %cst_36 [1] : vector<8x8xf32> to vector<8xf32>
    %58 = vector.shape_cast %57 : vector<8xf32> to vector<8x1xf32>
    %59 = arith.maximumf %56, %58 : vector<8x1xf32>
    %60 = arith.subf %56, %59 : vector<8x1xf32>
    %61 = math.exp %60 : vector<8x1xf32>
    %62 = vector.broadcast %59 : vector<8x1xf32> to vector<8x8xf32>
    %63 = arith.subf %54, %62 : vector<8x8xf32>
    %64 = math.exp %63 : vector<8x8xf32>
    %c1_37 = arith.constant 1 : index
    %c0_38 = arith.constant 0 : index
    %c0_39 = arith.constant 0 : index
    %65 = vector.load %arg9[%c1_37, %c0_38, %c0_39] : memref<2x8x1xf32, #tpu.memory_space<vmem>>, vector<1x8x1xf32>
    %66 = vector.shape_cast %65 : vector<1x8x1xf32> to vector<8x1xf32>
    %67 = arith.mulf %61, %66 : vector<8x1xf32>
    %cst_40 = arith.constant dense<0.000000e+00> : vector<8xf32>
    %68 = vector.multi_reduction <add>, %64, %cst_40 [1] : vector<8x8xf32> to vector<8xf32>
    %69 = vector.shape_cast %68 : vector<8xf32> to vector<8x1xf32>
    %70 = arith.addf %67, %69 : vector<8x1xf32>
    %c1_41 = arith.constant 1 : index
    %c0_42 = arith.constant 0 : index
    %c0_43 = arith.constant 0 : index
    %71 = vector.load %arg9[%c1_41, %c0_42, %c0_43] : memref<2x8x1xf32, #tpu.memory_space<vmem>>, vector<1x8x1xf32>
    %72 = vector.shape_cast %71 : vector<1x8x1xf32> to vector<8x1xf32>
    %73 = vector.shape_cast %70 : vector<8x1xf32> to vector<1x8x1xf32>
    tpu.vector_store %arg9[%c1_41, %c0_42, %c0_43], %73 {strides = array<i32>} : memref<2x8x1xf32, #tpu.memory_space<vmem>>, vector<1x8x1xf32>,
    %c1_44 = arith.constant 1 : index
    %c0_45 = arith.constant 0 : index
    %c0_46 = arith.constant 0 : index
    %74 = vector.load %arg10[%c1_44, %c0_45, %c0_46] : memref<2x8x16xf32, #tpu.memory_space<vmem>>, vector<1x8x16xf32>
    %75 = vector.shape_cast %74 : vector<1x8x16xf32> to vector<8x16xf32>
    %76 = vector.broadcast %61 : vector<8x1xf32> to vector<8x16xf32>
    %77 = arith.mulf %76, %75 : vector<8x16xf32>
    %78 = arith.truncf %64 : vector<8x8xf32> to vector<8x8xbf16>
    %cst_47 = arith.constant dense<0.000000e+00> : vector<8x16xf32>
    %79 = tpu.matmul %78, %51, %cst_47 {dimension_numbers = #tpu.dot_dimension_numbers<[1], [0], [0], [1], [0, 0, 1, 1], [], []>} : vector<8x8xbf16>, vector<8x16xbf16>, vector<8x16xf32> -> vector<8x16xf32>
    %80 = arith.addf %77, %79 : vector<8x16xf32>
    %c1_48 = arith.constant 1 : index
    %c0_49 = arith.constant 0 : index
    %c0_50 = arith.constant 0 : index
    %81 = vector.load %arg10[%c1_48, %c0_49, %c0_50] : memref<2x8x16xf32, #tpu.memory_space<vmem>>, vector<1x8x16xf32>
    %82 = vector.shape_cast %81 : vector<1x8x16xf32> to vector<8x16xf32>
    %83 = vector.shape_cast %80 : vector<8x16xf32> to vector<1x8x16xf32>
    tpu.vector_store %arg10[%c1_48, %c0_49, %c0_50], %83 {strides = array<i32>} : memref<2x8x16xf32, #tpu.memory_space<vmem>>, vector<1x8x16xf32>,
    %c1_51 = arith.constant 1 : index
    %c0_52 = arith.constant 0 : index
    %c0_53 = arith.constant 0 : index
    %84 = vector.load %arg8[%c1_51, %c0_52, %c0_53] : memref<2x8x1xf32, #tpu.memory_space<vmem>>, vector<1x8x1xf32>
    %85 = vector.shape_cast %84 : vector<1x8x1xf32> to vector<8x1xf32>
    %86 = vector.shape_cast %59 : vector<8x1xf32> to vector<1x8x1xf32>
    tpu.vector_store %arg8[%c1_51, %c0_52, %c0_53], %86 {strides = array<i32>} : memref<2x8x1xf32, #tpu.memory_space<vmem>>, vector<1x8x1xf32>,
    %c0_i32_54 = arith.constant 0 : i32
    %87 = arith.cmpi eq, %arg2, %c0_i32_54 : i32
    %88 = arith.extui %87 : i1 to i32
    %c0_i32_55 = arith.constant 0 : i32
    %89 = arith.cmpi ne, %88, %c0_i32_55 : i32
    scf.if %89 {
      %c0_56 = arith.constant 0 : index
      %c0_57 = arith.constant 0 : index
      %c0_58 = arith.constant 0 : index
      %90 = vector.load %arg10[%c0_56, %c0_57, %c0_58] : memref<2x8x16xf32, #tpu.memory_space<vmem>>, vector<1x8x16xf32>
      %91 = vector.shape_cast %90 : vector<1x8x16xf32> to vector<8x16xf32>
      %c0_59 = arith.constant 0 : index
      %c0_60 = arith.constant 0 : index
      %c0_61 = arith.constant 0 : index
      %92 = vector.load %arg9[%c0_59, %c0_60, %c0_61] : memref<2x8x1xf32, #tpu.memory_space<vmem>>, vector<1x8x1xf32>
      %93 = vector.shape_cast %92 : vector<1x8x1xf32> to vector<8x1xf32>
      %94 = tpu.reciprocal %93 {approx = true} : vector<8x1xf32> -> vector<8x1xf32>
      %95 = vector.broadcast %94 : vector<8x1xf32> to vector<8x16xf32>
      %96 = arith.mulf %91, %95 : vector<8x16xf32>
      %c1_62 = arith.constant 1 : index
      %c0_63 = arith.constant 0 : index
      %c0_64 = arith.constant 0 : index
      %97 = vector.load %arg10[%c1_62, %c0_63, %c0_64] : memref<2x8x16xf32, #tpu.memory_space<vmem>>, vector<1x8x16xf32>
      %98 = vector.shape_cast %97 : vector<1x8x16xf32> to vector<8x16xf32>
      %c1_65 = arith.constant 1 : index
      %c0_66 = arith.constant 0 : index
      %c0_67 = arith.constant 0 : index
      %99 = vector.load %arg9[%c1_65, %c0_66, %c0_67] : memref<2x8x1xf32, #tpu.memory_space<vmem>>, vector<1x8x1xf32>
      %100 = vector.shape_cast %99 : vector<1x8x1xf32> to vector<8x1xf32>
      %101 = tpu.reciprocal %100 {approx = true} : vector<8x1xf32> -> vector<8x1xf32>
      %102 = vector.broadcast %101 : vector<8x1xf32> to vector<8x16xf32>
      %103 = arith.mulf %98, %102 : vector<8x16xf32>
      %104 = tpu.concatenate %96, %103 in 1 : vector<8x16xf32>, vector<8x16xf32> -> vector<8x32xf32>
      %105 = arith.truncf %104 : vector<8x32xf32> to vector<8x32xbf16>
      %c0_68 = arith.constant 0 : index
      %c0_69 = arith.constant 0 : index
      %c0_70 = arith.constant 0 : index
      %106 = vector.load %arg7[%c0_68, %c0_69, %c0_70] : memref<1x8x32xbf16, #tpu.memory_space<vmem>>, vector<1x8x32xbf16>
      %107 = vector.shape_cast %106 : vector<1x8x32xbf16> to vector<8x32xbf16>
      %108 = vector.shape_cast %105 : vector<8x32xbf16> to vector<1x8x32xbf16>
      tpu.vector_store %arg7[%c0_68, %c0_69, %c0_70], %108 {strides = array<i32>} : memref<1x8x32xbf16, #tpu.memory_space<vmem>>, vector<1x8x32xbf16>,
    } else {
    }
    return
  }
  func.func @transform_0(%arg0: i32, %arg1: i32, %arg2: i32) -> (i32, i32, i32) {
    %c0_i32 = arith.constant 0 : i32
    %c0_i32_0 = arith.constant 0 : i32
    return %arg0, %arg1, %c0_i32 : i32, i32, i32
  }
  func.func @transform_1(%arg0: i32, %arg1: i32, %arg2: i32) -> (i32, i32, i32) {
    %c0_i32 = arith.constant 0 : i32
    %c0_i32_0 = arith.constant 0 : i32
    return %arg0, %arg2, %c0_i32 : i32, i32, i32
  }
  func.func @transform_2(%arg0: i32, %arg1: i32, %arg2: i32) -> (i32, i32, i32) {
    %c0_i32 = arith.constant 0 : i32
    %c0_i32_0 = arith.constant 0 : i32
    return %arg0, %arg2, %c0_i32 : i32, i32, i32
  }
  func.func @transform_3(%arg0: i32, %arg1: i32, %arg2: i32) -> (i32, i32, i32) {
    %c0_i32 = arith.constant 0 : i32
    %c0_i32_0 = arith.constant 0 : i32
    return %arg0, %c0_i32, %arg2 : i32, i32, i32
  }
  func.func @transform_4(%arg0: i32, %arg1: i32, %arg2: i32) -> (i32, i32, i32) {
    %c0_i32 = arith.constant 0 : i32
    %c0_i32_0 = arith.constant 0 : i32
    return %arg0, %arg1, %c0_i32 : i32, i32, i32
  }
}

module attributes {stable_mosaic.version = 11 : i64} {
  func.func @_linear_kernel(%arg0: i32, %arg1: i32, %arg2: i32, %arg3: memref<16x32xbf16, #tpu.memory_space<vmem>>, %arg4: memref<32x64xbf16, #tpu.memory_space<vmem>>, %arg5: memref<1x64xf32, #tpu.memory_space<vmem>>, %arg6: memref<16x64xbf16, #tpu.memory_space<vmem>>, %arg7: memref<16x64xf32, #tpu.memory_space<vmem>>) attributes {dimension_semantics = [#tpu.dimension_semantics<parallel>, #tpu.dimension_semantics<parallel>, #tpu.dimension_semantics<arbitrary>], iteration_bounds = array<i64: 1, 1, 1>, scalar_prefetch = 0 : i64, scratch_operands = 1 : i64, tpu.core_type = #tpu.core_type<tc>, window_params = [{transform_indices = @transform_0, window_bounds = array<i64: 16, 32>}, {transform_indices = @transform_1, window_bounds = array<i64: 32, 64>}, {transform_indices = @transform_2, window_bounds = array<i64: 1, 64>}, {transform_indices = @transform_3, window_bounds = array<i64: 16, 64>}]} {
    %c0_i32 = arith.constant 0 : i32
    %0 = arith.cmpi eq, %arg2, %c0_i32 : i32
    %1 = arith.extui %0 : i1 to i32
    %c0_i32_0 = arith.constant 0 : i32
    %2 = arith.cmpi ne, %1, %c0_i32_0 : i32
    scf.if %2 {
      %cst_10 = arith.constant 0.000000e+00 : f32
      %12 = vector.broadcast %cst_10 : f32 to vector<16x64xf32>
      %c0_11 = arith.constant 0 : index
      %c0_12 = arith.constant 0 : index
      %13 = vector.load %arg7[%c0_11, %c0_12] : memref<16x64xf32, #tpu.memory_space<vmem>>, vector<16x64xf32>
      tpu.vector_store %arg7[%c0_11, %c0_12], %12 {strides = array<i32>} : memref<16x64xf32, #tpu.memory_space<vmem>>, vector<16x64xf32>,
    } else {
    }
    %c0 = arith.constant 0 : index
    %c0_1 = arith.constant 0 : index
    %3 = vector.load %arg7[%c0, %c0_1] : memref<16x64xf32, #tpu.memory_space<vmem>>, vector<16x64xf32>
    %c0_2 = arith.constant 0 : index
    %c0_3 = arith.constant 0 : index
    %4 = vector.load %arg3[%c0_2, %c0_3] : memref<16x32xbf16, #tpu.memory_space<vmem>>, vector<16x32xbf16>
    %c0_4 = arith.constant 0 : index
    %c0_5 = arith.constant 0 : index
    %5 = vector.load %arg4[%c0_4, %c0_5] : memref<32x64xbf16, #tpu.memory_space<vmem>>, vector<32x64xbf16>
    %cst = arith.constant dense<0.000000e+00> : vector<16x64xf32>
    %6 = tpu.matmul %4, %5, %cst {dimension_numbers = #tpu.dot_dimension_numbers<[1], [0], [0], [1], [0, 0, 1, 1], [], []>} : vector<16x32xbf16>, vector<32x64xbf16>, vector<16x64xf32> -> vector<16x64xf32>
    %7 = arith.addf %3, %6 : vector<16x64xf32>
    %c0_6 = arith.constant 0 : index
    %c0_7 = arith.constant 0 : index
    %8 = vector.load %arg7[%c0_6, %c0_7] : memref<16x64xf32, #tpu.memory_space<vmem>>, vector<16x64xf32>
    tpu.vector_store %arg7[%c0_6, %c0_7], %7 {strides = array<i32>} : memref<16x64xf32, #tpu.memory_space<vmem>>, vector<16x64xf32>,
    %c0_i32_8 = arith.constant 0 : i32
    %9 = arith.cmpi eq, %arg2, %c0_i32_8 : i32
    %10 = arith.extui %9 : i1 to i32
    %c0_i32_9 = arith.constant 0 : i32
    %11 = arith.cmpi ne, %10, %c0_i32_9 : i32
    scf.if %11 {
      %c0_10 = arith.constant 0 : index
      %c0_11 = arith.constant 0 : index
      %12 = vector.load %arg7[%c0_10, %c0_11] : memref<16x64xf32, #tpu.memory_space<vmem>>, vector<16x64xf32>
      %c0_12 = arith.constant 0 : index
      %c0_13 = arith.constant 0 : index
      %13 = vector.load %arg5[%c0_12, %c0_13] : memref<1x64xf32, #tpu.memory_space<vmem>>, vector<1x64xf32>
      %14 = vector.broadcast %13 : vector<1x64xf32> to vector<16x64xf32>
      %15 = arith.addf %12, %14 : vector<16x64xf32>
      %cst_14 = arith.constant 0.000000e+00 : f32
      %16 = vector.broadcast %cst_14 : f32 to vector<16x64xf32>
      %17 = arith.maximumf %15, %16 : vector<16x64xf32>
      %18 = arith.truncf %17 : vector<16x64xf32> to vector<16x64xbf16>
      %c0_15 = arith.constant 0 : index
      %c0_16 = arith.constant 0 : index
      %19 = vector.load %arg6[%c0_15, %c0_16] : memref<16x64xbf16, #tpu.memory_space<vmem>>, vector<16x64xbf16>
      tpu.vector_store %arg6[%c0_15, %c0_16], %18 {strides = array<i32>} : memref<16x64xbf16, #tpu.memory_space<vmem>>, vector<16x64xbf16>,
    } else {
    }
    return
  }
  func.func @transform_0(%arg0: i32, %arg1: i32, %arg2: i32) -> (i32, i32) {
    %c0_i32 = arith.constant 0 : i32
    return %arg0, %arg2 : i32, i32
  }
  func.func @transform_1(%arg0: i32, %arg1: i32, %arg2: i32) -> (i32, i32) {
    %c0_i32 = arith.constant 0 : i32
    return %arg2, %arg1 : i32, i32
  }
  func.func @transform_2(%arg0: i32, %arg1: i32, %arg2: i32) -> (i32, i32) {
    %c0_i32 = arith.constant 0 : i32
    %c0_i32_0 = arith.constant 0 : i32
    return %c0_i32, %arg1 : i32, i32
  }
  func.func @transform_3(%arg0: i32, %arg1: i32, %arg2: i32) -> (i32, i32) {
    %c0_i32 = arith.constant 0 : i32
    return %arg0, %arg1 : i32, i32
  }
}

module attributes {stable_mosaic.version = 11 : i64} {
  func.func @_linear_kernel(%arg0: i32, %arg1: i32, %arg2: i32, %arg3: memref<16x64xbf16, #tpu.memory_space<vmem>>, %arg4: memref<64x32xbf16, #tpu.memory_space<vmem>>, %arg5: memref<1x32xf32, #tpu.memory_space<vmem>>, %arg6: memref<16x32xbf16, #tpu.memory_space<vmem>>, %arg7: memref<16x32xf32, #tpu.memory_space<vmem>>) attributes {dimension_semantics = [#tpu.dimension_semantics<parallel>, #tpu.dimension_semantics<parallel>, #tpu.dimension_semantics<arbitrary>], iteration_bounds = array<i64: 1, 1, 1>, scalar_prefetch = 0 : i64, scratch_operands = 1 : i64, tpu.core_type = #tpu.core_type<tc>, window_params = [{transform_indices = @transform_0, window_bounds = array<i64: 16, 64>}, {transform_indices = @transform_1, window_bounds = array<i64: 64, 32>}, {transform_indices = @transform_2, window_bounds = array<i64: 1, 32>}, {transform_indices = @transform_3, window_bounds = array<i64: 16, 32>}]} {
    %c0_i32 = arith.constant 0 : i32
    %0 = arith.cmpi eq, %arg2, %c0_i32 : i32
    %1 = arith.extui %0 : i1 to i32
    %c0_i32_0 = arith.constant 0 : i32
    %2 = arith.cmpi ne, %1, %c0_i32_0 : i32
    scf.if %2 {
      %cst_10 = arith.constant 0.000000e+00 : f32
      %12 = vector.broadcast %cst_10 : f32 to vector<16x32xf32>
      %c0_11 = arith.constant 0 : index
      %c0_12 = arith.constant 0 : index
      %13 = vector.load %arg7[%c0_11, %c0_12] : memref<16x32xf32, #tpu.memory_space<vmem>>, vector<16x32xf32>
      tpu.vector_store %arg7[%c0_11, %c0_12], %12 {strides = array<i32>} : memref<16x32xf32, #tpu.memory_space<vmem>>, vector<16x32xf32>,
    } else {
    }
    %c0 = arith.constant 0 : index
    %c0_1 = arith.constant 0 : index
    %3 = vector.load %arg7[%c0, %c0_1] : memref<16x32xf32, #tpu.memory_space<vmem>>, vector<16x32xf32>
    %c0_2 = arith.constant 0 : index
    %c0_3 = arith.constant 0 : index
    %4 = vector.load %arg3[%c0_2, %c0_3] : memref<16x64xbf16, #tpu.memory_space<vmem>>, vector<16x64xbf16>
    %c0_4 = arith.constant 0 : index
    %c0_5 = arith.constant 0 : index
    %5 = vector.load %arg4[%c0_4, %c0_5] : memref<64x32xbf16, #tpu.memory_space<vmem>>, vector<64x32xbf16>
    %cst = arith.constant dense<0.000000e+00> : vector<16x32xf32>
    %6 = tpu.matmul %4, %5, %cst {dimension_numbers = #tpu.dot_dimension_numbers<[1], [0], [0], [1], [0, 0, 1, 1], [], []>} : vector<16x64xbf16>, vector<64x32xbf16>, vector<16x32xf32> -> vector<16x32xf32>
    %7 = arith.addf %3, %6 : vector<16x32xf32>
    %c0_6 = arith.constant 0 : index
    %c0_7 = arith.constant 0 : index
    %8 = vector.load %arg7[%c0_6, %c0_7] : memref<16x32xf32, #tpu.memory_space<vmem>>, vector<16x32xf32>
    tpu.vector_store %arg7[%c0_6, %c0_7], %7 {strides = array<i32>} : memref<16x32xf32, #tpu.memory_space<vmem>>, vector<16x32xf32>,
    %c0_i32_8 = arith.constant 0 : i32
    %9 = arith.cmpi eq, %arg2, %c0_i32_8 : i32
    %10 = arith.extui %9 : i1 to i32
    %c0_i32_9 = arith.constant 0 : i32
    %11 = arith.cmpi ne, %10, %c0_i32_9 : i32
    scf.if %11 {
      %c0_10 = arith.constant 0 : index
      %c0_11 = arith.constant 0 : index
      %12 = vector.load %arg7[%c0_10, %c0_11] : memref<16x32xf32, #tpu.memory_space<vmem>>, vector<16x32xf32>
      %c0_12 = arith.constant 0 : index
      %c0_13 = arith.constant 0 : index
      %13 = vector.load %arg5[%c0_12, %c0_13] : memref<1x32xf32, #tpu.memory_space<vmem>>, vector<1x32xf32>
      %14 = vector.broadcast %13 : vector<1x32xf32> to vector<16x32xf32>
      %15 = arith.addf %12, %14 : vector<16x32xf32>
      %16 = arith.truncf %15 : vector<16x32xf32> to vector<16x32xbf16>
      %c0_14 = arith.constant 0 : index
      %c0_15 = arith.constant 0 : index
      %17 = vector.load %arg6[%c0_14, %c0_15] : memref<16x32xbf16, #tpu.memory_space<vmem>>, vector<16x32xbf16>
      tpu.vector_store %arg6[%c0_14, %c0_15], %16 {strides = array<i32>} : memref<16x32xbf16, #tpu.memory_space<vmem>>, vector<16x32xbf16>,
    } else {
    }
    return
  }
  func.func @transform_0(%arg0: i32, %arg1: i32, %arg2: i32) -> (i32, i32) {
    %c0_i32 = arith.constant 0 : i32
    return %arg0, %arg2 : i32, i32
  }
  func.func @transform_1(%arg0: i32, %arg1: i32, %arg2: i32) -> (i32, i32) {
    %c0_i32 = arith.constant 0 : i32
    return %arg2, %arg1 : i32, i32
  }
  func.func @transform_2(%arg0: i32, %arg1: i32, %arg2: i32) -> (i32, i32) {
    %c0_i32 = arith.constant 0 : i32
    %c0_i32_0 = arith.constant 0 : i32
    return %c0_i32, %arg1 : i32, i32
  }
  func.func @transform_3(%arg0: i32, %arg1: i32, %arg2: i32) -> (i32, i32) {
    %c0_i32 = arith.constant 0 : i32
    return %arg0, %arg1 : i32, i32
  }
}

</mosaic_0001>

<llo_original>
// kernel: pgen_forward.26
$region0: #{pgen_forward.26}
  #allocation0 [shape = 'u32[]', space=smem, size = 0x4, offset = 0x4, fixed_abs, tag = 'smem constant byte address 0x4 - core index']
  #allocation1 [shape = 'u32[144,128]{1,0:T(1,128)}', space=vmem, size = 0x12000, scoped, tag = 'internal scratch']
  #allocation2 [shape = 'f32[16,32]{1,0:T(8,128)}', space=vmem, size = 0x2000, scoped, tag = 'scratch operand']
  %s0 = inlined_call_operand.vmem [shape: bf16[16,32], index: 0, kind: input, shape index: {}]
  %s1 = inlined_call_operand.vmem [shape: bf16[32,32], index: 1, kind: input, shape index: {}]
  %s2 = inlined_call_operand.vmem [shape: f32[1,32], index: 2, kind: input, shape index: {}]
  %s3 = inlined_call_operand.vmem [shape: bf16[16,32], index: 3, kind: output, shape index: {}]
  %s4 = sld [smem:[#allocation0]]
  $region30: #{pgen_forward.26} parent=0
    _
  %s6 = ssub.s32 1, %s4
  %s7 = scalar_select 0, %s6, %s4
  // Predicated region
  $region2: #{pgen_forward.26} parent=0 // pred_check
    _
  $region3: #{pgen_forward.26} parent=0 // pred_check_branch
    %9 = sbr.rel (0) target = $region5
  $region4: #{pgen_forward.26} parent=0 // pred_region
    _
  $region5: #{pgen_forward.26} parent=0 // pred_fallthru
    _
  // Predicated region
  $region6: #{pgen_forward.26} parent=0 // pred_check
    _
  $region7: #{pgen_forward.26} parent=0 // pred_check_branch
    %11 = sbr.rel (0) target = $region9
  $region8: #{pgen_forward.26} parent=0 // pred_region
    _
  $region9: #{pgen_forward.26} parent=0 // pred_fallthru
    _
  // Predicated region
  $region10: #{pgen_forward.26} parent=0 // pred_check
    _
  $region11: #{pgen_forward.26} parent=0 // pred_check_branch
    %13 = sbr.rel (0) target = $region13
  $region12: #{pgen_forward.26} parent=0 // pred_region
    _
  $region13: #{pgen_forward.26} parent=0 // pred_fallthru
    _
  %p15 = scmp.eq.s32.totalorder 0, 0
  // Predicated region
  $region14: #{pgen_forward.26} parent=0 // pred_check
    %p16 = pneg %p15
  $region15: #{pgen_forward.26} parent=0 // pred_check_branch
    %18 = sbr.rel (%p16) target = $region17
  $region16: #{pgen_forward.26} parent=0 // pred_region
    %vm19 = vcmask 261120
    %20 = vst.msk [vmem:[#allocation2] sm:$0xff] %vm19, 0.0
    %21 = vst.msk [vmem:[#allocation2 + $0x8] sm:$0xff] %vm19, 0.0
  $region17: #{pgen_forward.26} parent=0 // pred_fallthru
    _
  %v22 = vld [vmem:[#allocation2] sm:$0xff]
  %v23 = vld [vmem:[#allocation2 + $0x8] sm:$0xff]
  %v24 = vld [vmem:[%s0] sm:$0xf]
  %v25 = vld [vmem:[%s0 + $0x4] sm:$0xf]
  %v26 = vld [vmem:[%s1] sm:$0xf]
  %v27 = vld [vmem:[%s1 + $0x4] sm:$0xf]
  %v28 = vld [vmem:[%s1 + $0x8] sm:$0xf]
  %v29 = vld [vmem:[%s1 + $0xc] sm:$0xf]
  %v32 = vunpack.c.l.b16 %v24
  %v33 = vunpack.c.l.b16 %v25
  %v34 = vpack.c.b16 %v33, %v32
  %v39 = vunpack.c.l.b16 %v26
  %v40 = vunpack.c.l.b16 %v27
  %v41 = vunpack.c.l.b16 %v28
  %v42 = vunpack.c.l.b16 %v29
  %v43 = vpack.c.b16 %v40, %v39
  %v44 = vpack.c.b16 %v42, %v41
  %vm47 = vcmask 261120
  %v49 = vsel %vm47, %v34, 0
  %51 = vmatprep.subr.bf16.mxu0 0
  %52 = vmatpush1.bf16.msra.mxu0 %v43
  %53 = vmatprep.subr.bf16.mxu0 0
  %54 = vmatpush1.bf16.msra.mxu0 %v44
  %55 = vmatprep.subr.bf16.mxu0 0
  %56 = vmatpush1.bf16.msra.mxu0 0
  %57 = vmatprep.subr.bf16.mxu0 0
  %58 = vmatpush1.bf16.msra.mxu0 0
  %59 = vmatprep.subr.bf16.mxu0 0
  %60 = vmatpush1.bf16.msra.mxu0 0
  %61 = vmatprep.subr.bf16.mxu0 0
  %62 = vmatpush1.bf16.msra.mxu0 0
  %63 = vmatprep.subr.bf16.mxu0 0
  %64 = vmatpush1.bf16.msra.mxu0 0
  %65 = vmatprep.subr.bf16.mxu0 0
  %66 = vmatpush1.bf16.msra.mxu0 0
  %67 = vmatprep.subr.bf16.mxu0 0
  %68 = vmatpush1.bf16.msra.mxu0 0
  %69 = vmatprep.subr.bf16.mxu0 0
  %70 = vmatpush1.bf16.msra.mxu0 0
  %71 = vmatprep.subr.bf16.mxu0 0
  %72 = vmatpush1.bf16.msra.mxu0 0
  %73 = vmatprep.subr.bf16.mxu0 0
  %74 = vmatpush1.bf16.msra.mxu0 0
  %75 = vmatprep.subr.bf16.mxu0 0
  %76 = vmatpush1.bf16.msra.mxu0 0
  %77 = vmatprep.subr.bf16.mxu0 0
  %78 = vmatpush1.bf16.msra.mxu0 0
  %79 = vmatprep.subr.bf16.mxu0 0
  %80 = vmatpush1.bf16.msra.mxu0 0
  %81 = vmatprep.subr.bf16.mxu0 0
  %82 = vmatpush1.bf16.msra.mxu0 0
  %83 = vmatprep.mubr.bf16.mxu0 0
  %84 = vmatmul.mubr.bf16.gmra.mrb[0].mxu0 %v49
  %v85 = vpop.f32.mrb[0].mxu0
  %v86 = vadd.f32 0.0, %v85
  %v87 = vpop.f32.mrb[0].mxu0
  %v88 = vpop.f32.mrb[0].mxu0
  %v89 = vadd.f32 0.0, %v88
  %v90 = vpop.f32.mrb[0].mxu0
  %91 = vdwg.mxu0
  %v92 = vadd.f32 %v22, %v86
  %v93 = vadd.f32 %v23, %v89
  %94 = vst.msk [vmem:[#allocation2] sm:$0xff] %vm47, %v92
  %95 = vst.msk [vmem:[#allocation2 + $0x8] sm:$0xff] %vm47, %v93
  // Predicated region
  $region18: #{pgen_forward.26} parent=0 // pred_check
    %p96 = pneg %p15
  $region19: #{pgen_forward.26} parent=0 // pred_check_branch
    %98 = sbr.rel (%p96) target = $region21
  $region20: #{pgen_forward.26} parent=0 // pred_region
    %v99 = vld [vmem:[#allocation2] sm:$0xff]
    %v100 = vld [vmem:[#allocation2 + $0x8] sm:$0xff]
    %v101 = vld [vmem:[%s2] sm:$0x1]
    %v103 = vlaneseq
    %v104 = vshrl.u32 %v103, 7
    %v105 = vsub.s32 0, %v104
    %v106 = vrot.slane %v101, %v105
    %v108 = vadd.f32 %v99, %v106
    %v109 = vadd.f32 %v100, %v106
    %v110 = vpack.c.bf16 %v109, %v108
    %v112 = vunpack.c.l.b16 %v110
    %v113 = vunpack.c.h.b16 %v110
    %v114 = vpack.c.b16 %v112, %v112
    %v115 = vpack.c.b16 %v113, %v113
    %vm118 = vcmask 257024
    %119 = vst.msk [vmem:[%s3] sm:$0xf] %vm118, %v114
    %120 = vst.msk [vmem:[%s3 + $0x4] sm:$0xf] %vm118, %v115
  $region21: #{pgen_forward.26} parent=0 // pred_fallthru
    _
  // Predicated region
  $region22: #{pgen_forward.26} parent=0 // pred_check
    _
  $region23: #{pgen_forward.26} parent=0 // pred_check_branch
    %122 = sbr.rel (0) target = $region25
  $region24: #{pgen_forward.26} parent=0 // pred_region
    _
  $region25: #{pgen_forward.26} parent=0 // pred_fallthru
    _
  // Predicated region
  $region26: #{pgen_forward.26} parent=0 // pred_check
    _
  $region27: #{pgen_forward.26} parent=0 // pred_check_branch
    %124 = sbr.rel (0) target = $region29
  $region28: #{pgen_forward.26} parent=0 // pred_region
    _
  $region29: #{pgen_forward.26} parent=0 // pred_fallthru
    _

// kernel: pgen_forward.27
$region0: #{pgen_forward.27}
  #allocation0 [shape = 'u32[]', space=smem, size = 0x4, offset = 0x4, fixed_abs, tag = 'smem constant byte address 0x4 - core index']
  #allocation1 [shape = 'u32[144,128]{1,0:T(1,128)}', space=vmem, size = 0x12000, scoped, tag = 'internal scratch']
  %s0 = inlined_call_operand.vmem [shape: bf16[16,32], index: 0, kind: input, shape index: {}]
  %s1 = inlined_call_operand.vmem [shape: bf16[16,32], index: 1, kind: input, shape index: {}]
  %s2 = inlined_call_operand.vmem [shape: f32[1,32], index: 2, kind: input, shape index: {}]
  %s3 = inlined_call_operand.vmem [shape: f32[1,32], index: 3, kind: input, shape index: {}]
  %s4 = inlined_call_operand.vmem [shape: f32[16,1], index: 4, kind: input, shape index: {}]
  %s5 = inlined_call_operand.vmem [shape: bf16[16,32], index: 5, kind: output, shape index: {}]
  %s6 = sld [smem:[#allocation0]]
  $region30: #{pgen_forward.27} parent=0
    _
  %s8 = ssub.s32 1, %s6
  %s9 = scalar_select 0, %s8, %s6
  // Predicated region
  $region2: #{pgen_forward.27} parent=0 // pred_check
    _
  $region3: #{pgen_forward.27} parent=0 // pred_check_branch
    %11 = sbr.rel (0) target = $region5
  $region4: #{pgen_forward.27} parent=0 // pred_region
    _
  $region5: #{pgen_forward.27} parent=0 // pred_fallthru
    _
  // Predicated region
  $region6: #{pgen_forward.27} parent=0 // pred_check
    _
  $region7: #{pgen_forward.27} parent=0 // pred_check_branch
    %13 = sbr.rel (0) target = $region9
  $region8: #{pgen_forward.27} parent=0 // pred_region
    _
  $region9: #{pgen_forward.27} parent=0 // pred_fallthru
    _
  // Predicated region
  $region10: #{pgen_forward.27} parent=0 // pred_check
    _
  $region11: #{pgen_forward.27} parent=0 // pred_check_branch
    %15 = sbr.rel (0) target = $region13
  $region12: #{pgen_forward.27} parent=0 // pred_region
    _
  $region13: #{pgen_forward.27} parent=0 // pred_fallthru
    _
  // Predicated region
  $region14: #{pgen_forward.27} parent=0 // pred_check
    _
  $region15: #{pgen_forward.27} parent=0 // pred_check_branch
    %17 = sbr.rel (0) target = $region17
  $region16: #{pgen_forward.27} parent=0 // pred_region
    _
  $region17: #{pgen_forward.27} parent=0 // pred_fallthru
    _
  // Predicated region
  $region18: #{pgen_forward.27} parent=0 // pred_check
    _
  $region19: #{pgen_forward.27} parent=0 // pred_check_branch
    %19 = sbr.rel (0) target = $region21
  $region20: #{pgen_forward.27} parent=0 // pred_region
    _
  $region21: #{pgen_forward.27} parent=0 // pred_fallthru
    _
  %v20 = vld [vmem:[%s0] sm:$0xf]
  %v21 = vld [vmem:[%s0 + $0x4] sm:$0xf]
  %v22 = vunpack.c.l.bf16 %v20
  %v23 = vunpack.c.l.bf16 %v21
  %v24 = vld [vmem:[%s1] sm:$0xf]
  %v25 = vld [vmem:[%s1 + $0x4] sm:$0xf]
  %v26 = vunpack.c.l.bf16 %v24
  %v27 = vunpack.c.l.bf16 %v25
  %v28 = vadd.f32 %v22, %v26
  %v29 = vadd.f32 %v23, %v27
  %vm30 = vcmask 261120
  %v31 = vsel %vm30, %v28, 0.0
  %32 = vadd.xlane.f32.xlu0 %v31
  %v33 = vpop.xlane.xlu0 %32
  %v34 = vsel %vm30, %v29, 0.0
  %35 = vadd.xlane.f32.xlu0 %v34
  %v36 = vpop.xlane.xlu0 %35
  %v37 = vrcp.pop 32.0
  %v38 = vmul.f32 %v33, %v37
  %v39 = vmul.f32 %v36, %v37
  %v40 = vmul.f32 %v28, %v28
  %v41 = vmul.f32 %v29, %v29
  %v42 = vsel %vm30, %v40, 0.0
  %43 = vadd.xlane.f32.xlu0 %v42
  %v44 = vpop.xlane.xlu0 %43
  %v45 = vsel %vm30, %v41, 0.0
  %46 = vadd.xlane.f32.xlu0 %v45
  %v47 = vpop.xlane.xlu0 %46
  %v48 = vmul.f32 %v44, %v37
  %v49 = vmul.f32 %v47, %v37
  %v50 = vmul.f32 %v38, %v38
  %v51 = vmul.f32 %v39, %v39
  %v52 = vsub.f32 %v48, %v50
  %v53 = vsub.f32 %v49, %v51
  %v54 = vsub.f32 %v28, %v38
  %v55 = vsub.f32 %v29, %v39
  %v56 = vadd.f32 %v52, 1e-05
  %v57 = vadd.f32 %v53, 1e-05
  %v58 = vrsqrt.pop %v56
  %v59 = vrsqrt.pop %v57
  %v60 = vmul.f32 %v54, %v58
  %v61 = vmul.f32 %v55, %v59
  %v62 = vld [vmem:[%s2] sm:$0x1]
  %v64 = vlaneseq
  %v65 = vshrl.u32 %v64, 7
  %v66 = vsub.s32 0, %v65
  %v67 = vrot.slane %v62, %v66
  %v69 = vmul.f32 %v60, %v67
  %v70 = vmul.f32 %v61, %v67
  %v71 = vld [vmem:[%s3] sm:$0x1]
  %v73 = vlaneseq
  %v74 = vshrl.u32 %v73, 7
  %v75 = vsub.s32 0, %v74
  %v76 = vrot.slane %v71, %v75
  %v78 = vadd.f32 %v69, %v76
  %v79 = vadd.f32 %v70, %v76
  %v80 = vld [vmem:[%s4] sm:$0xff]
  %v81 = vld [vmem:[%s4 + $0x8] sm:$0xff]
  %83 = vset.pattern.permute.xlu0 0
  %84 = vperm.xlu0 %83, %v80
  %v85 = vpop.permute.xlu0 %84
  %88 = vset.pattern.permute.xlu0 0
  %89 = vperm.xlu0 %88, %v81
  %v90 = vpop.permute.xlu0 %89
  %v92 = vmul.f32 %v78, %v85
  %v93 = vmul.f32 %v79, %v90
  %v94 = vpack.c.bf16 %v93, %v92
  %v96 = vunpack.c.l.b16 %v94
  %v97 = vunpack.c.h.b16 %v94
  %v98 = vpack.c.b16 %v96, %v96
  %v99 = vpack.c.b16 %v97, %v97
  %vm102 = vcmask 257024
  %103 = vst.msk [vmem:[%s5] sm:$0xf] %vm102, %v98
  %104 = vst.msk [vmem:[%s5 + $0x4] sm:$0xf] %vm102, %v99
  // Predicated region
  $region22: #{pgen_forward.27} parent=0 // pred_check
    _
  $region23: #{pgen_forward.27} parent=0 // pred_check_branch
    %106 = sbr.rel (0) target = $region25
  $region24: #{pgen_forward.27} parent=0 // pred_region
    _
  $region25: #{pgen_forward.27} parent=0 // pred_fallthru
    _
  // Predicated region
  $region26: #{pgen_forward.27} parent=0 // pred_check
    _
  $region27: #{pgen_forward.27} parent=0 // pred_check_branch
    %108 = sbr.rel (0) target = $region29
  $region28: #{pgen_forward.27} parent=0 // pred_region
    _
  $region29: #{pgen_forward.27} parent=0 // pred_fallthru
    _

// kernel: pgen_forward.24
$region0: #{pgen_forward.24}
  #allocation0 [shape = 'u32[]', space=smem, size = 0x4, offset = 0x4, fixed_abs, tag = 'smem constant byte address 0x4 - core index']
  #allocation1 [shape = 'u32[144,128]{1,0:T(1,128)}', space=vmem, size = 0x12000, scoped, tag = 'internal scratch']
  #allocation2 [shape = 'f32[16,32]{1,0:T(8,128)}', space=vmem, size = 0x2000, scoped, tag = 'scratch operand']
  #allocation3 [shape = 'f32[16,32]{1,0:T(8,128)}', space=vmem, size = 0x2000, scoped, tag = 'scratch operand']
  #allocation4 [shape = 'f32[16,32]{1,0:T(8,128)}', space=vmem, size = 0x2000, scoped, tag = 'scratch operand']
  %s0 = inlined_call_operand.vmem [shape: bf16[16,32], index: 0, kind: input, shape index: {}]
  %s1 = inlined_call_operand.vmem [shape: bf16[32,32], index: 1, kind: input, shape index: {}]
  %s2 = inlined_call_operand.vmem [shape: bf16[32,32], index: 2, kind: input, shape index: {}]
  %s3 = inlined_call_operand.vmem [shape: bf16[32,32], index: 3, kind: input, shape index: {}]
  %s4 = inlined_call_operand.vmem [shape: f32[1,32], index: 4, kind: input, shape index: {}]
  %s5 = inlined_call_operand.vmem [shape: f32[1,32], index: 5, kind: input, shape index: {}]
  %s6 = inlined_call_operand.vmem [shape: f32[1,32], index: 6, kind: input, shape index: {}]
  %s7 = inlined_call_operand.vmem [shape: bf16[16,32], index: 7, kind: output, shape index: {0}]
  %s8 = inlined_call_operand.vmem [shape: bf16[16,32], index: 8, kind: output, shape index: {1}]
  %s9 = inlined_call_operand.vmem [shape: bf16[16,32], index: 9, kind: output, shape index: {2}]
  %10 = xla_tuple %s7, %s8, %s9
  %s11 = sld [smem:[#allocation0]]
  $region62: #{pgen_forward.24} parent=0
    _
  %s13 = ssub.s32 1, %s11
  %s14 = scalar_select 0, %s13, %s11
  // Predicated region
  $region2: #{pgen_forward.24} parent=0 // pred_check
    _
  $region3: #{pgen_forward.24} parent=0 // pred_check_branch
    %16 = sbr.rel (0) target = $region5
  $region4: #{pgen_forward.24} parent=0 // pred_region
    _
  $region5: #{pgen_forward.24} parent=0 // pred_fallthru
    _
  // Predicated region
  $region6: #{pgen_forward.24} parent=0 // pred_check
    _
  $region7: #{pgen_forward.24} parent=0 // pred_check_branch
    %18 = sbr.rel (0) target = $region9
  $region8: #{pgen_forward.24} parent=0 // pred_region
    _
  $region9: #{pgen_forward.24} parent=0 // pred_fallthru
    _
  // Predicated region
  $region10: #{pgen_forward.24} parent=0 // pred_check
    _
  $region11: #{pgen_forward.24} parent=0 // pred_check_branch
    %20 = sbr.rel (0) target = $region13
  $region12: #{pgen_forward.24} parent=0 // pred_region
    _
  $region13: #{pgen_forward.24} parent=0 // pred_fallthru
    _
  // Predicated region
  $region14: #{pgen_forward.24} parent=0 // pred_check
    _
  $region15: #{pgen_forward.24} parent=0 // pred_check_branch
    %22 = sbr.rel (0) target = $region17
  $region16: #{pgen_forward.24} parent=0 // pred_region
    _
  $region17: #{pgen_forward.24} parent=0 // pred_fallthru
    _
  // Predicated region
  $region18: #{pgen_forward.24} parent=0 // pred_check
    _
  $region19: #{pgen_forward.24} parent=0 // pred_check_branch
    %24 = sbr.rel (0) target = $region21
  $region20: #{pgen_forward.24} parent=0 // pred_region
    _
  $region21: #{pgen_forward.24} parent=0 // pred_fallthru
    _
  // Predicated region
  $region22: #{pgen_forward.24} parent=0 // pred_check
    _
  $region23: #{pgen_forward.24} parent=0 // pred_check_branch
    %26 = sbr.rel (0) target = $region25
  $region24: #{pgen_forward.24} parent=0 // pred_region
    _
  $region25: #{pgen_forward.24} parent=0 // pred_fallthru
    _
  // Predicated region
  $region26: #{pgen_forward.24} parent=0 // pred_check
    _
  $region27: #{pgen_forward.24} parent=0 // pred_check_branch
    %28 = sbr.rel (0) target = $region29
  $region28: #{pgen_forward.24} parent=0 // pred_region
    _
  $region29: #{pgen_forward.24} parent=0 // pred_fallthru
    _
  %p30 = scmp.eq.s32.totalorder 0, 0
  // Predicated region
  $region30: #{pgen_forward.24} parent=0 // pred_check
    %p31 = pneg %p30
  $region31: #{pgen_forward.24} parent=0 // pred_check_branch
    %33 = sbr.rel (%p31) target = $region33
  $region32: #{pgen_forward.24} parent=0 // pred_region
    %vm34 = vcmask 261120
    %35 = vst.msk [vmem:[#allocation2] sm:$0xff] %vm34, 0.0
    %36 = vst.msk [vmem:[#allocation2 + $0x8] sm:$0xff] %vm34, 0.0
    %37 = vst.msk [vmem:[#allocation3] sm:$0xff] %vm34, 0.0
    %38 = vst.msk [vmem:[#allocation3 + $0x8] sm:$0xff] %vm34, 0.0
    %39 = vst.msk [vmem:[#allocation4] sm:$0xff] %vm34, 0.0
    %40 = vst.msk [vmem:[#allocation4 + $0x8] sm:$0xff] %vm34, 0.0
  $region33: #{pgen_forward.24} parent=0 // pred_fallthru
    _
  %v41 = vld [vmem:[%s0] sm:$0xf]
  %v42 = vld [vmem:[%s0 + $0x4] sm:$0xf]
  %v43 = vld [vmem:[#allocation2] sm:$0xff]
  %v44 = vld [vmem:[#allocation2 + $0x8] sm:$0xff]
  %v45 = vld [vmem:[%s1] sm:$0xf]
  %v46 = vld [vmem:[%s1 + $0x4] sm:$0xf]
  %v47 = vld [vmem:[%s1 + $0x8] sm:$0xf]
  %v48 = vld [vmem:[%s1 + $0xc] sm:$0xf]
  %v51 = vunpack.c.l.b16 %v41
  %v52 = vunpack.c.l.b16 %v42
  %v53 = vpack.c.b16 %v52, %v51
  %v58 = vunpack.c.l.b16 %v45
  %v59 = vunpack.c.l.b16 %v46
  %v60 = vunpack.c.l.b16 %v47
  %v61 = vunpack.c.l.b16 %v48
  %v62 = vpack.c.b16 %v59, %v58
  %v63 = vpack.c.b16 %v61, %v60
  %vm66 = vcmask 261120
  %v68 = vsel %vm66, %v53, 0
  %70 = vmatprep.subr.bf16.mxu0 0
  %71 = vmatpush1.bf16.msra.mxu0 %v62
  %72 = vmatprep.subr.bf16.mxu0 0
  %73 = vmatpush1.bf16.msra.mxu0 %v63
  %74 = vmatprep.subr.bf16.mxu0 0
  %75 = vmatpush1.bf16.msra.mxu0 0
  %76 = vmatprep.subr.bf16.mxu0 0
  %77 = vmatpush1.bf16.msra.mxu0 0
  %78 = vmatprep.subr.bf16.mxu0 0
  %79 = vmatpush1.bf16.msra.mxu0 0
  %80 = vmatprep.subr.bf16.mxu0 0
  %81 = vmatpush1.bf16.msra.mxu0 0
  %82 = vmatprep.subr.bf16.mxu0 0
  %83 = vmatpush1.bf16.msra.mxu0 0
  %84 = vmatprep.subr.bf16.mxu0 0
  %85 = vmatpush1.bf16.msra.mxu0 0
  %86 = vmatprep.subr.bf16.mxu0 0
  %87 = vmatpush1.bf16.msra.mxu0 0
  %88 = vmatprep.subr.bf16.mxu0 0
  %89 = vmatpush1.bf16.msra.mxu0 0
  %90 = vmatprep.subr.bf16.mxu0 0
  %91 = vmatpush1.bf16.msra.mxu0 0
  %92 = vmatprep.subr.bf16.mxu0 0
  %93 = vmatpush1.bf16.msra.mxu0 0
  %94 = vmatprep.subr.bf16.mxu0 0
  %95 = vmatpush1.bf16.msra.mxu0 0
  %96 = vmatprep.subr.bf16.mxu0 0
  %97 = vmatpush1.bf16.msra.mxu0 0
  %98 = vmatprep.subr.bf16.mxu0 0
  %99 = vmatpush1.bf16.msra.mxu0 0
  %100 = vmatprep.subr.bf16.mxu0 0
  %101 = vmatpush1.bf16.msra.mxu0 0
  %102 = vmatprep.mubr.bf16.mxu0 0
  %103 = vmatmul.mubr.bf16.gmra.mrb[0].mxu0 %v68
  %v104 = vpop.f32.mrb[0].mxu0
  %v105 = vadd.f32 0.0, %v104
  %v106 = vpop.f32.mrb[0].mxu0
  %v107 = vpop.f32.mrb[0].mxu0
  %v108 = vadd.f32 0.0, %v107
  %v109 = vpop.f32.mrb[0].mxu0
  %110 = vdwg.mxu0
  %v111 = vadd.f32 %v43, %v105
  %v112 = vadd.f32 %v44, %v108
  %113 = vst.msk [vmem:[#allocation2] sm:$0xff] %vm66, %v111
  %114 = vst.msk [vmem:[#allocation2 + $0x8] sm:$0xff] %vm66, %v112
  %v115 = vld [vmem:[#allocation3] sm:$0xff]
  %v116 = vld [vmem:[#allocation3 + $0x8] sm:$0xff]
  %v117 = vld [vmem:[%s2] sm:$0xf]
  %v118 = vld [vmem:[%s2 + $0x4] sm:$0xf]
  %v119 = vld [vmem:[%s2 + $0x8] sm:$0xf]
  %v120 = vld [vmem:[%s2 + $0xc] sm:$0xf]
  %v125 = vunpack.c.l.b16 %v117
  %v126 = vunpack.c.l.b16 %v118
  %v127 = vunpack.c.l.b16 %v119
  %v128 = vunpack.c.l.b16 %v120
  %v129 = vpack.c.b16 %v126, %v125
  %v130 = vpack.c.b16 %v128, %v127
  %133 = vmatprep.subr.bf16.mxu0 0
  %134 = vmatpush1.bf16.msra.mxu0 %v129
  %135 = vmatprep.subr.bf16.mxu0 0
  %136 = vmatpush1.bf16.msra.mxu0 %v130
  %137 = vmatprep.subr.bf16.mxu0 0
  %138 = vmatpush1.bf16.msra.mxu0 0
  %139 = vmatprep.subr.bf16.mxu0 0
  %140 = vmatpush1.bf16.msra.mxu0 0
  %141 = vmatprep.subr.bf16.mxu0 0
  %142 = vmatpush1.bf16.msra.mxu0 0
  %143 = vmatprep.subr.bf16.mxu0 0
  %144 = vmatpush1.bf16.msra.mxu0 0
  %145 = vmatprep.subr.bf16.mxu0 0
  %146 = vmatpush1.bf16.msra.mxu0 0
  %147 = vmatprep.subr.bf16.mxu0 0
  %148 = vmatpush1.bf16.msra.mxu0 0
  %149 = vmatprep.subr.bf16.mxu0 0
  %150 = vmatpush1.bf16.msra.mxu0 0
  %151 = vmatprep.subr.bf16.mxu0 0
  %152 = vmatpush1.bf16.msra.mxu0 0
  %153 = vmatprep.subr.bf16.mxu0 0
  %154 = vmatpush1.bf16.msra.mxu0 0
  %155 = vmatprep.subr.bf16.mxu0 0
  %156 = vmatpush1.bf16.msra.mxu0 0
  %157 = vmatprep.subr.bf16.mxu0 0
  %158 = vmatpush1.bf16.msra.mxu0 0
  %159 = vmatprep.subr.bf16.mxu0 0
  %160 = vmatpush1.bf16.msra.mxu0 0
  %161 = vmatprep.subr.bf16.mxu0 0
  %162 = vmatpush1.bf16.msra.mxu0 0
  %163 = vmatprep.subr.bf16.mxu0 0
  %164 = vmatpush1.bf16.msra.mxu0 0
  %165 = vmatprep.mubr.bf16.mxu0 0
  %166 = vmatmul.mubr.bf16.gmra.mrb[0].mxu0 %v68
  %v167 = vpop.f32.mrb[0].mxu0
  %v168 = vadd.f32 0.0, %v167
  %v169 = vpop.f32.mrb[0].mxu0
  %v170 = vpop.f32.mrb[0].mxu0
  %v171 = vadd.f32 0.0, %v170
  %v172 = vpop.f32.mrb[0].mxu0
  %173 = vdwg.mxu0
  %v174 = vadd.f32 %v115, %v168
  %v175 = vadd.f32 %v116, %v171
  %176 = vst.msk [vmem:[#allocation3] sm:$0xff] %vm66, %v174
  %177 = vst.msk [vmem:[#allocation3 + $0x8] sm:$0xff] %vm66, %v175
  %v178 = vld [vmem:[#allocation4] sm:$0xff]
  %v179 = vld [vmem:[#allocation4 + $0x8] sm:$0xff]
  %v180 = vld [vmem:[%s3] sm:$0xf]
  %v181 = vld [vmem:[%s3 + $0x4] sm:$0xf]
  %v182 = vld [vmem:[%s3 + $0x8] sm:$0xf]
  %v183 = vld [vmem:[%s3 + $0xc] sm:$0xf]
  %v188 = vunpack.c.l.b16 %v180
  %v189 = vunpack.c.l.b16 %v181
  %v190 = vunpack.c.l.b16 %v182
  %v191 = vunpack.c.l.b16 %v183
  %v192 = vpack.c.b16 %v189, %v188
  %v193 = vpack.c.b16 %v191, %v190
  %196 = vmatprep.subr.bf16.mxu0 0
  %197 = vmatpush1.bf16.msra.mxu0 %v192
  %198 = vmatprep.subr.bf16.mxu0 0
  %199 = vmatpush1.bf16.msra.mxu0 %v193
  %200 = vmatprep.subr.bf16.mxu0 0
  %201 = vmatpush1.bf16.msra.mxu0 0
  %202 = vmatprep.subr.bf16.mxu0 0
  %203 = vmatpush1.bf16.msra.mxu0 0
  %204 = vmatprep.subr.bf16.mxu0 0
  %205 = vmatpush1.bf16.msra.mxu0 0
  %206 = vmatprep.subr.bf16.mxu0 0
  %207 = vmatpush1.bf16.msra.mxu0 0
  %208 = vmatprep.subr.bf16.mxu0 0
  %209 = vmatpush1.bf16.msra.mxu0 0
  %210 = vmatprep.subr.bf16.mxu0 0
  %211 = vmatpush1.bf16.msra.mxu0 0
  %212 = vmatprep.subr.bf16.mxu0 0
  %213 = vmatpush1.bf16.msra.mxu0 0
  %214 = vmatprep.subr.bf16.mxu0 0
  %215 = vmatpush1.bf16.msra.mxu0 0
  %216 = vmatprep.subr.bf16.mxu0 0
  %217 = vmatpush1.bf16.msra.mxu0 0
  %218 = vmatprep.subr.bf16.mxu0 0
  %219 = vmatpush1.bf16.msra.mxu0 0
  %220 = vmatprep.subr.bf16.mxu0 0
  %221 = vmatpush1.bf16.msra.mxu0 0
  %222 = vmatprep.subr.bf16.mxu0 0
  %223 = vmatpush1.bf16.msra.mxu0 0
  %224 = vmatprep.subr.bf16.mxu0 0
  %225 = vmatpush1.bf16.msra.mxu0 0
  %226 = vmatprep.subr.bf16.mxu0 0
  %227 = vmatpush1.bf16.msra.mxu0 0
  %228 = vmatprep.mubr.bf16.mxu0 0
  %229 = vmatmul.mubr.bf16.gmra.mrb[0].mxu0 %v68
  %v230 = vpop.f32.mrb[0].mxu0
  %v231 = vadd.f32 0.0, %v230
  %v232 = vpop.f32.mrb[0].mxu0
  %v233 = vpop.f32.mrb[0].mxu0
  %v234 = vadd.f32 0.0, %v233
  %v235 = vpop.f32.mrb[0].mxu0
  %236 = vdwg.mxu0
  %v237 = vadd.f32 %v178, %v231
  %v238 = vadd.f32 %v179, %v234
  %239 = vst.msk [vmem:[#allocation4] sm:$0xff] %vm66, %v237
  %240 = vst.msk [vmem:[#allocation4 + $0x8] sm:$0xff] %vm66, %v238
  // Predicated region
  $region34: #{pgen_forward.24} parent=0 // pred_check
    %p241 = pneg %p30
  $region35: #{pgen_forward.24} parent=0 // pred_check_branch
    %243 = sbr.rel (%p241) target = $region37
  $region36: #{pgen_forward.24} parent=0 // pred_region
    %v244 = vld [vmem:[#allocation2] sm:$0xff]
    %v245 = vld [vmem:[#allocation2 + $0x8] sm:$0xff]
    %v246 = vld [vmem:[%s4] sm:$0x1]
    %v248 = vlaneseq
    %v249 = vshrl.u32 %v248, 7
    %v250 = vsub.s32 0, %v249
    %v251 = vrot.slane %v246, %v250
    %v253 = vadd.f32 %v244, %v251
    %v254 = vadd.f32 %v245, %v251
    %v255 = vpack.c.bf16 %v254, %v253
    %v257 = vunpack.c.l.b16 %v255
    %v258 = vunpack.c.h.b16 %v255
    %v259 = vpack.c.b16 %v257, %v257
    %v260 = vpack.c.b16 %v258, %v258
    %vm263 = vcmask 257024
    %264 = vst.msk [vmem:[%s7] sm:$0xf] %vm263, %v259
    %265 = vst.msk [vmem:[%s7 + $0x4] sm:$0xf] %vm263, %v260
    %v266 = vld [vmem:[#allocation3] sm:$0xff]
    %v267 = vld [vmem:[#allocation3 + $0x8] sm:$0xff]
    %v268 = vld [vmem:[%s5] sm:$0x1]
    %v270 = vlaneseq
    %v271 = vshrl.u32 %v270, 7
    %v272 = vsub.s32 0, %v271
    %v273 = vrot.slane %v268, %v272
    %v275 = vadd.f32 %v266, %v273
    %v276 = vadd.f32 %v267, %v273
    %v277 = vpack.c.bf16 %v276, %v275
    %v279 = vunpack.c.l.b16 %v277
    %v280 = vunpack.c.h.b16 %v277
    %v281 = vpack.c.b16 %v279, %v279
    %v282 = vpack.c.b16 %v280, %v280
    %285 = vst.msk [vmem:[%s8] sm:$0xf] %vm263, %v281
    %286 = vst.msk [vmem:[%s8 + $0x4] sm:$0xf] %vm263, %v282
    %v287 = vld [vmem:[#allocation4] sm:$0xff]
    %v288 = vld [vmem:[#allocation4 + $0x8] sm:$0xff]
    %v289 = vld [vmem:[%s6] sm:$0x1]
    %v291 = vlaneseq
    %v292 = vshrl.u32 %v291, 7
    %v293 = vsub.s32 0, %v292
    %v294 = vrot.slane %v289, %v293
    %v296 = vadd.f32 %v287, %v294
    %v297 = vadd.f32 %v288, %v294
    %v298 = vpack.c.bf16 %v297, %v296
    %v300 = vunpack.c.l.b16 %v298
    %v301 = vunpack.c.h.b16 %v298
    %v302 = vpack.c.b16 %v300, %v300
    %v303 = vpack.c.b16 %v301, %v301
    %306 = vst.msk [vmem:[%s9] sm:$0xf] %vm263, %v302
    %307 = vst.msk [vmem:[%s9 + $0x4] sm:$0xf] %vm263, %v303
  $region37: #{pgen_forward.24} parent=0 // pred_fallthru
    _
  // Predicated region
  $region38: #{pgen_forward.24} parent=0 // pred_check
    _
  $region39: #{pgen_forward.24} parent=0 // pred_check_branch
    %309 = sbr.rel (0) target = $region41
  $region40: #{pgen_forward.24} parent=0 // pred_region
    _
  $region41: #{pgen_forward.24} parent=0 // pred_fallthru
    _
  // Predicated region
  $region42: #{pgen_forward.24} parent=0 // pred_check
    _
  $region43: #{pgen_forward.24} parent=0 // pred_check_branch
    %311 = sbr.rel (0) target = $region45
  $region44: #{pgen_forward.24} parent=0 // pred_region
    _
  $region45: #{pgen_forward.24} parent=0 // pred_fallthru
    _
  // Predicated region
  $region46: #{pgen_forward.24} parent=0 // pred_check
    _
  $region47: #{pgen_forward.24} parent=0 // pred_check_branch
    %313 = sbr.rel (0) target = $region49
  $region48: #{pgen_forward.24} parent=0 // pred_region
    _
  $region49: #{pgen_forward.24} parent=0 // pred_fallthru
    _
  // Predicated region
  $region50: #{pgen_forward.24} parent=0 // pred_check
    _
  $region51: #{pgen_forward.24} parent=0 // pred_check_branch
    %315 = sbr.rel (0) target = $region53
  $region52: #{pgen_forward.24} parent=0 // pred_region
    _
  $region53: #{pgen_forward.24} parent=0 // pred_fallthru
    _
  // Predicated region
  $region54: #{pgen_forward.24} parent=0 // pred_check
    _
  $region55: #{pgen_forward.24} parent=0 // pred_check_branch
    %317 = sbr.rel (0) target = $region57
  $region56: #{pgen_forward.24} parent=0 // pred_region
    _
  $region57: #{pgen_forward.24} parent=0 // pred_fallthru
    _
  // Predicated region
  $region58: #{pgen_forward.24} parent=0 // pred_check
    _
  $region59: #{pgen_forward.24} parent=0 // pred_check_branch
    %319 = sbr.rel (0) target = $region61
  $region60: #{pgen_forward.24} parent=0 // pred_region
    _
  $region61: #{pgen_forward.24} parent=0 // pred_fallthru
    _

// kernel: pgen_forward.25
$region0: #{pgen_forward.25}
  #allocation0 [shape = 'u32[]', space=smem, size = 0x4, offset = 0x4, fixed_abs, tag = 'smem constant byte address 0x4 - core index']
  #allocation1 [shape = 'u32[144,128]{1,0:T(1,128)}', space=vmem, size = 0x12000, scoped, tag = 'internal scratch']
  #allocation2 [shape = 'f32[2,8,1]{2,1,0:T(8,128)}', space=vmem, size = 0x2000, scoped, tag = 'scratch operand']
  #allocation3 [shape = 'f32[2,8,1]{2,1,0:T(8,128)}', space=vmem, size = 0x2000, scoped, tag = 'scratch operand']
  #allocation4 [shape = 'f32[2,8,16]{2,1,0:T(8,128)}', space=vmem, size = 0x2000, scoped, tag = 'scratch operand']
  %s0 = inlined_call_operand.vmem [shape: bf16[2,8,32], index: 0, kind: input, shape index: {}]
  %s1 = inlined_call_operand.vmem [shape: bf16[2,8,32], index: 1, kind: input, shape index: {}]
  %s2 = inlined_call_operand.vmem [shape: bf16[2,8,32], index: 2, kind: input, shape index: {}]
  %s3 = inlined_call_operand.vmem [shape: f32[2,1,8], index: 3, kind: input, shape index: {}]
  %s4 = inlined_call_operand.vmem [shape: bf16[2,8,32], index: 4, kind: output, shape index: {}]
  %s5 = sld [smem:[#allocation0]]
  $region57: #{pgen_forward.25} parent=0
    _
  %s7 = ssub.s32 1, %s5
  %s8 = scalar_select 0, %s7, %s5
  loop: start=0, step=1, limit=4
  $region2: #{pgen_forward.25} parent=0 // loop_pre_header
    _
  $region3: #{pgen_forward.25} parent=0 // loop_header
    %s10 = sphi 0, %s14
    %p11 = scmp.ge.s32.totalorder %s10, 4
    %s17 = sphi 0, %s36
    %s18 = sphi 0, %s32
    %s19 = sphi 0, %s28
    %s20 = sphi 0, %s17
    %s21 = sphi 0, %s18
    %s22 = sphi 0, %s19
    %s23 = sphi 0, %s20
    %s24 = sphi 0, %s21
    %s25 = sphi 0, %s22
    %s41 = sphi 0, %s43
    %s44 = sphi 0, %s41
    %s45 = sphi 0, %s44
    %s61 = sphi 0, %s45
    %s69 = sphi 0, %s71
    %s72 = sphi 0, %s69
    %s73 = sphi 0, %s72
    %s89 = sphi 0, %s73
    %s97 = sphi 0, %s99
    %s100 = sphi 0, %s97
    %s101 = sphi 0, %s100
    %s117 = sphi 0, %s101
    %s125 = sphi 0, %s127
    %s128 = sphi 0, %s125
    %s129 = sphi 0, %s128
    %s145 = sphi 0, %s129
    %s153 = sphi 0, %s155
    %s156 = sphi 0, %s153
    %s157 = sphi 0, %s156
    %s173 = sphi 0, %s157
  $region4: #{pgen_forward.25} parent=0 // loop_header_branch
    %13 = sbr.rel (%p11) target = $region8
  $region5: #{pgen_forward.25} parent=0 // loop_body
    %s15 = ssub.s32 %s10, 1
    %s16 = ssub.s32 %s10, 2
    %s26 = sadd.s32 1, %s19
    %p27 = scmp.ge.s32.totalorder %s26, 1
    %s28 = scalar_select %p27, 0, %s26
    %s29 = sadd.s32 1, %s18
    %s30 = scalar_select %p27, %s29, %s18
    %p31 = scmp.ge.s32.totalorder %s30, 1
    %s32 = scalar_select %p31, 0, %s30
    %s33 = sadd.s32 1, %s17
    %s34 = scalar_select %p31, %s33, %s17
    %p35 = scmp.ge.s32.totalorder %s34, 2
    %s36 = scalar_select %p35, 0, %s34
    %s37 = ssub.s32 %s17, %s36
    %s38 = ssub.s32 %s18, %s32
    %s39 = sor.u32 %s37, %s38
    %p40 = scmp.eq.s32.totalorder %s39, 0
    %s42 = sadd.s32 %s41, 1
    %s43 = scalar_select %p40, %s41, %s42
    %p46 = pneg %p40
    %p47 = scmp.eq.s32.totalorder %s10, 1
    %p48 = por %p46, %p47
    %p49 = scmp.ne.s32.totalorder %s41, %s44
    %p50 = scmp.eq.s32.totalorder %s10, 0
    %p51 = por %p49, %p50
    %p52 = scmp.ne.s32.totalorder %s41, %s44
    %p53 = scmp.eq.s32.totalorder %s15, 1
    %p54 = por %p52, %p53
    %p55 = scmp.ne.s32.totalorder %s44, %s45
    %p56 = scmp.eq.s32.totalorder %s15, 0
    %p57 = por %p55, %p56
    %p58 = scmp.ne.s32.totalorder %s44, %s45
    %p59 = scmp.eq.s32.totalorder %s16, 1
    %p60 = por %p58, %p59
    %p62 = scmp.ne.s32.totalorder %s45, %s61
    %p63 = scmp.eq.s32.totalorder %s16, 0
    %p64 = por %p62, %p63
    %s65 = ssub.s32 %s17, %s36
    %s66 = ssub.s32 %s19, %s28
    %s67 = sor.u32 %s65, %s66
    %p68 = scmp.eq.s32.totalorder %s67, 0
    %s70 = sadd.s32 %s69, 1
    %s71 = scalar_select %p68, %s69, %s70
    %p74 = pneg %p68
    %p75 = scmp.eq.s32.totalorder %s10, 1
    %p76 = por %p74, %p75
    %p77 = scmp.ne.s32.totalorder %s69, %s72
    %p78 = scmp.eq.s32.totalorder %s10, 0
    %p79 = por %p77, %p78
    %p80 = scmp.ne.s32.totalorder %s69, %s72
    %p81 = scmp.eq.s32.totalorder %s15, 1
    %p82 = por %p80, %p81
    %p83 = scmp.ne.s32.totalorder %s72, %s73
    %p84 = scmp.eq.s32.totalorder %s15, 0
    %p85 = por %p83, %p84
    %p86 = scmp.ne.s32.totalorder %s72, %s73
    %p87 = scmp.eq.s32.totalorder %s16, 1
    %p88 = por %p86, %p87
    %p90 = scmp.ne.s32.totalorder %s73, %s89
    %p91 = scmp.eq.s32.totalorder %s16, 0
    %p92 = por %p90, %p91
    %s93 = ssub.s32 %s17, %s36
    %s94 = ssub.s32 %s19, %s28
    %s95 = sor.u32 %s93, %s94
    %p96 = scmp.eq.s32.totalorder %s95, 0
    %s98 = sadd.s32 %s97, 1
    %s99 = scalar_select %p96, %s97, %s98
    %p102 = pneg %p96
    %p103 = scmp.eq.s32.totalorder %s10, 1
    %p104 = por %p102, %p103
    %p105 = scmp.ne.s32.totalorder %s97, %s100
    %p106 = scmp.eq.s32.totalorder %s10, 0
    %p107 = por %p105, %p106
    %p108 = scmp.ne.s32.totalorder %s97, %s100
    %p109 = scmp.eq.s32.totalorder %s15, 1
    %p110 = por %p108, %p109
    %p111 = scmp.ne.s32.totalorder %s100, %s101
    %p112 = scmp.eq.s32.totalorder %s15, 0
    %p113 = por %p111, %p112
    %p114 = scmp.ne.s32.totalorder %s100, %s101
    %p115 = scmp.eq.s32.totalorder %s16, 1
    %p116 = por %p114, %p115
    %p118 = scmp.ne.s32.totalorder %s101, %s117
    %p119 = scmp.eq.s32.totalorder %s16, 0
    %p120 = por %p118, %p119
    %s121 = ssub.s32 %s17, %s36
    %s122 = ssub.s32 %s19, %s28
    %s123 = sor.u32 %s121, %s122
    %p124 = scmp.eq.s32.totalorder %s123, 0
    %s126 = sadd.s32 %s125, 1
    %s127 = scalar_select %p124, %s125, %s126
    %p130 = pneg %p124
    %p131 = scmp.eq.s32.totalorder %s10, 1
    %p132 = por %p130, %p131
    %p133 = scmp.ne.s32.totalorder %s125, %s128
    %p134 = scmp.eq.s32.totalorder %s10, 0
    %p135 = por %p133, %p134
    %p136 = scmp.ne.s32.totalorder %s125, %s128
    %p137 = scmp.eq.s32.totalorder %s15, 1
    %p138 = por %p136, %p137
    %p139 = scmp.ne.s32.totalorder %s128, %s129
    %p140 = scmp.eq.s32.totalorder %s15, 0
    %p141 = por %p139, %p140
    %p142 = scmp.ne.s32.totalorder %s128, %s129
    %p143 = scmp.eq.s32.totalorder %s16, 1
    %p144 = por %p142, %p143
    %p146 = scmp.ne.s32.totalorder %s129, %s145
    %p147 = scmp.eq.s32.totalorder %s16, 0
    %p148 = por %p146, %p147
    %s149 = ssub.s32 %s17, %s36
    %s150 = ssub.s32 %s18, %s32
    %s151 = sor.u32 %s149, %s150
    %p152 = scmp.eq.s32.totalorder %s151, 0
    %s154 = sadd.s32 %s153, 1
    %s155 = scalar_select %p152, %s153, %s154
    %p158 = pneg %p152
    %p159 = scmp.eq.s32.totalorder %s10, 1
    %p160 = por %p158, %p159
    %p161 = scmp.ne.s32.totalorder %s153, %s156
    %p162 = scmp.eq.s32.totalorder %s10, 0
    %p163 = por %p161, %p162
    %p164 = scmp.ne.s32.totalorder %s153, %s156
    %p165 = scmp.eq.s32.totalorder %s15, 1
    %p166 = por %p164, %p165
    %p167 = scmp.ne.s32.totalorder %s156, %s157
    %p168 = scmp.eq.s32.totalorder %s15, 0
    %p169 = por %p167, %p168
    %p170 = scmp.ne.s32.totalorder %s156, %s157
    %p171 = scmp.eq.s32.totalorder %s16, 1
    %p172 = por %p170, %p171
    %p174 = scmp.ne.s32.totalorder %s157, %s173
    %p175 = scmp.eq.s32.totalorder %s16, 0
    %p176 = por %p174, %p175
    %p177 = scmp.le.s32.totalorder 1, %s10
    %p178 = scmp.lt.s32.totalorder %s10, 3
    %p179 = pnand %p177, %p178
    %p180 = pneg %p179
    // Predicated region
    $region9: #{pgen_forward.25} parent=5 // pred_check
      _
    $region10: #{pgen_forward.25} parent=5 // pred_check_branch
      %182 = sbr.rel (%p179) target = $region12
    $region11: #{pgen_forward.25} parent=5 // pred_region
      %s183 = ssub.s32 %s10, 1
    $region12: #{pgen_forward.25} parent=5 // pred_fallthru
      _
    %p184 = scmp.lt.s32.totalorder %s10, 2
    // Predicated region
    $region13: #{pgen_forward.25} parent=5 // pred_check
      %p185 = pneg %p184
    $region14: #{pgen_forward.25} parent=5 // pred_check_branch
      %187 = sbr.rel (%p185) target = $region16
    $region15: #{pgen_forward.25} parent=5 // pred_region
      // Predicated region
      $region17: #{pgen_forward.25} parent=15 // pred_check
        %p188 = pneg %p51
      $region18: #{pgen_forward.25} parent=15 // pred_check_branch
        %190 = sbr.rel (%p188) target = $region20
      $region19: #{pgen_forward.25} parent=15 // pred_region
        %p191 = scmp.lt.s32.totalorder %s17, 1
        %s192 = scalar_select %p191, %s17, 1
        %p193 = scmp.lt.s32.totalorder %s18, 0
        %s194 = scalar_select %p193, %s18, 0
        %s195 = sadd.s32 %s194, %s192
        %s196 = smul.addr %s195, 4
        %s197 = scalar_lea.vmem %s0, %s196
      $region20: #{pgen_forward.25} parent=15 // pred_fallthru
        _
      // Predicated region
      $region21: #{pgen_forward.25} parent=15 // pred_check
        %p198 = pneg %p79
      $region22: #{pgen_forward.25} parent=15 // pred_check_branch
        %200 = sbr.rel (%p198) target = $region24
      $region23: #{pgen_forward.25} parent=15 // pred_region
        %p201 = scmp.lt.s32.totalorder %s17, 1
        %s202 = scalar_select %p201, %s17, 1
        %p203 = scmp.lt.s32.totalorder %s19, 0
        %s204 = scalar_select %p203, %s19, 0
        %s205 = sadd.s32 %s204, %s202
        %s206 = smul.addr %s205, 4
        %s207 = scalar_lea.vmem %s1, %s206
      $region24: #{pgen_forward.25} parent=15 // pred_fallthru
        _
      // Predicated region
      $region25: #{pgen_forward.25} parent=15 // pred_check
        %p208 = pneg %p107
      $region26: #{pgen_forward.25} parent=15 // pred_check_branch
        %210 = sbr.rel (%p208) target = $region28
      $region27: #{pgen_forward.25} parent=15 // pred_region
        %p211 = scmp.lt.s32.totalorder %s17, 1
        %s212 = scalar_select %p211, %s17, 1
        %p213 = scmp.lt.s32.totalorder %s19, 0
        %s214 = scalar_select %p213, %s19, 0
        %s215 = sadd.s32 %s214, %s212
        %s216 = smul.addr %s215, 4
        %s217 = scalar_lea.vmem %s2, %s216
      $region28: #{pgen_forward.25} parent=15 // pred_fallthru
        _
      // Predicated region
      $region29: #{pgen_forward.25} parent=15 // pred_check
        %p218 = pneg %p135
      $region30: #{pgen_forward.25} parent=15 // pred_check_branch
        %220 = sbr.rel (%p218) target = $region32
      $region31: #{pgen_forward.25} parent=15 // pred_region
        %p221 = scmp.lt.s32.totalorder %s17, 1
        %s222 = scalar_select %p221, %s17, 1
        %p223 = scmp.lt.s32.totalorder %s19, 0
        %s224 = scalar_select %p223, %s19, 0
        %s225 = sadd.s32 %s224, %s222
        %s226 = scalar_lea.vmem %s3, %s225
      $region32: #{pgen_forward.25} parent=15 // pred_fallthru
        _
    $region16: #{pgen_forward.25} parent=5 // pred_fallthru
      _
    %p227 = scmp.le.s32.totalorder 1, %s10
    %p228 = scmp.lt.s32.totalorder %s10, 3
    %p229 = pnand %p227, %p228
    %p230 = pneg %p229
    // Predicated region
    $region33: #{pgen_forward.25} parent=5 // pred_check
      _
    $region34: #{pgen_forward.25} parent=5 // pred_check_branch
      %232 = sbr.rel (%p229) target = $region36
    $region35: #{pgen_forward.25} parent=5 // pred_region
      %s233 = ssub.s32 %s10, 1
      %p234 = scmp.lt.s32.totalorder %s20, 1
      %s235 = scalar_select %p234, %s20, 1
      %p236 = scmp.lt.s32.totalorder %s21, 0
      %s237 = scalar_select %p236, %s21, 0
      %s238 = sadd.s32 %s237, %s235
      %s239 = smul.addr %s238, 4
      %s240 = scalar_lea.vmem %s0, %s239
      %p241 = pneg %p57
      %p242 = pneg %p54
      %p243 = scmp.lt.s32.totalorder %s20, 1
      %s244 = scalar_select %p243, %s20, 1
      %p245 = scmp.lt.s32.totalorder %s22, 0
      %s246 = scalar_select %p245, %s22, 0
      %s247 = sadd.s32 %s246, %s244
      %s248 = smul.addr %s247, 4
      %s249 = scalar_lea.vmem %s1, %s248
      %p250 = pneg %p85
      %p251 = pneg %p82
      %p252 = scmp.lt.s32.totalorder %s20, 1
      %s253 = scalar_select %p252, %s20, 1
      %p254 = scmp.lt.s32.totalorder %s22, 0
      %s255 = scalar_select %p254, %s22, 0
      %s256 = sadd.s32 %s255, %s253
      %s257 = smul.addr %s256, 4
      %s258 = scalar_lea.vmem %s2, %s257
      %p259 = pneg %p113
      %p260 = pneg %p110
      %p261 = scmp.lt.s32.totalorder %s20, 1
      %s262 = scalar_select %p261, %s20, 1
      %p263 = scmp.lt.s32.totalorder %s22, 0
      %s264 = scalar_select %p263, %s22, 0
      %s265 = sadd.s32 %s264, %s262
      %s266 = scalar_lea.vmem %s3, %s265
      %p267 = pneg %p141
      %p268 = pneg %p138
      %p269 = pneg %p169
      %p270 = pneg %p166
      %p271 = scmp.lt.s32.totalorder %s20, 1
      %s272 = scalar_select %p271, %s20, 1
      %p273 = scmp.lt.s32.totalorder %s21, 0
      %s274 = scalar_select %p273, %s21, 0
      %s275 = sadd.s32 %s274, %s272
      %s276 = smul.addr %s275, 4
      %s277 = scalar_lea.vmem %s4, %s276
      %p278 = scmp.lt.s32.totalorder %s20, 1
      %s279 = scalar_select %p278, %s20, 1
      %p280 = scmp.lt.s32.totalorder %s21, 0
      %s281 = scalar_select %p280, %s21, 0
      %s282 = sadd.s32 %s281, %s279
      %s283 = smul.addr %s282, 4
      %s284 = scalar_lea.vmem %s0, %s283
      %p285 = scmp.lt.s32.totalorder %s20, 1
      %s286 = scalar_select %p285, %s20, 1
      %p287 = scmp.lt.s32.totalorder %s22, 0
      %s288 = scalar_select %p287, %s22, 0
      %s289 = sadd.s32 %s288, %s286
      %s290 = smul.addr %s289, 4
      %s291 = scalar_lea.vmem %s1, %s290
      %p292 = scmp.lt.s32.totalorder %s20, 1
      %s293 = scalar_select %p292, %s20, 1
      %p294 = scmp.lt.s32.totalorder %s22, 0
      %s295 = scalar_select %p294, %s22, 0
      %s296 = sadd.s32 %s295, %s293
      %s297 = smul.addr %s296, 4
      %s298 = scalar_lea.vmem %s2, %s297
      %p299 = scmp.lt.s32.totalorder %s20, 1
      %s300 = scalar_select %p299, %s20, 1
      %p301 = scmp.lt.s32.totalorder %s22, 0
      %s302 = scalar_select %p301, %s22, 0
      %s303 = sadd.s32 %s302, %s300
      %s304 = scalar_lea.vmem %s3, %s303
      %p305 = scmp.lt.s32.totalorder %s20, 1
      %s306 = scalar_select %p305, %s20, 1
      %p307 = scmp.lt.s32.totalorder %s21, 0
      %s308 = scalar_select %p307, %s21, 0
      %s309 = sadd.s32 %s308, %s306
      %s310 = smul.addr %s309, 4
      %s311 = scalar_lea.vmem %s4, %s310
      %p313 = scmp.eq.s32.totalorder %s22, 0
      // Predicated region
      $region37: #{pgen_forward.25} parent=35 // pred_check
        %p314 = pneg %p313
      $region38: #{pgen_forward.25} parent=35 // pred_check_branch
        %316 = sbr.rel (%p314) target = $region40
      $region39: #{pgen_forward.25} parent=35 // pred_region
        %vm317 = vcmask 7168
        %318 = vst.msk [vmem:[#allocation2] sm:$0xff] %vm317, -3e+38
        %319 = vst.msk [vmem:[#allocation2 + $0x8] sm:$0xff] %vm317, -3e+38
        %320 = vst.msk [vmem:[#allocation3] sm:$0xff] %vm317, 0.0
        %321 = vst.msk [vmem:[#allocation3 + $0x8] sm:$0xff] %vm317, 0.0
        %vm322 = vcmask 130048
        %323 = vst.msk [vmem:[#allocation4] sm:$0xff] %vm322, 0.0
        %324 = vst.msk [vmem:[#allocation4 + $0x8] sm:$0xff] %vm322, 0.0
      $region40: #{pgen_forward.25} parent=35 // pred_fallthru
        _
      %v325 = vld [vmem:[%s284] sm:$0xf]
      %v326 = vld [vmem:[%s291] sm:$0xf]
      %v327 = vld [vmem:[%s298] sm:$0xf]
      %v328 = vld [vmem:[%s304] sm:$0x1]
      %s329 = smul.u32 %s21, 8
      %v330 = vlaneseq
      %v331 = vshrl.u32 %v330, 7
      %v332 = vstv %s329
      %v333 = vadd.s32 %v332, %v331
      %s334 = smul.u32 %s22, 8
      %v335 = vlaneseq
      %v336 = vand.u32 %v335, 127
      %v337 = vstv %s334
      %v338 = vadd.s32 %v337, %v336
      %vm339 = vcmp.gt.s32.totalorder %v338, %v333
      %v340 = vsel %vm339, -1e+30, 0.0
      %v342 = vlaneseq
      %v343 = vshrl.u32 %v342, 7
      %v344 = vsub.s32 0, %v343
      %v345 = vrot.slane %v328, %v344
      %v347 = vadd.f32 %v345, %v340
      %vm348 = vcmask 130048
      %v350 = vsel %vm348, %v325, 0
      %v353 = vsel %vm348, %v326, 0
      %355 = vmatprep.subr.bf16.mxu0 0
      %356 = vmatpush1.bf16.xpose.msra.mxu0 %v353
      %357 = vmatprep.subr.bf16.mxu0 0
      %358 = vmatpush1.bf16.xpose.msra.mxu0 0
      %359 = vmatprep.subr.bf16.mxu0 0
      %360 = vmatpush1.bf16.xpose.msra.mxu0 0
      %361 = vmatprep.subr.bf16.mxu0 0
      %362 = vmatpush1.bf16.xpose.msra.mxu0 0
      %363 = vmatprep.subr.bf16.mxu0 0
      %364 = vmatpush1.bf16.xpose.msra.mxu0 0
      %365 = vmatprep.subr.bf16.mxu0 0
      %366 = vmatpush1.bf16.xpose.msra.mxu0 0
      %367 = vmatprep.subr.bf16.mxu0 0
      %368 = vmatpush1.bf16.xpose.msra.mxu0 0
      %369 = vmatprep.subr.bf16.mxu0 0
      %370 = vmatpush1.bf16.xpose.msra.mxu0 0
      %371 = vmatprep.subr.bf16.mxu0 0
      %372 = vmatpush1.bf16.xpose.msra.mxu0 0
      %373 = vmatprep.subr.bf16.mxu0 0
      %374 = vmatpush1.bf16.xpose.msra.mxu0 0
      %375 = vmatprep.subr.bf16.mxu0 0
      %376 = vmatpush1.bf16.xpose.msra.mxu0 0
      %377 = vmatprep.subr.bf16.mxu0 0
      %378 = vmatpush1.bf16.xpose.msra.mxu0 0
      %379 = vmatprep.subr.bf16.mxu0 0
      %380 = vmatpush1.bf16.xpose.msra.mxu0 0
      %381 = vmatprep.subr.bf16.mxu0 0
      %382 = vmatpush1.bf16.xpose.msra.mxu0 0
      %383 = vmatprep.subr.bf16.mxu0 0
      %384 = vmatpush1.bf16.xpose.msra.mxu0 0
      %385 = vmatprep.subr.bf16.mxu0 0
      %386 = vmatpush1.bf16.xpose.msra.mxu0 0
      %387 = vmatprep.mubr.bf16.mxu0 0
      %388 = vmatmul.mubr.bf16.gmra.mrb[0].mxu0 %v350
      %v389 = vpop.f32.mrb[0].mxu0
      %v390 = vadd.f32 %v347, %v389
      %v391 = vpop.f32.mrb[0].mxu0
      %v392 = vpop.f32.mrb[0].mxu0
      %v393 = vpop.f32.mrb[0].mxu0
      %394 = vdwg.mxu0
      %v395 = vld [vmem:[#allocation2] sm:$0xff]
      %vm396 = vcmask 64512
      %v397 = vsel %vm396, %v390, -inf
      %398 = vmax.xlane.f32.xlu0 %v397
      %v399 = vpop.xlane.xlu0 %398
      %v400 = vmax.f32 %v395, %v399
      %v401 = vsub.f32 %v395, %v400
      %v402 = vmul.f32 %v401, 1.442695
      %v403 = vpow.pop %v402
      %405 = vset.pattern.permute.xlu0 0
      %406 = vperm.xlu0 %405, %v400
      %v407 = vpop.permute.xlu0 %406
      %v409 = vsub.f32 %v390, %v407
      %v410 = vmul.f32 %v409, 1.442695
      %v411 = vpow.pop %v410
      %v412 = vld [vmem:[#allocation3] sm:$0xff]
      %v413 = vmul.f32 %v403, %v412
      %v414 = vsel %vm396, %v411, 0.0
      %415 = vadd.xlane.f32.xlu0 %v414
      %v416 = vpop.xlane.xlu0 %415
      %v417 = vadd.f32 %v413, %v416
      %vm418 = vcmask 7168
      %419 = vst.msk [vmem:[#allocation3] sm:$0xff] %vm418, %v417
      %v420 = vld [vmem:[#allocation4] sm:$0xff]
      %422 = vset.pattern.permute.xlu0 0
      %423 = vperm.xlu0 %422, %v403
      %v424 = vpop.permute.xlu0 %423
      %v426 = vmul.f32 %v424, %v420
      %v427 = vpack.c.bf16 %v411, %v411
      %v429 = vsel %vm396, %v427, 0
      %vm431 = vcmask 1043456
      %v433 = vsel %vm431, %v327, 0
      %435 = vmatprep.subr.bf16.mxu0 0
      %436 = vmatpush1.bf16.msra.mxu0 %v433
      %437 = vmatprep.subr.bf16.mxu0 0
      %438 = vmatpush1.bf16.msra.mxu0 0
      %439 = vmatprep.subr.bf16.mxu0 0
      %440 = vmatpush1.bf16.msra.mxu0 0
      %441 = vmatprep.subr.bf16.mxu0 0
      %442 = vmatpush1.bf16.msra.mxu0 0
      %443 = vmatprep.subr.bf16.mxu0 0
      %444 = vmatpush1.bf16.msra.mxu0 0
      %445 = vmatprep.subr.bf16.mxu0 0
      %446 = vmatpush1.bf16.msra.mxu0 0
      %447 = vmatprep.subr.bf16.mxu0 0
      %448 = vmatpush1.bf16.msra.mxu0 0
      %449 = vmatprep.subr.bf16.mxu0 0
      %450 = vmatpush1.bf16.msra.mxu0 0
      %451 = vmatprep.subr.bf16.mxu0 0
      %452 = vmatpush1.bf16.msra.mxu0 0
      %453 = vmatprep.subr.bf16.mxu0 0
      %454 = vmatpush1.bf16.msra.mxu0 0
      %455 = vmatprep.subr.bf16.mxu0 0
      %456 = vmatpush1.bf16.msra.mxu0 0
      %457 = vmatprep.subr.bf16.mxu0 0
      %458 = vmatpush1.bf16.msra.mxu0 0
      %459 = vmatprep.subr.bf16.mxu0 0
      %460 = vmatpush1.bf16.msra.mxu0 0
      %461 = vmatprep.subr.bf16.mxu0 0
      %462 = vmatpush1.bf16.msra.mxu0 0
      %463 = vmatprep.subr.bf16.mxu0 0
      %464 = vmatpush1.bf16.msra.mxu0 0
      %465 = vmatprep.subr.bf16.mxu0 0
      %466 = vmatpush1.bf16.msra.mxu0 0
      %467 = vmatprep.mubr.bf16.mxu0 0
      %468 = vmatmul.mubr.bf16.gmra.mrb[0].mxu0 %v429
      %v469 = vpop.f32.mrb[0].mxu0
      %v470 = vadd.f32 0.0, %v469
      %v471 = vpop.f32.mrb[0].mxu0
      %v472 = vpop.f32.mrb[0].mxu0
      %v473 = vpop.f32.mrb[0].mxu0
      %474 = vdwg.mxu0
      %v475 = vadd.f32 %v426, %v470
      %476 = vst.msk [vmem:[#allocation4] sm:$0xff] %vm348, %v475
      %477 = vst.msk [vmem:[#allocation2] sm:$0xff] %vm418, %v400
      %v479 = vunpack.c.l.b16 %v325
      %v480 = vpack.c.b16 %v479, %v479
      %481 = vrot.lane.b32.xlu0 %v480, 112
      %v482 = vpop.permute.xlu0 %481
      %v484 = vunpack.c.l.b16 %v326
      %v485 = vpack.c.b16 %v484, %v484
      %486 = vrot.lane.b32.xlu0 %v485, 112
      %v487 = vpop.permute.xlu0 %486
      %v489 = vsel %vm348, %v482, 0
      %v492 = vsel %vm348, %v487, 0
      %494 = vmatprep.subr.bf16.mxu0 0
      %495 = vmatpush1.bf16.xpose.msra.mxu0 %v492
      %496 = vmatprep.subr.bf16.mxu0 0
      %497 = vmatpush1.bf16.xpose.msra.mxu0 0
      %498 = vmatprep.subr.bf16.mxu0 0
      %499 = vmatpush1.bf16.xpose.msra.mxu0 0
      %500 = vmatprep.subr.bf16.mxu0 0
      %501 = vmatpush1.bf16.xpose.msra.mxu0 0
      %502 = vmatprep.subr.bf16.mxu0 0
      %503 = vmatpush1.bf16.xpose.msra.mxu0 0
      %504 = vmatprep.subr.bf16.mxu0 0
      %505 = vmatpush1.bf16.xpose.msra.mxu0 0
      %506 = vmatprep.subr.bf16.mxu0 0
      %507 = vmatpush1.bf16.xpose.msra.mxu0 0
      %508 = vmatprep.subr.bf16.mxu0 0
      %509 = vmatpush1.bf16.xpose.msra.mxu0 0
      %510 = vmatprep.subr.bf16.mxu0 0
      %511 = vmatpush1.bf16.xpose.msra.mxu0 0
      %512 = vmatprep.subr.bf16.mxu0 0
      %513 = vmatpush1.bf16.xpose.msra.mxu0 0
      %514 = vmatprep.subr.bf16.mxu0 0
      %515 = vmatpush1.bf16.xpose.msra.mxu0 0
      %516 = vmatprep.subr.bf16.mxu0 0
      %517 = vmatpush1.bf16.xpose.msra.mxu0 0
      %518 = vmatprep.subr.bf16.mxu0 0
      %519 = vmatpush1.bf16.xpose.msra.mxu0 0
      %520 = vmatprep.subr.bf16.mxu0 0
      %521 = vmatpush1.bf16.xpose.msra.mxu0 0
      %522 = vmatprep.subr.bf16.mxu0 0
      %523 = vmatpush1.bf16.xpose.msra.mxu0 0
      %524 = vmatprep.subr.bf16.mxu0 0
      %525 = vmatpush1.bf16.xpose.msra.mxu0 0
      %526 = vmatprep.mubr.bf16.mxu0 0
      %527 = vmatmul.mubr.bf16.gmra.mrb[0].mxu0 %v489
      %v528 = vpop.f32.mrb[0].mxu0
      %v529 = vadd.f32 %v347, %v528
      %v530 = vpop.f32.mrb[0].mxu0
      %v531 = vpop.f32.mrb[0].mxu0
      %v532 = vpop.f32.mrb[0].mxu0
      %533 = vdwg.mxu0
      %s534 = scalar_lea.vmem [#allocation2], 8
      %v535 = vld [vmem:[%s534] sm:$0xff]
      %v536 = vsel %vm396, %v529, -inf
      %537 = vmax.xlane.f32.xlu0 %v536
      %v538 = vpop.xlane.xlu0 %537
      %v539 = vmax.f32 %v535, %v538
      %v540 = vsub.f32 %v535, %v539
      %v541 = vmul.f32 %v540, 1.442695
      %v542 = vpow.pop %v541
      %544 = vset.pattern.permute.xlu0 0
      %545 = vperm.xlu0 %544, %v539
      %v546 = vpop.permute.xlu0 %545
      %v548 = vsub.f32 %v529, %v546
      %v549 = vmul.f32 %v548, 1.442695
      %v550 = vpow.pop %v549
      %s551 = scalar_lea.vmem [#allocation3], 8
      %v552 = vld [vmem:[%s551] sm:$0xff]
      %v553 = vmul.f32 %v542, %v552
      %v554 = vsel %vm396, %v550, 0.0
      %555 = vadd.xlane.f32.xlu0 %v554
      %v556 = vpop.xlane.xlu0 %555
      %v557 = vadd.f32 %v553, %v556
      %558 = vst.msk [vmem:[%s551] sm:$0xff] %vm418, %v557
      %s559 = scalar_lea.vmem [#allocation4], 8
      %v560 = vld [vmem:[%s559] sm:$0xff]
      %562 = vset.pattern.permute.xlu0 0
      %563 = vperm.xlu0 %562, %v542
      %v564 = vpop.permute.xlu0 %563
      %v566 = vmul.f32 %v564, %v560
      %v567 = vpack.c.bf16 %v550, %v550
      %v569 = vunpack.c.l.b16 %v327
      %v570 = vpack.c.b16 %v569, %v569
      %571 = vrot.lane.b32.xlu0 %v570, 112
      %v572 = vpop.permute.xlu0 %571
      %v574 = vsel %vm396, %v567, 0
      %v577 = vsel %vm431, %v572, 0
      %579 = vmatprep.subr.bf16.mxu0 0
      %580 = vmatpush1.bf16.msra.mxu0 %v577
      %581 = vmatprep.subr.bf16.mxu0 0
      %582 = vmatpush1.bf16.msra.mxu0 0
      %583 = vmatprep.subr.bf16.mxu0 0
      %584 = vmatpush1.bf16.msra.mxu0 0
      %585 = vmatprep.subr.bf16.mxu0 0
      %586 = vmatpush1.bf16.msra.mxu0 0
      %587 = vmatprep.subr.bf16.mxu0 0
      %588 = vmatpush1.bf16.msra.mxu0 0
      %589 = vmatprep.subr.bf16.mxu0 0
      %590 = vmatpush1.bf16.msra.mxu0 0
      %591 = vmatprep.subr.bf16.mxu0 0
      %592 = vmatpush1.bf16.msra.mxu0 0
      %593 = vmatprep.subr.bf16.mxu0 0
      %594 = vmatpush1.bf16.msra.mxu0 0
      %595 = vmatprep.subr.bf16.mxu0 0
      %596 = vmatpush1.bf16.msra.mxu0 0
      %597 = vmatprep.subr.bf16.mxu0 0
      %598 = vmatpush1.bf16.msra.mxu0 0
      %599 = vmatprep.subr.bf16.mxu0 0
      %600 = vmatpush1.bf16.msra.mxu0 0
      %601 = vmatprep.subr.bf16.mxu0 0
      %602 = vmatpush1.bf16.msra.mxu0 0
      %603 = vmatprep.subr.bf16.mxu0 0
      %604 = vmatpush1.bf16.msra.mxu0 0
      %605 = vmatprep.subr.bf16.mxu0 0
      %606 = vmatpush1.bf16.msra.mxu0 0
      %607 = vmatprep.subr.bf16.mxu0 0
      %608 = vmatpush1.bf16.msra.mxu0 0
      %609 = vmatprep.subr.bf16.mxu0 0
      %610 = vmatpush1.bf16.msra.mxu0 0
      %611 = vmatprep.mubr.bf16.mxu0 0
      %612 = vmatmul.mubr.bf16.gmra.mrb[0].mxu0 %v574
      %v613 = vpop.f32.mrb[0].mxu0
      %v614 = vadd.f32 0.0, %v613
      %v615 = vpop.f32.mrb[0].mxu0
      %v616 = vpop.f32.mrb[0].mxu0
      %v617 = vpop.f32.mrb[0].mxu0
      %618 = vdwg.mxu0
      %v619 = vadd.f32 %v566, %v614
      %620 = vst.msk [vmem:[%s559] sm:$0xff] %vm348, %v619
      %621 = vst.msk [vmem:[%s534] sm:$0xff] %vm418, %v539
      // Predicated region
      $region41: #{pgen_forward.25} parent=35 // pred_check
        %p622 = pneg %p313
      $region42: #{pgen_forward.25} parent=35 // pred_check_branch
        %624 = sbr.rel (%p622) target = $region44
      $region43: #{pgen_forward.25} parent=35 // pred_region
        %v625 = vld [vmem:[#allocation4] sm:$0xff]
        %v626 = vld [vmem:[#allocation3] sm:$0xff]
        %v627 = vrcp.pop %v626
        %629 = vset.pattern.permute.xlu0 0
        %630 = vperm.xlu0 %629, %v627
        %v631 = vpop.permute.xlu0 %630
        %v633 = vmul.f32 %v625, %v631
        %v634 = vld [vmem:[%s559] sm:$0xff]
        %v635 = vld [vmem:[%s551] sm:$0xff]
        %v636 = vrcp.pop %v635
        %638 = vset.pattern.permute.xlu0 0
        %639 = vperm.xlu0 %638, %v636
        %v640 = vpop.permute.xlu0 %639
        %v642 = vmul.f32 %v634, %v640
        %644 = vrot.lane.b32.xlu0 %v642, 16
        %v645 = vpop.permute.xlu0 %644
        %v647 = vsel %vm348, %v633, %v645
        %v648 = vpack.c.bf16 %v647, %v647
        %vm649 = vcmask 257024
        %650 = vst.msk [vmem:[%s311] sm:$0xf] %vm649, %v648
      $region44: #{pgen_forward.25} parent=35 // pred_fallthru
        _
      %p651 = scmp.lt.s32.totalorder %s20, 1
      %s652 = scalar_select %p651, %s20, 1
      %p653 = scmp.lt.s32.totalorder %s21, 0
      %s654 = scalar_select %p653, %s21, 0
      %s655 = sadd.s32 %s654, %s652
      %s656 = smul.addr %s655, 4
      %s657 = scalar_lea.vmem %s4, %s656
      // Predicated region
      $region45: #{pgen_forward.25} parent=35 // pred_check
        %p658 = pneg %p166
      $region46: #{pgen_forward.25} parent=35 // pred_check_branch
        %660 = sbr.rel (%p658) target = $region48
      $region47: #{pgen_forward.25} parent=35 // pred_region
        _
      $region48: #{pgen_forward.25} parent=35 // pred_fallthru
        _
    $region36: #{pgen_forward.25} parent=5 // pred_fallthru
      _
    %p661 = scmp.le.s32.totalorder 2, %s10
    // Predicated region
    $region49: #{pgen_forward.25} parent=5 // pred_check
      %p662 = pneg %p661
    $region50: #{pgen_forward.25} parent=5 // pred_check_branch
      %664 = sbr.rel (%p662) target = $region52
    $region51: #{pgen_forward.25} parent=5 // pred_region
      %s665 = ssub.s32 %s10, 2
      // Predicated region
      $region53: #{pgen_forward.25} parent=51 // pred_check
        %p666 = pneg %p172
      $region54: #{pgen_forward.25} parent=51 // pred_check_branch
        %668 = sbr.rel (%p666) target = $region56
      $region55: #{pgen_forward.25} parent=51 // pred_region
        %p669 = scmp.lt.s32.totalorder %s23, 1
        %s670 = scalar_select %p669, %s23, 1
        %p671 = scmp.lt.s32.totalorder %s24, 0
        %s672 = scalar_select %p671, %s24, 0
        %s673 = sadd.s32 %s672, %s670
        %s674 = smul.addr %s673, 4
        %s675 = scalar_lea.vmem %s4, %s674
      $region56: #{pgen_forward.25} parent=51 // pred_fallthru
        _
    $region52: #{pgen_forward.25} parent=5 // pred_fallthru
      _
  $region6: #{pgen_forward.25} parent=0 // loop_footer
    %s14 = sadd.s32 1, %s10
  $region7: #{pgen_forward.25} parent=0 // loop_footer_branch
    %9 = sbr.rel target = $region3
  $region8: #{pgen_forward.25} parent=0 // loop_exit
    _

// kernel: pgen_forward.28
$region0: #{pgen_forward.28}
  #allocation0 [shape = 'u32[]', space=smem, size = 0x4, offset = 0x4, fixed_abs, tag = 'smem constant byte address 0x4 - core index']
  #allocation1 [shape = 'u32[144,128]{1,0:T(1,128)}', space=vmem, size = 0x12000, scoped, tag = 'internal scratch']
  #allocation2 [shape = 'f32[16,32]{1,0:T(8,128)}', space=vmem, size = 0x2000, scoped, tag = 'scratch operand']
  %s0 = inlined_call_operand.vmem [shape: bf16[16,32], index: 0, kind: input, shape index: {}]
  %s1 = inlined_call_operand.vmem [shape: bf16[32,32], index: 1, kind: input, shape index: {}]
  %s2 = inlined_call_operand.vmem [shape: f32[1,32], index: 2, kind: input, shape index: {}]
  %s3 = inlined_call_operand.vmem [shape: bf16[16,32], index: 3, kind: output, shape index: {}]
  %s4 = sld [smem:[#allocation0]]
  $region30: #{pgen_forward.28} parent=0
    _
  %s6 = ssub.s32 1, %s4
  %s7 = scalar_select 0, %s6, %s4
  // Predicated region
  $region2: #{pgen_forward.28} parent=0 // pred_check
    _
  $region3: #{pgen_forward.28} parent=0 // pred_check_branch
    %9 = sbr.rel (0) target = $region5
  $region4: #{pgen_forward.28} parent=0 // pred_region
    _
  $region5: #{pgen_forward.28} parent=0 // pred_fallthru
    _
  // Predicated region
  $region6: #{pgen_forward.28} parent=0 // pred_check
    _
  $region7: #{pgen_forward.28} parent=0 // pred_check_branch
    %11 = sbr.rel (0) target = $region9
  $region8: #{pgen_forward.28} parent=0 // pred_region
    _
  $region9: #{pgen_forward.28} parent=0 // pred_fallthru
    _
  // Predicated region
  $region10: #{pgen_forward.28} parent=0 // pred_check
    _
  $region11: #{pgen_forward.28} parent=0 // pred_check_branch
    %13 = sbr.rel (0) target = $region13
  $region12: #{pgen_forward.28} parent=0 // pred_region
    _
  $region13: #{pgen_forward.28} parent=0 // pred_fallthru
    _
  %p15 = scmp.eq.s32.totalorder 0, 0
  // Predicated region
  $region14: #{pgen_forward.28} parent=0 // pred_check
    %p16 = pneg %p15
  $region15: #{pgen_forward.28} parent=0 // pred_check_branch
    %18 = sbr.rel (%p16) target = $region17
  $region16: #{pgen_forward.28} parent=0 // pred_region
    %vm19 = vcmask 261120
    %20 = vst.msk [vmem:[#allocation2] sm:$0xff] %vm19, 0.0
    %21 = vst.msk [vmem:[#allocation2 + $0x8] sm:$0xff] %vm19, 0.0
  $region17: #{pgen_forward.28} parent=0 // pred_fallthru
    _
  %v22 = vld [vmem:[%s0] sm:$0xf]
  %v23 = vld [vmem:[%s0 + $0x4] sm:$0xf]
  %v24 = vld [vmem:[#allocation2] sm:$0xff]
  %v25 = vld [vmem:[#allocation2 + $0x8] sm:$0xff]
  %v26 = vld [vmem:[%s1] sm:$0xf]
  %v27 = vld [vmem:[%s1 + $0x4] sm:$0xf]
  %v28 = vld [vmem:[%s1 + $0x8] sm:$0xf]
  %v29 = vld [vmem:[%s1 + $0xc] sm:$0xf]
  %v32 = vunpack.c.l.b16 %v22
  %v33 = vunpack.c.l.b16 %v23
  %v34 = vpack.c.b16 %v33, %v32
  %v39 = vunpack.c.l.b16 %v26
  %v40 = vunpack.c.l.b16 %v27
  %v41 = vunpack.c.l.b16 %v28
  %v42 = vunpack.c.l.b16 %v29
  %v43 = vpack.c.b16 %v40, %v39
  %v44 = vpack.c.b16 %v42, %v41
  %vm47 = vcmask 261120
  %v49 = vsel %vm47, %v34, 0
  %51 = vmatprep.subr.bf16.mxu0 0
  %52 = vmatpush1.bf16.msra.mxu0 %v43
  %53 = vmatprep.subr.bf16.mxu0 0
  %54 = vmatpush1.bf16.msra.mxu0 %v44
  %55 = vmatprep.subr.bf16.mxu0 0
  %56 = vmatpush1.bf16.msra.mxu0 0
  %57 = vmatprep.subr.bf16.mxu0 0
  %58 = vmatpush1.bf16.msra.mxu0 0
  %59 = vmatprep.subr.bf16.mxu0 0
  %60 = vmatpush1.bf16.msra.mxu0 0
  %61 = vmatprep.subr.bf16.mxu0 0
  %62 = vmatpush1.bf16.msra.mxu0 0
  %63 = vmatprep.subr.bf16.mxu0 0
  %64 = vmatpush1.bf16.msra.mxu0 0
  %65 = vmatprep.subr.bf16.mxu0 0
  %66 = vmatpush1.bf16.msra.mxu0 0
  %67 = vmatprep.subr.bf16.mxu0 0
  %68 = vmatpush1.bf16.msra.mxu0 0
  %69 = vmatprep.subr.bf16.mxu0 0
  %70 = vmatpush1.bf16.msra.mxu0 0
  %71 = vmatprep.subr.bf16.mxu0 0
  %72 = vmatpush1.bf16.msra.mxu0 0
  %73 = vmatprep.subr.bf16.mxu0 0
  %74 = vmatpush1.bf16.msra.mxu0 0
  %75 = vmatprep.subr.bf16.mxu0 0
  %76 = vmatpush1.bf16.msra.mxu0 0
  %77 = vmatprep.subr.bf16.mxu0 0
  %78 = vmatpush1.bf16.msra.mxu0 0
  %79 = vmatprep.subr.bf16.mxu0 0
  %80 = vmatpush1.bf16.msra.mxu0 0
  %81 = vmatprep.subr.bf16.mxu0 0
  %82 = vmatpush1.bf16.msra.mxu0 0
  %83 = vmatprep.mubr.bf16.mxu0 0
  %84 = vmatmul.mubr.bf16.gmra.mrb[0].mxu0 %v49
  %v85 = vpop.f32.mrb[0].mxu0
  %v86 = vadd.f32 0.0, %v85
  %v87 = vpop.f32.mrb[0].mxu0
  %v88 = vpop.f32.mrb[0].mxu0
  %v89 = vadd.f32 0.0, %v88
  %v90 = vpop.f32.mrb[0].mxu0
  %91 = vdwg.mxu0
  %v92 = vadd.f32 %v24, %v86
  %v93 = vadd.f32 %v25, %v89
  %94 = vst.msk [vmem:[#allocation2] sm:$0xff] %vm47, %v92
  %95 = vst.msk [vmem:[#allocation2 + $0x8] sm:$0xff] %vm47, %v93
  // Predicated region
  $region18: #{pgen_forward.28} parent=0 // pred_check
    %p96 = pneg %p15
  $region19: #{pgen_forward.28} parent=0 // pred_check_branch
    %98 = sbr.rel (%p96) target = $region21
  $region20: #{pgen_forward.28} parent=0 // pred_region
    %v99 = vld [vmem:[#allocation2] sm:$0xff]
    %v100 = vld [vmem:[#allocation2 + $0x8] sm:$0xff]
    %v101 = vld [vmem:[%s2] sm:$0x1]
    %v103 = vlaneseq
    %v104 = vshrl.u32 %v103, 7
    %v105 = vsub.s32 0, %v104
    %v106 = vrot.slane %v101, %v105
    %v108 = vadd.f32 %v99, %v106
    %v109 = vadd.f32 %v100, %v106
    %v110 = vpack.c.bf16 %v109, %v108
    %v112 = vunpack.c.l.b16 %v110
    %v113 = vunpack.c.h.b16 %v110
    %v114 = vpack.c.b16 %v112, %v112
    %v115 = vpack.c.b16 %v113, %v113
    %vm118 = vcmask 257024
    %119 = vst.msk [vmem:[%s3] sm:$0xf] %vm118, %v114
    %120 = vst.msk [vmem:[%s3 + $0x4] sm:$0xf] %vm118, %v115
  $region21: #{pgen_forward.28} parent=0 // pred_fallthru
    _
  // Predicated region
  $region22: #{pgen_forward.28} parent=0 // pred_check
    _
  $region23: #{pgen_forward.28} parent=0 // pred_check_branch
    %122 = sbr.rel (0) target = $region25
  $region24: #{pgen_forward.28} parent=0 // pred_region
    _
  $region25: #{pgen_forward.28} parent=0 // pred_fallthru
    _
  // Predicated region
  $region26: #{pgen_forward.28} parent=0 // pred_check
    _
  $region27: #{pgen_forward.28} parent=0 // pred_check_branch
    %124 = sbr.rel (0) target = $region29
  $region28: #{pgen_forward.28} parent=0 // pred_region
    _
  $region29: #{pgen_forward.28} parent=0 // pred_fallthru
    _

// kernel: pgen_forward.29
$region0: #{pgen_forward.29}
  #allocation0 [shape = 'u32[]', space=smem, size = 0x4, offset = 0x4, fixed_abs, tag = 'smem constant byte address 0x4 - core index']
  #allocation1 [shape = 'u32[144,128]{1,0:T(1,128)}', space=vmem, size = 0x12000, scoped, tag = 'internal scratch']
  #allocation2 [shape = 'f32[16,32]{1,0:T(8,128)}', space=vmem, size = 0x2000, scoped, tag = 'scratch operand']
  #allocation3 [shape = 'f32[16,32]{1,0:T(8,128)}', space=vmem, size = 0x2000, scoped, tag = 'scratch operand']
  %s0 = inlined_call_operand.vmem [shape: bf16[16,32], index: 0, kind: input, shape index: {}]
  %s1 = inlined_call_operand.vmem [shape: bf16[32,32], index: 1, kind: input, shape index: {}]
  %s2 = inlined_call_operand.vmem [shape: bf16[32,32], index: 2, kind: input, shape index: {}]
  %s3 = inlined_call_operand.vmem [shape: f32[1,32], index: 3, kind: input, shape index: {}]
  %s4 = inlined_call_operand.vmem [shape: f32[1,32], index: 4, kind: input, shape index: {}]
  %s5 = inlined_call_operand.vmem [shape: bf16[16,32], index: 5, kind: output, shape index: {0}]
  %s6 = inlined_call_operand.vmem [shape: bf16[16,32], index: 6, kind: output, shape index: {1}]
  %7 = xla_tuple %s5, %s6
  %s8 = sld [smem:[#allocation0]]
  $region46: #{pgen_forward.29} parent=0
    _
  %s10 = ssub.s32 1, %s8
  %s11 = scalar_select 0, %s10, %s8
  // Predicated region
  $region2: #{pgen_forward.29} parent=0 // pred_check
    _
  $region3: #{pgen_forward.29} parent=0 // pred_check_branch
    %13 = sbr.rel (0) target = $region5
  $region4: #{pgen_forward.29} parent=0 // pred_region
    _
  $region5: #{pgen_forward.29} parent=0 // pred_fallthru
    _
  // Predicated region
  $region6: #{pgen_forward.29} parent=0 // pred_check
    _
  $region7: #{pgen_forward.29} parent=0 // pred_check_branch
    %15 = sbr.rel (0) target = $region9
  $region8: #{pgen_forward.29} parent=0 // pred_region
    _
  $region9: #{pgen_forward.29} parent=0 // pred_fallthru
    _
  // Predicated region
  $region10: #{pgen_forward.29} parent=0 // pred_check
    _
  $region11: #{pgen_forward.29} parent=0 // pred_check_branch
    %17 = sbr.rel (0) target = $region13
  $region12: #{pgen_forward.29} parent=0 // pred_region
    _
  $region13: #{pgen_forward.29} parent=0 // pred_fallthru
    _
  // Predicated region
  $region14: #{pgen_forward.29} parent=0 // pred_check
    _
  $region15: #{pgen_forward.29} parent=0 // pred_check_branch
    %19 = sbr.rel (0) target = $region17
  $region16: #{pgen_forward.29} parent=0 // pred_region
    _
  $region17: #{pgen_forward.29} parent=0 // pred_fallthru
    _
  // Predicated region
  $region18: #{pgen_forward.29} parent=0 // pred_check
    _
  $region19: #{pgen_forward.29} parent=0 // pred_check_branch
    %21 = sbr.rel (0) target = $region21
  $region20: #{pgen_forward.29} parent=0 // pred_region
    _
  $region21: #{pgen_forward.29} parent=0 // pred_fallthru
    _
  %p23 = scmp.eq.s32.totalorder 0, 0
  // Predicated region
  $region22: #{pgen_forward.29} parent=0 // pred_check
    %p24 = pneg %p23
  $region23: #{pgen_forward.29} parent=0 // pred_check_branch
    %26 = sbr.rel (%p24) target = $region25
  $region24: #{pgen_forward.29} parent=0 // pred_region
    %vm27 = vcmask 261120
    %28 = vst.msk [vmem:[#allocation2] sm:$0xff] %vm27, 0.0
    %29 = vst.msk [vmem:[#allocation2 + $0x8] sm:$0xff] %vm27, 0.0
    %30 = vst.msk [vmem:[#allocation3] sm:$0xff] %vm27, 0.0
    %31 = vst.msk [vmem:[#allocation3 + $0x8] sm:$0xff] %vm27, 0.0
  $region25: #{pgen_forward.29} parent=0 // pred_fallthru
    _
  %v32 = vld [vmem:[%s0] sm:$0xf]
  %v33 = vld [vmem:[%s0 + $0x4] sm:$0xf]
  %v34 = vld [vmem:[#allocation2] sm:$0xff]
  %v35 = vld [vmem:[#allocation2 + $0x8] sm:$0xff]
  %v36 = vld [vmem:[%s1] sm:$0xf]
  %v37 = vld [vmem:[%s1 + $0x4] sm:$0xf]
  %v38 = vld [vmem:[%s1 + $0x8] sm:$0xf]
  %v39 = vld [vmem:[%s1 + $0xc] sm:$0xf]
  %v42 = vunpack.c.l.b16 %v32
  %v43 = vunpack.c.l.b16 %v33
  %v44 = vpack.c.b16 %v43, %v42
  %v49 = vunpack.c.l.b16 %v36
  %v50 = vunpack.c.l.b16 %v37
  %v51 = vunpack.c.l.b16 %v38
  %v52 = vunpack.c.l.b16 %v39
  %v53 = vpack.c.b16 %v50, %v49
  %v54 = vpack.c.b16 %v52, %v51
  %vm57 = vcmask 261120
  %v59 = vsel %vm57, %v44, 0
  %61 = vmatprep.subr.bf16.mxu0 0
  %62 = vmatpush1.bf16.msra.mxu0 %v53
  %63 = vmatprep.subr.bf16.mxu0 0
  %64 = vmatpush1.bf16.msra.mxu0 %v54
  %65 = vmatprep.subr.bf16.mxu0 0
  %66 = vmatpush1.bf16.msra.mxu0 0
  %67 = vmatprep.subr.bf16.mxu0 0
  %68 = vmatpush1.bf16.msra.mxu0 0
  %69 = vmatprep.subr.bf16.mxu0 0
  %70 = vmatpush1.bf16.msra.mxu0 0
  %71 = vmatprep.subr.bf16.mxu0 0
  %72 = vmatpush1.bf16.msra.mxu0 0
  %73 = vmatprep.subr.bf16.mxu0 0
  %74 = vmatpush1.bf16.msra.mxu0 0
  %75 = vmatprep.subr.bf16.mxu0 0
  %76 = vmatpush1.bf16.msra.mxu0 0
  %77 = vmatprep.subr.bf16.mxu0 0
  %78 = vmatpush1.bf16.msra.mxu0 0
  %79 = vmatprep.subr.bf16.mxu0 0
  %80 = vmatpush1.bf16.msra.mxu0 0
  %81 = vmatprep.subr.bf16.mxu0 0
  %82 = vmatpush1.bf16.msra.mxu0 0
  %83 = vmatprep.subr.bf16.mxu0 0
  %84 = vmatpush1.bf16.msra.mxu0 0
  %85 = vmatprep.subr.bf16.mxu0 0
  %86 = vmatpush1.bf16.msra.mxu0 0
  %87 = vmatprep.subr.bf16.mxu0 0
  %88 = vmatpush1.bf16.msra.mxu0 0
  %89 = vmatprep.subr.bf16.mxu0 0
  %90 = vmatpush1.bf16.msra.mxu0 0
  %91 = vmatprep.subr.bf16.mxu0 0
  %92 = vmatpush1.bf16.msra.mxu0 0
  %93 = vmatprep.mubr.bf16.mxu0 0
  %94 = vmatmul.mubr.bf16.gmra.mrb[0].mxu0 %v59
  %v95 = vpop.f32.mrb[0].mxu0
  %v96 = vadd.f32 0.0, %v95
  %v97 = vpop.f32.mrb[0].mxu0
  %v98 = vpop.f32.mrb[0].mxu0
  %v99 = vadd.f32 0.0, %v98
  %v100 = vpop.f32.mrb[0].mxu0
  %101 = vdwg.mxu0
  %v102 = vadd.f32 %v34, %v96
  %v103 = vadd.f32 %v35, %v99
  %104 = vst.msk [vmem:[#allocation2] sm:$0xff] %vm57, %v102
  %105 = vst.msk [vmem:[#allocation2 + $0x8] sm:$0xff] %vm57, %v103
  %v106 = vld [vmem:[#allocation3] sm:$0xff]
  %v107 = vld [vmem:[#allocation3 + $0x8] sm:$0xff]
  %v108 = vld [vmem:[%s2] sm:$0xf]
  %v109 = vld [vmem:[%s2 + $0x4] sm:$0xf]
  %v110 = vld [vmem:[%s2 + $0x8] sm:$0xf]
  %v111 = vld [vmem:[%s2 + $0xc] sm:$0xf]
  %v116 = vunpack.c.l.b16 %v108
  %v117 = vunpack.c.l.b16 %v109
  %v118 = vunpack.c.l.b16 %v110
  %v119 = vunpack.c.l.b16 %v111
  %v120 = vpack.c.b16 %v117, %v116
  %v121 = vpack.c.b16 %v119, %v118
  %124 = vmatprep.subr.bf16.mxu0 0
  %125 = vmatpush1.bf16.msra.mxu0 %v120
  %126 = vmatprep.subr.bf16.mxu0 0
  %127 = vmatpush1.bf16.msra.mxu0 %v121
  %128 = vmatprep.subr.bf16.mxu0 0
  %129 = vmatpush1.bf16.msra.mxu0 0
  %130 = vmatprep.subr.bf16.mxu0 0
  %131 = vmatpush1.bf16.msra.mxu0 0
  %132 = vmatprep.subr.bf16.mxu0 0
  %133 = vmatpush1.bf16.msra.mxu0 0
  %134 = vmatprep.subr.bf16.mxu0 0
  %135 = vmatpush1.bf16.msra.mxu0 0
  %136 = vmatprep.subr.bf16.mxu0 0
  %137 = vmatpush1.bf16.msra.mxu0 0
  %138 = vmatprep.subr.bf16.mxu0 0
  %139 = vmatpush1.bf16.msra.mxu0 0
  %140 = vmatprep.subr.bf16.mxu0 0
  %141 = vmatpush1.bf16.msra.mxu0 0
  %142 = vmatprep.subr.bf16.mxu0 0
  %143 = vmatpush1.bf16.msra.mxu0 0
  %144 = vmatprep.subr.bf16.mxu0 0
  %145 = vmatpush1.bf16.msra.mxu0 0
  %146 = vmatprep.subr.bf16.mxu0 0
  %147 = vmatpush1.bf16.msra.mxu0 0
  %148 = vmatprep.subr.bf16.mxu0 0
  %149 = vmatpush1.bf16.msra.mxu0 0
  %150 = vmatprep.subr.bf16.mxu0 0
  %151 = vmatpush1.bf16.msra.mxu0 0
  %152 = vmatprep.subr.bf16.mxu0 0
  %153 = vmatpush1.bf16.msra.mxu0 0
  %154 = vmatprep.subr.bf16.mxu0 0
  %155 = vmatpush1.bf16.msra.mxu0 0
  %156 = vmatprep.mubr.bf16.mxu0 0
  %157 = vmatmul.mubr.bf16.gmra.mrb[0].mxu0 %v59
  %v158 = vpop.f32.mrb[0].mxu0
  %v159 = vadd.f32 0.0, %v158
  %v160 = vpop.f32.mrb[0].mxu0
  %v161 = vpop.f32.mrb[0].mxu0
  %v162 = vadd.f32 0.0, %v161
  %v163 = vpop.f32.mrb[0].mxu0
  %164 = vdwg.mxu0
  %v165 = vadd.f32 %v106, %v159
  %v166 = vadd.f32 %v107, %v162
  %167 = vst.msk [vmem:[#allocation3] sm:$0xff] %vm57, %v165
  %168 = vst.msk [vmem:[#allocation3 + $0x8] sm:$0xff] %vm57, %v166
  // Predicated region
  $region26: #{pgen_forward.29} parent=0 // pred_check
    %p169 = pneg %p23
  $region27: #{pgen_forward.29} parent=0 // pred_check_branch
    %171 = sbr.rel (%p169) target = $region29
  $region28: #{pgen_forward.29} parent=0 // pred_region
    %v172 = vld [vmem:[#allocation2] sm:$0xff]
    %v173 = vld [vmem:[#allocation2 + $0x8] sm:$0xff]
    %v174 = vld [vmem:[%s3] sm:$0x1]
    %v176 = vlaneseq
    %v177 = vshrl.u32 %v176, 7
    %v178 = vsub.s32 0, %v177
    %v179 = vrot.slane %v174, %v178
    %v181 = vadd.f32 %v172, %v179
    %v182 = vadd.f32 %v173, %v179
    %v183 = vpack.c.bf16 %v182, %v181
    %v185 = vunpack.c.l.b16 %v183
    %v186 = vunpack.c.h.b16 %v183
    %v187 = vpack.c.b16 %v185, %v185
    %v188 = vpack.c.b16 %v186, %v186
    %vm191 = vcmask 257024
    %192 = vst.msk [vmem:[%s5] sm:$0xf] %vm191, %v187
    %193 = vst.msk [vmem:[%s5 + $0x4] sm:$0xf] %vm191, %v188
    %v194 = vld [vmem:[#allocation3] sm:$0xff]
    %v195 = vld [vmem:[#allocation3 + $0x8] sm:$0xff]
    %v196 = vld [vmem:[%s4] sm:$0x1]
    %v198 = vlaneseq
    %v199 = vshrl.u32 %v198, 7
    %v200 = vsub.s32 0, %v199
    %v201 = vrot.slane %v196, %v200
    %v203 = vadd.f32 %v194, %v201
    %v204 = vadd.f32 %v195, %v201
    %v205 = vpack.c.bf16 %v204, %v203
    %v207 = vunpack.c.l.b16 %v205
    %v208 = vunpack.c.h.b16 %v205
    %v209 = vpack.c.b16 %v207, %v207
    %v210 = vpack.c.b16 %v208, %v208
    %213 = vst.msk [vmem:[%s6] sm:$0xf] %vm191, %v209
    %214 = vst.msk [vmem:[%s6 + $0x4] sm:$0xf] %vm191, %v210
  $region29: #{pgen_forward.29} parent=0 // pred_fallthru
    _
  // Predicated region
  $region30: #{pgen_forward.29} parent=0 // pred_check
    _
  $region31: #{pgen_forward.29} parent=0 // pred_check_branch
    %216 = sbr.rel (0) target = $region33
  $region32: #{pgen_forward.29} parent=0 // pred_region
    _
  $region33: #{pgen_forward.29} parent=0 // pred_fallthru
    _
  // Predicated region
  $region34: #{pgen_forward.29} parent=0 // pred_check
    _
  $region35: #{pgen_forward.29} parent=0 // pred_check_branch
    %218 = sbr.rel (0) target = $region37
  $region36: #{pgen_forward.29} parent=0 // pred_region
    _
  $region37: #{pgen_forward.29} parent=0 // pred_fallthru
    _
  // Predicated region
  $region38: #{pgen_forward.29} parent=0 // pred_check
    _
  $region39: #{pgen_forward.29} parent=0 // pred_check_branch
    %220 = sbr.rel (0) target = $region41
  $region40: #{pgen_forward.29} parent=0 // pred_region
    _
  $region41: #{pgen_forward.29} parent=0 // pred_fallthru
    _
  // Predicated region
  $region42: #{pgen_forward.29} parent=0 // pred_check
    _
  $region43: #{pgen_forward.29} parent=0 // pred_check_branch
    %222 = sbr.rel (0) target = $region45
  $region44: #{pgen_forward.29} parent=0 // pred_region
    _
  $region45: #{pgen_forward.29} parent=0 // pred_fallthru
    _

// kernel: pgen_forward.33
$region0: #{pgen_forward.33}
  #allocation0 [shape = 'u32[]', space=smem, size = 0x4, offset = 0x4, fixed_abs, tag = 'smem constant byte address 0x4 - core index']
  #allocation1 [shape = 'u32[144,128]{1,0:T(1,128)}', space=vmem, size = 0x12000, scoped, tag = 'internal scratch']
  #allocation2 [shape = 'f32[16,64]{1,0:T(8,128)}', space=vmem, size = 0x2000, scoped, tag = 'scratch operand']
  %s0 = inlined_call_operand.vmem [shape: bf16[16,32], index: 0, kind: input, shape index: {}]
  %s1 = inlined_call_operand.vmem [shape: bf16[32,64], index: 1, kind: input, shape index: {}]
  %s2 = inlined_call_operand.vmem [shape: f32[1,64], index: 2, kind: input, shape index: {}]
  %s3 = inlined_call_operand.vmem [shape: bf16[16,64], index: 3, kind: output, shape index: {}]
  %s4 = sld [smem:[#allocation0]]
  $region30: #{pgen_forward.33} parent=0
    _
  %s6 = ssub.s32 1, %s4
  %s7 = scalar_select 0, %s6, %s4
  // Predicated region
  $region2: #{pgen_forward.33} parent=0 // pred_check
    _
  $region3: #{pgen_forward.33} parent=0 // pred_check_branch
    %9 = sbr.rel (0) target = $region5
  $region4: #{pgen_forward.33} parent=0 // pred_region
    _
  $region5: #{pgen_forward.33} parent=0 // pred_fallthru
    _
  // Predicated region
  $region6: #{pgen_forward.33} parent=0 // pred_check
    _
  $region7: #{pgen_forward.33} parent=0 // pred_check_branch
    %11 = sbr.rel (0) target = $region9
  $region8: #{pgen_forward.33} parent=0 // pred_region
    _
  $region9: #{pgen_forward.33} parent=0 // pred_fallthru
    _
  // Predicated region
  $region10: #{pgen_forward.33} parent=0 // pred_check
    _
  $region11: #{pgen_forward.33} parent=0 // pred_check_branch
    %13 = sbr.rel (0) target = $region13
  $region12: #{pgen_forward.33} parent=0 // pred_region
    _
  $region13: #{pgen_forward.33} parent=0 // pred_fallthru
    _
  %p15 = scmp.eq.s32.totalorder 0, 0
  // Predicated region
  $region14: #{pgen_forward.33} parent=0 // pred_check
    %p16 = pneg %p15
  $region15: #{pgen_forward.33} parent=0 // pred_check_branch
    %18 = sbr.rel (%p16) target = $region17
  $region16: #{pgen_forward.33} parent=0 // pred_region
    %vm19 = vcmask 523264
    %20 = vst.msk [vmem:[#allocation2] sm:$0xff] %vm19, 0.0
    %21 = vst.msk [vmem:[#allocation2 + $0x8] sm:$0xff] %vm19, 0.0
  $region17: #{pgen_forward.33} parent=0 // pred_fallthru
    _
  %v22 = vld [vmem:[#allocation2] sm:$0xff]
  %v23 = vld [vmem:[#allocation2 + $0x8] sm:$0xff]
  %v24 = vld [vmem:[%s0] sm:$0xf]
  %v25 = vld [vmem:[%s0 + $0x4] sm:$0xf]
  %v26 = vld [vmem:[%s1] sm:$0xf]
  %v27 = vld [vmem:[%s1 + $0x4] sm:$0xf]
  %v28 = vld [vmem:[%s1 + $0x8] sm:$0xf]
  %v29 = vld [vmem:[%s1 + $0xc] sm:$0xf]
  %v32 = vunpack.c.l.b16 %v24
  %v33 = vunpack.c.l.b16 %v25
  %v34 = vpack.c.b16 %v33, %v32
  %v39 = vunpack.c.l.b16 %v26
  %v40 = vunpack.c.l.b16 %v27
  %v41 = vunpack.c.l.b16 %v28
  %v42 = vunpack.c.l.b16 %v29
  %v43 = vpack.c.b16 %v40, %v39
  %v44 = vpack.c.b16 %v42, %v41
  %vm47 = vcmask 261120
  %v49 = vsel %vm47, %v34, 0
  %51 = vmatprep.subr.bf16.mxu0 0
  %52 = vmatpush1.bf16.msra.mxu0 %v43
  %53 = vmatprep.subr.bf16.mxu0 0
  %54 = vmatpush1.bf16.msra.mxu0 %v44
  %55 = vmatprep.subr.bf16.mxu0 0
  %56 = vmatpush1.bf16.msra.mxu0 0
  %57 = vmatprep.subr.bf16.mxu0 0
  %58 = vmatpush1.bf16.msra.mxu0 0
  %59 = vmatprep.subr.bf16.mxu0 0
  %60 = vmatpush1.bf16.msra.mxu0 0
  %61 = vmatprep.subr.bf16.mxu0 0
  %62 = vmatpush1.bf16.msra.mxu0 0
  %63 = vmatprep.subr.bf16.mxu0 0
  %64 = vmatpush1.bf16.msra.mxu0 0
  %65 = vmatprep.subr.bf16.mxu0 0
  %66 = vmatpush1.bf16.msra.mxu0 0
  %67 = vmatprep.subr.bf16.mxu0 0
  %68 = vmatpush1.bf16.msra.mxu0 0
  %69 = vmatprep.subr.bf16.mxu0 0
  %70 = vmatpush1.bf16.msra.mxu0 0
  %71 = vmatprep.subr.bf16.mxu0 0
  %72 = vmatpush1.bf16.msra.mxu0 0
  %73 = vmatprep.subr.bf16.mxu0 0
  %74 = vmatpush1.bf16.msra.mxu0 0
  %75 = vmatprep.subr.bf16.mxu0 0
  %76 = vmatpush1.bf16.msra.mxu0 0
  %77 = vmatprep.subr.bf16.mxu0 0
  %78 = vmatpush1.bf16.msra.mxu0 0
  %79 = vmatprep.subr.bf16.mxu0 0
  %80 = vmatpush1.bf16.msra.mxu0 0
  %81 = vmatprep.subr.bf16.mxu0 0
  %82 = vmatpush1.bf16.msra.mxu0 0
  %83 = vmatprep.mubr.bf16.mxu0 0
  %84 = vmatmul.mubr.bf16.gmra.mrb[0].mxu0 %v49
  %v85 = vpop.f32.mrb[0].mxu0
  %v86 = vadd.f32 0.0, %v85
  %v87 = vpop.f32.mrb[0].mxu0
  %v88 = vpop.f32.mrb[0].mxu0
  %v89 = vadd.f32 0.0, %v88
  %v90 = vpop.f32.mrb[0].mxu0
  %91 = vdwg.mxu0
  %v92 = vadd.f32 %v22, %v86
  %v93 = vadd.f32 %v23, %v89
  %vm94 = vcmask 523264
  %95 = vst.msk [vmem:[#allocation2] sm:$0xff] %vm94, %v92
  %96 = vst.msk [vmem:[#allocation2 + $0x8] sm:$0xff] %vm94, %v93
  // Predicated region
  $region18: #{pgen_forward.33} parent=0 // pred_check
    %p97 = pneg %p15
  $region19: #{pgen_forward.33} parent=0 // pred_check_branch
    %99 = sbr.rel (%p97) target = $region21
  $region20: #{pgen_forward.33} parent=0 // pred_region
    %v100 = vld [vmem:[#allocation2] sm:$0xff]
    %v101 = vld [vmem:[#allocation2 + $0x8] sm:$0xff]
    %v102 = vld [vmem:[%s2] sm:$0x1]
    %v104 = vlaneseq
    %v105 = vshrl.u32 %v104, 7
    %v106 = vsub.s32 0, %v105
    %v107 = vrot.slane %v102, %v106
    %v109 = vadd.f32 %v100, %v107
    %v110 = vadd.f32 %v101, %v107
    %v111 = vmax.f32 %v109, 0.0
    %v112 = vmax.f32 %v110, 0.0
    %v113 = vpack.c.bf16 %v112, %v111
    %v115 = vunpack.c.l.b16 %v113
    %v116 = vunpack.c.h.b16 %v113
    %v117 = vpack.c.b16 %v115, %v115
    %v118 = vpack.c.b16 %v116, %v116
    %vm121 = vcmask 519168
    %122 = vst.msk [vmem:[%s3] sm:$0xf] %vm121, %v117
    %123 = vst.msk [vmem:[%s3 + $0x4] sm:$0xf] %vm121, %v118
  $region21: #{pgen_forward.33} parent=0 // pred_fallthru
    _
  // Predicated region
  $region22: #{pgen_forward.33} parent=0 // pred_check
    _
  $region23: #{pgen_forward.33} parent=0 // pred_check_branch
    %125 = sbr.rel (0) target = $region25
  $region24: #{pgen_forward.33} parent=0 // pred_region
    _
  $region25: #{pgen_forward.33} parent=0 // pred_fallthru
    _
  // Predicated region
  $region26: #{pgen_forward.33} parent=0 // pred_check
    _
  $region27: #{pgen_forward.33} parent=0 // pred_check_branch
    %127 = sbr.rel (0) target = $region29
  $region28: #{pgen_forward.33} parent=0 // pred_region
    _
  $region29: #{pgen_forward.33} parent=0 // pred_fallthru
    _

// kernel: pgen_forward.30
$region0: #{pgen_forward.30}
  #allocation0 [shape = 'u32[]', space=smem, size = 0x4, offset = 0x4, fixed_abs, tag = 'smem constant byte address 0x4 - core index']
  #allocation1 [shape = 'u32[144,128]{1,0:T(1,128)}', space=vmem, size = 0x12000, scoped, tag = 'internal scratch']
  #allocation2 [shape = 'f32[2,8,1]{2,1,0:T(8,128)}', space=vmem, size = 0x2000, scoped, tag = 'scratch operand']
  #allocation3 [shape = 'f32[2,8,1]{2,1,0:T(8,128)}', space=vmem, size = 0x2000, scoped, tag = 'scratch operand']
  #allocation4 [shape = 'f32[2,8,16]{2,1,0:T(8,128)}', space=vmem, size = 0x2000, scoped, tag = 'scratch operand']
  %s0 = inlined_call_operand.vmem [shape: bf16[2,8,32], index: 0, kind: input, shape index: {}]
  %s1 = inlined_call_operand.vmem [shape: bf16[2,8,32], index: 1, kind: input, shape index: {}]
  %s2 = inlined_call_operand.vmem [shape: bf16[2,8,32], index: 2, kind: input, shape index: {}]
  %s3 = inlined_call_operand.vmem [shape: f32[2,1,8], index: 3, kind: input, shape index: {}]
  %s4 = inlined_call_operand.vmem [shape: bf16[2,8,32], index: 4, kind: output, shape index: {}]
  %s5 = sld [smem:[#allocation0]]
  $region57: #{pgen_forward.30} parent=0
    _
  %s7 = ssub.s32 1, %s5
  %s8 = scalar_select 0, %s7, %s5
  loop: start=0, step=1, limit=4
  $region2: #{pgen_forward.30} parent=0 // loop_pre_header
    _
  $region3: #{pgen_forward.30} parent=0 // loop_header
    %s10 = sphi 0, %s14
    %p11 = scmp.ge.s32.totalorder %s10, 4
    %s17 = sphi 0, %s36
    %s18 = sphi 0, %s32
    %s19 = sphi 0, %s28
    %s20 = sphi 0, %s17
    %s21 = sphi 0, %s18
    %s22 = sphi 0, %s19
    %s23 = sphi 0, %s20
    %s24 = sphi 0, %s21
    %s25 = sphi 0, %s22
    %s41 = sphi 0, %s43
    %s44 = sphi 0, %s41
    %s45 = sphi 0, %s44
    %s61 = sphi 0, %s45
    %s69 = sphi 0, %s71
    %s72 = sphi 0, %s69
    %s73 = sphi 0, %s72
    %s89 = sphi 0, %s73
    %s97 = sphi 0, %s99
    %s100 = sphi 0, %s97
    %s101 = sphi 0, %s100
    %s117 = sphi 0, %s101
    %s125 = sphi 0, %s127
    %s128 = sphi 0, %s125
    %s129 = sphi 0, %s128
    %s145 = sphi 0, %s129
    %s153 = sphi 0, %s155
    %s156 = sphi 0, %s153
    %s157 = sphi 0, %s156
    %s173 = sphi 0, %s157
  $region4: #{pgen_forward.30} parent=0 // loop_header_branch
    %13 = sbr.rel (%p11) target = $region8
  $region5: #{pgen_forward.30} parent=0 // loop_body
    %s15 = ssub.s32 %s10, 1
    %s16 = ssub.s32 %s10, 2
    %s26 = sadd.s32 1, %s19
    %p27 = scmp.ge.s32.totalorder %s26, 1
    %s28 = scalar_select %p27, 0, %s26
    %s29 = sadd.s32 1, %s18
    %s30 = scalar_select %p27, %s29, %s18
    %p31 = scmp.ge.s32.totalorder %s30, 1
    %s32 = scalar_select %p31, 0, %s30
    %s33 = sadd.s32 1, %s17
    %s34 = scalar_select %p31, %s33, %s17
    %p35 = scmp.ge.s32.totalorder %s34, 2
    %s36 = scalar_select %p35, 0, %s34
    %s37 = ssub.s32 %s17, %s36
    %s38 = ssub.s32 %s18, %s32
    %s39 = sor.u32 %s37, %s38
    %p40 = scmp.eq.s32.totalorder %s39, 0
    %s42 = sadd.s32 %s41, 1
    %s43 = scalar_select %p40, %s41, %s42
    %p46 = pneg %p40
    %p47 = scmp.eq.s32.totalorder %s10, 1
    %p48 = por %p46, %p47
    %p49 = scmp.ne.s32.totalorder %s41, %s44
    %p50 = scmp.eq.s32.totalorder %s10, 0
    %p51 = por %p49, %p50
    %p52 = scmp.ne.s32.totalorder %s41, %s44
    %p53 = scmp.eq.s32.totalorder %s15, 1
    %p54 = por %p52, %p53
    %p55 = scmp.ne.s32.totalorder %s44, %s45
    %p56 = scmp.eq.s32.totalorder %s15, 0
    %p57 = por %p55, %p56
    %p58 = scmp.ne.s32.totalorder %s44, %s45
    %p59 = scmp.eq.s32.totalorder %s16, 1
    %p60 = por %p58, %p59
    %p62 = scmp.ne.s32.totalorder %s45, %s61
    %p63 = scmp.eq.s32.totalorder %s16, 0
    %p64 = por %p62, %p63
    %s65 = ssub.s32 %s17, %s36
    %s66 = ssub.s32 %s19, %s28
    %s67 = sor.u32 %s65, %s66
    %p68 = scmp.eq.s32.totalorder %s67, 0
    %s70 = sadd.s32 %s69, 1
    %s71 = scalar_select %p68, %s69, %s70
    %p74 = pneg %p68
    %p75 = scmp.eq.s32.totalorder %s10, 1
    %p76 = por %p74, %p75
    %p77 = scmp.ne.s32.totalorder %s69, %s72
    %p78 = scmp.eq.s32.totalorder %s10, 0
    %p79 = por %p77, %p78
    %p80 = scmp.ne.s32.totalorder %s69, %s72
    %p81 = scmp.eq.s32.totalorder %s15, 1
    %p82 = por %p80, %p81
    %p83 = scmp.ne.s32.totalorder %s72, %s73
    %p84 = scmp.eq.s32.totalorder %s15, 0
    %p85 = por %p83, %p84
    %p86 = scmp.ne.s32.totalorder %s72, %s73
    %p87 = scmp.eq.s32.totalorder %s16, 1
    %p88 = por %p86, %p87
    %p90 = scmp.ne.s32.totalorder %s73, %s89
    %p91 = scmp.eq.s32.totalorder %s16, 0
    %p92 = por %p90, %p91
    %s93 = ssub.s32 %s17, %s36
    %s94 = ssub.s32 %s19, %s28
    %s95 = sor.u32 %s93, %s94
    %p96 = scmp.eq.s32.totalorder %s95, 0
    %s98 = sadd.s32 %s97, 1
    %s99 = scalar_select %p96, %s97, %s98
    %p102 = pneg %p96
    %p103 = scmp.eq.s32.totalorder %s10, 1
    %p104 = por %p102, %p103
    %p105 = scmp.ne.s32.totalorder %s97, %s100
    %p106 = scmp.eq.s32.totalorder %s10, 0
    %p107 = por %p105, %p106
    %p108 = scmp.ne.s32.totalorder %s97, %s100
    %p109 = scmp.eq.s32.totalorder %s15, 1
    %p110 = por %p108, %p109
    %p111 = scmp.ne.s32.totalorder %s100, %s101
    %p112 = scmp.eq.s32.totalorder %s15, 0
    %p113 = por %p111, %p112
    %p114 = scmp.ne.s32.totalorder %s100, %s101
    %p115 = scmp.eq.s32.totalorder %s16, 1
    %p116 = por %p114, %p115
    %p118 = scmp.ne.s32.totalorder %s101, %s117
    %p119 = scmp.eq.s32.totalorder %s16, 0
    %p120 = por %p118, %p119
    %s121 = ssub.s32 %s17, %s36
    %s122 = ssub.s32 %s19, %s28
    %s123 = sor.u32 %s121, %s122
    %p124 = scmp.eq.s32.totalorder %s123, 0
    %s126 = sadd.s32 %s125, 1
    %s127 = scalar_select %p124, %s125, %s126
    %p130 = pneg %p124
    %p131 = scmp.eq.s32.totalorder %s10, 1
    %p132 = por %p130, %p131
    %p133 = scmp.ne.s32.totalorder %s125, %s128
    %p134 = scmp.eq.s32.totalorder %s10, 0
    %p135 = por %p133, %p134
    %p136 = scmp.ne.s32.totalorder %s125, %s128
    %p137 = scmp.eq.s32.totalorder %s15, 1
    %p138 = por %p136, %p137
    %p139 = scmp.ne.s32.totalorder %s128, %s129
    %p140 = scmp.eq.s32.totalorder %s15, 0
    %p141 = por %p139, %p140
    %p142 = scmp.ne.s32.totalorder %s128, %s129
    %p143 = scmp.eq.s32.totalorder %s16, 1
    %p144 = por %p142, %p143
    %p146 = scmp.ne.s32.totalorder %s129, %s145
    %p147 = scmp.eq.s32.totalorder %s16, 0
    %p148 = por %p146, %p147
    %s149 = ssub.s32 %s17, %s36
    %s150 = ssub.s32 %s18, %s32
    %s151 = sor.u32 %s149, %s150
    %p152 = scmp.eq.s32.totalorder %s151, 0
    %s154 = sadd.s32 %s153, 1
    %s155 = scalar_select %p152, %s153, %s154
    %p158 = pneg %p152
    %p159 = scmp.eq.s32.totalorder %s10, 1
    %p160 = por %p158, %p159
    %p161 = scmp.ne.s32.totalorder %s153, %s156
    %p162 = scmp.eq.s32.totalorder %s10, 0
    %p163 = por %p161, %p162
    %p164 = scmp.ne.s32.totalorder %s153, %s156
    %p165 = scmp.eq.s32.totalorder %s15, 1
    %p166 = por %p164, %p165
    %p167 = scmp.ne.s32.totalorder %s156, %s157
    %p168 = scmp.eq.s32.totalorder %s15, 0
    %p169 = por %p167, %p168
    %p170 = scmp.ne.s32.totalorder %s156, %s157
    %p171 = scmp.eq.s32.totalorder %s16, 1
    %p172 = por %p170, %p171
    %p174 = scmp.ne.s32.totalorder %s157, %s173
    %p175 = scmp.eq.s32.totalorder %s16, 0
    %p176 = por %p174, %p175
    %p177 = scmp.le.s32.totalorder 1, %s10
    %p178 = scmp.lt.s32.totalorder %s10, 3
    %p179 = pnand %p177, %p178
    %p180 = pneg %p179
    // Predicated region
    $region9: #{pgen_forward.30} parent=5 // pred_check
      _
    $region10: #{pgen_forward.30} parent=5 // pred_check_branch
      %182 = sbr.rel (%p179) target = $region12
    $region11: #{pgen_forward.30} parent=5 // pred_region
      %s183 = ssub.s32 %s10, 1
    $region12: #{pgen_forward.30} parent=5 // pred_fallthru
      _
    %p184 = scmp.lt.s32.totalorder %s10, 2
    // Predicated region
    $region13: #{pgen_forward.30} parent=5 // pred_check
      %p185 = pneg %p184
    $region14: #{pgen_forward.30} parent=5 // pred_check_branch
      %187 = sbr.rel (%p185) target = $region16
    $region15: #{pgen_forward.30} parent=5 // pred_region
      // Predicated region
      $region17: #{pgen_forward.30} parent=15 // pred_check
        %p188 = pneg %p51
      $region18: #{pgen_forward.30} parent=15 // pred_check_branch
        %190 = sbr.rel (%p188) target = $region20
      $region19: #{pgen_forward.30} parent=15 // pred_region
        %p191 = scmp.lt.s32.totalorder %s17, 1
        %s192 = scalar_select %p191, %s17, 1
        %p193 = scmp.lt.s32.totalorder %s18, 0
        %s194 = scalar_select %p193, %s18, 0
        %s195 = sadd.s32 %s194, %s192
        %s196 = smul.addr %s195, 4
        %s197 = scalar_lea.vmem %s0, %s196
      $region20: #{pgen_forward.30} parent=15 // pred_fallthru
        _
      // Predicated region
      $region21: #{pgen_forward.30} parent=15 // pred_check
        %p198 = pneg %p79
      $region22: #{pgen_forward.30} parent=15 // pred_check_branch
        %200 = sbr.rel (%p198) target = $region24
      $region23: #{pgen_forward.30} parent=15 // pred_region
        %p201 = scmp.lt.s32.totalorder %s17, 1
        %s202 = scalar_select %p201, %s17, 1
        %p203 = scmp.lt.s32.totalorder %s19, 0
        %s204 = scalar_select %p203, %s19, 0
        %s205 = sadd.s32 %s204, %s202
        %s206 = smul.addr %s205, 4
        %s207 = scalar_lea.vmem %s1, %s206
      $region24: #{pgen_forward.30} parent=15 // pred_fallthru
        _
      // Predicated region
      $region25: #{pgen_forward.30} parent=15 // pred_check
        %p208 = pneg %p107
      $region26: #{pgen_forward.30} parent=15 // pred_check_branch
        %210 = sbr.rel (%p208) target = $region28
      $region27: #{pgen_forward.30} parent=15 // pred_region
        %p211 = scmp.lt.s32.totalorder %s17, 1
        %s212 = scalar_select %p211, %s17, 1
        %p213 = scmp.lt.s32.totalorder %s19, 0
        %s214 = scalar_select %p213, %s19, 0
        %s215 = sadd.s32 %s214, %s212
        %s216 = smul.addr %s215, 4
        %s217 = scalar_lea.vmem %s2, %s216
      $region28: #{pgen_forward.30} parent=15 // pred_fallthru
        _
      // Predicated region
      $region29: #{pgen_forward.30} parent=15 // pred_check
        %p218 = pneg %p135
      $region30: #{pgen_forward.30} parent=15 // pred_check_branch
        %220 = sbr.rel (%p218) target = $region32
      $region31: #{pgen_forward.30} parent=15 // pred_region
        %p221 = scmp.lt.s32.totalorder %s17, 1
        %s222 = scalar_select %p221, %s17, 1
        %p223 = scmp.lt.s32.totalorder %s19, 0
        %s224 = scalar_select %p223, %s19, 0
        %s225 = sadd.s32 %s224, %s222
        %s226 = scalar_lea.vmem %s3, %s225
      $region32: #{pgen_forward.30} parent=15 // pred_fallthru
        _
    $region16: #{pgen_forward.30} parent=5 // pred_fallthru
      _
    %p227 = scmp.le.s32.totalorder 1, %s10
    %p228 = scmp.lt.s32.totalorder %s10, 3
    %p229 = pnand %p227, %p228
    %p230 = pneg %p229
    // Predicated region
    $region33: #{pgen_forward.30} parent=5 // pred_check
      _
    $region34: #{pgen_forward.30} parent=5 // pred_check_branch
      %232 = sbr.rel (%p229) target = $region36
    $region35: #{pgen_forward.30} parent=5 // pred_region
      %s233 = ssub.s32 %s10, 1
      %p234 = scmp.lt.s32.totalorder %s20, 1
      %s235 = scalar_select %p234, %s20, 1
      %p236 = scmp.lt.s32.totalorder %s21, 0
      %s237 = scalar_select %p236, %s21, 0
      %s238 = sadd.s32 %s237, %s235
      %s239 = smul.addr %s238, 4
      %s240 = scalar_lea.vmem %s0, %s239
      %p241 = pneg %p57
      %p242 = pneg %p54
      %p243 = scmp.lt.s32.totalorder %s20, 1
      %s244 = scalar_select %p243, %s20, 1
      %p245 = scmp.lt.s32.totalorder %s22, 0
      %s246 = scalar_select %p245, %s22, 0
      %s247 = sadd.s32 %s246, %s244
      %s248 = smul.addr %s247, 4
      %s249 = scalar_lea.vmem %s1, %s248
      %p250 = pneg %p85
      %p251 = pneg %p82
      %p252 = scmp.lt.s32.totalorder %s20, 1
      %s253 = scalar_select %p252, %s20, 1
      %p254 = scmp.lt.s32.totalorder %s22, 0
      %s255 = scalar_select %p254, %s22, 0
      %s256 = sadd.s32 %s255, %s253
      %s257 = smul.addr %s256, 4
      %s258 = scalar_lea.vmem %s2, %s257
      %p259 = pneg %p113
      %p260 = pneg %p110
      %p261 = scmp.lt.s32.totalorder %s20, 1
      %s262 = scalar_select %p261, %s20, 1
      %p263 = scmp.lt.s32.totalorder %s22, 0
      %s264 = scalar_select %p263, %s22, 0
      %s265 = sadd.s32 %s264, %s262
      %s266 = scalar_lea.vmem %s3, %s265
      %p267 = pneg %p141
      %p268 = pneg %p138
      %p269 = pneg %p169
      %p270 = pneg %p166
      %p271 = scmp.lt.s32.totalorder %s20, 1
      %s272 = scalar_select %p271, %s20, 1
      %p273 = scmp.lt.s32.totalorder %s21, 0
      %s274 = scalar_select %p273, %s21, 0
      %s275 = sadd.s32 %s274, %s272
      %s276 = smul.addr %s275, 4
      %s277 = scalar_lea.vmem %s4, %s276
      %p278 = scmp.lt.s32.totalorder %s20, 1
      %s279 = scalar_select %p278, %s20, 1
      %p280 = scmp.lt.s32.totalorder %s21, 0
      %s281 = scalar_select %p280, %s21, 0
      %s282 = sadd.s32 %s281, %s279
      %s283 = smul.addr %s282, 4
      %s284 = scalar_lea.vmem %s0, %s283
      %p285 = scmp.lt.s32.totalorder %s20, 1
      %s286 = scalar_select %p285, %s20, 1
      %p287 = scmp.lt.s32.totalorder %s22, 0
      %s288 = scalar_select %p287, %s22, 0
      %s289 = sadd.s32 %s288, %s286
      %s290 = smul.addr %s289, 4
      %s291 = scalar_lea.vmem %s1, %s290
      %p292 = scmp.lt.s32.totalorder %s20, 1
      %s293 = scalar_select %p292, %s20, 1
      %p294 = scmp.lt.s32.totalorder %s22, 0
      %s295 = scalar_select %p294, %s22, 0
      %s296 = sadd.s32 %s295, %s293
      %s297 = smul.addr %s296, 4
      %s298 = scalar_lea.vmem %s2, %s297
      %p299 = scmp.lt.s32.totalorder %s20, 1
      %s300 = scalar_select %p299, %s20, 1
      %p301 = scmp.lt.s32.totalorder %s22, 0
      %s302 = scalar_select %p301, %s22, 0
      %s303 = sadd.s32 %s302, %s300
      %s304 = scalar_lea.vmem %s3, %s303
      %p305 = scmp.lt.s32.totalorder %s20, 1
      %s306 = scalar_select %p305, %s20, 1
      %p307 = scmp.lt.s32.totalorder %s21, 0
      %s308 = scalar_select %p307, %s21, 0
      %s309 = sadd.s32 %s308, %s306
      %s310 = smul.addr %s309, 4
      %s311 = scalar_lea.vmem %s4, %s310
      %p313 = scmp.eq.s32.totalorder %s22, 0
      // Predicated region
      $region37: #{pgen_forward.30} parent=35 // pred_check
        %p314 = pneg %p313
      $region38: #{pgen_forward.30} parent=35 // pred_check_branch
        %316 = sbr.rel (%p314) target = $region40
      $region39: #{pgen_forward.30} parent=35 // pred_region
        %vm317 = vcmask 7168
        %318 = vst.msk [vmem:[#allocation2] sm:$0xff] %vm317, -3e+38
        %319 = vst.msk [vmem:[#allocation2 + $0x8] sm:$0xff] %vm317, -3e+38
        %320 = vst.msk [vmem:[#allocation3] sm:$0xff] %vm317, 0.0
        %321 = vst.msk [vmem:[#allocation3 + $0x8] sm:$0xff] %vm317, 0.0
        %vm322 = vcmask 130048
        %323 = vst.msk [vmem:[#allocation4] sm:$0xff] %vm322, 0.0
        %324 = vst.msk [vmem:[#allocation4 + $0x8] sm:$0xff] %vm322, 0.0
      $region40: #{pgen_forward.30} parent=35 // pred_fallthru
        _
      %v325 = vld [vmem:[%s284] sm:$0xf]
      %v326 = vld [vmem:[%s291] sm:$0xf]
      %v327 = vld [vmem:[%s298] sm:$0xf]
      %v328 = vld [vmem:[%s304] sm:$0x1]
      %v330 = vlaneseq
      %v331 = vshrl.u32 %v330, 7
      %v332 = vsub.s32 0, %v331
      %v333 = vrot.slane %v328, %v332
      %vm335 = vcmask 130048
      %v337 = vsel %vm335, %v325, 0
      %v340 = vsel %vm335, %v326, 0
      %342 = vmatprep.subr.bf16.mxu0 0
      %343 = vmatpush1.bf16.xpose.msra.mxu0 %v340
      %344 = vmatprep.subr.bf16.mxu0 0
      %345 = vmatpush1.bf16.xpose.msra.mxu0 0
      %346 = vmatprep.subr.bf16.mxu0 0
      %347 = vmatpush1.bf16.xpose.msra.mxu0 0
      %348 = vmatprep.subr.bf16.mxu0 0
      %349 = vmatpush1.bf16.xpose.msra.mxu0 0
      %350 = vmatprep.subr.bf16.mxu0 0
      %351 = vmatpush1.bf16.xpose.msra.mxu0 0
      %352 = vmatprep.subr.bf16.mxu0 0
      %353 = vmatpush1.bf16.xpose.msra.mxu0 0
      %354 = vmatprep.subr.bf16.mxu0 0
      %355 = vmatpush1.bf16.xpose.msra.mxu0 0
      %356 = vmatprep.subr.bf16.mxu0 0
      %357 = vmatpush1.bf16.xpose.msra.mxu0 0
      %358 = vmatprep.subr.bf16.mxu0 0
      %359 = vmatpush1.bf16.xpose.msra.mxu0 0
      %360 = vmatprep.subr.bf16.mxu0 0
      %361 = vmatpush1.bf16.xpose.msra.mxu0 0
      %362 = vmatprep.subr.bf16.mxu0 0
      %363 = vmatpush1.bf16.xpose.msra.mxu0 0
      %364 = vmatprep.subr.bf16.mxu0 0
      %365 = vmatpush1.bf16.xpose.msra.mxu0 0
      %366 = vmatprep.subr.bf16.mxu0 0
      %367 = vmatpush1.bf16.xpose.msra.mxu0 0
      %368 = vmatprep.subr.bf16.mxu0 0
      %369 = vmatpush1.bf16.xpose.msra.mxu0 0
      %370 = vmatprep.subr.bf16.mxu0 0
      %371 = vmatpush1.bf16.xpose.msra.mxu0 0
      %372 = vmatprep.subr.bf16.mxu0 0
      %373 = vmatpush1.bf16.xpose.msra.mxu0 0
      %374 = vmatprep.mubr.bf16.mxu0 0
      %375 = vmatmul.mubr.bf16.gmra.mrb[0].mxu0 %v337
      %v376 = vpop.f32.mrb[0].mxu0
      %v377 = vadd.f32 %v333, %v376
      %v378 = vpop.f32.mrb[0].mxu0
      %v379 = vpop.f32.mrb[0].mxu0
      %v380 = vpop.f32.mrb[0].mxu0
      %381 = vdwg.mxu0
      %v382 = vld [vmem:[#allocation2] sm:$0xff]
      %vm383 = vcmask 64512
      %v384 = vsel %vm383, %v377, -inf
      %385 = vmax.xlane.f32.xlu0 %v384
      %v386 = vpop.xlane.xlu0 %385
      %v387 = vmax.f32 %v382, %v386
      %v388 = vsub.f32 %v382, %v387
      %v389 = vmul.f32 %v388, 1.442695
      %v390 = vpow.pop %v389
      %392 = vset.pattern.permute.xlu0 0
      %393 = vperm.xlu0 %392, %v387
      %v394 = vpop.permute.xlu0 %393
      %v396 = vsub.f32 %v377, %v394
      %v397 = vmul.f32 %v396, 1.442695
      %v398 = vpow.pop %v397
      %v399 = vld [vmem:[#allocation3] sm:$0xff]
      %v400 = vmul.f32 %v390, %v399
      %v401 = vsel %vm383, %v398, 0.0
      %402 = vadd.xlane.f32.xlu0 %v401
      %v403 = vpop.xlane.xlu0 %402
      %v404 = vadd.f32 %v400, %v403
      %vm405 = vcmask 7168
      %406 = vst.msk [vmem:[#allocation3] sm:$0xff] %vm405, %v404
      %v407 = vld [vmem:[#allocation4] sm:$0xff]
      %409 = vset.pattern.permute.xlu0 0
      %410 = vperm.xlu0 %409, %v390
      %v411 = vpop.permute.xlu0 %410
      %v413 = vmul.f32 %v411, %v407
      %v414 = vpack.c.bf16 %v398, %v398
      %v416 = vsel %vm383, %v414, 0
      %vm418 = vcmask 1043456
      %v420 = vsel %vm418, %v327, 0
      %422 = vmatprep.subr.bf16.mxu0 0
      %423 = vmatpush1.bf16.msra.mxu0 %v420
      %424 = vmatprep.subr.bf16.mxu0 0
      %425 = vmatpush1.bf16.msra.mxu0 0
      %426 = vmatprep.subr.bf16.mxu0 0
      %427 = vmatpush1.bf16.msra.mxu0 0
      %428 = vmatprep.subr.bf16.mxu0 0
      %429 = vmatpush1.bf16.msra.mxu0 0
      %430 = vmatprep.subr.bf16.mxu0 0
      %431 = vmatpush1.bf16.msra.mxu0 0
      %432 = vmatprep.subr.bf16.mxu0 0
      %433 = vmatpush1.bf16.msra.mxu0 0
      %434 = vmatprep.subr.bf16.mxu0 0
      %435 = vmatpush1.bf16.msra.mxu0 0
      %436 = vmatprep.subr.bf16.mxu0 0
      %437 = vmatpush1.bf16.msra.mxu0 0
      %438 = vmatprep.subr.bf16.mxu0 0
      %439 = vmatpush1.bf16.msra.mxu0 0
      %440 = vmatprep.subr.bf16.mxu0 0
      %441 = vmatpush1.bf16.msra.mxu0 0
      %442 = vmatprep.subr.bf16.mxu0 0
      %443 = vmatpush1.bf16.msra.mxu0 0
      %444 = vmatprep.subr.bf16.mxu0 0
      %445 = vmatpush1.bf16.msra.mxu0 0
      %446 = vmatprep.subr.bf16.mxu0 0
      %447 = vmatpush1.bf16.msra.mxu0 0
      %448 = vmatprep.subr.bf16.mxu0 0
      %449 = vmatpush1.bf16.msra.mxu0 0
      %450 = vmatprep.subr.bf16.mxu0 0
      %451 = vmatpush1.bf16.msra.mxu0 0
      %452 = vmatprep.subr.bf16.mxu0 0
      %453 = vmatpush1.bf16.msra.mxu0 0
      %454 = vmatprep.mubr.bf16.mxu0 0
      %455 = vmatmul.mubr.bf16.gmra.mrb[0].mxu0 %v416
      %v456 = vpop.f32.mrb[0].mxu0
      %v457 = vadd.f32 0.0, %v456
      %v458 = vpop.f32.mrb[0].mxu0
      %v459 = vpop.f32.mrb[0].mxu0
      %v460 = vpop.f32.mrb[0].mxu0
      %461 = vdwg.mxu0
      %v462 = vadd.f32 %v413, %v457
      %463 = vst.msk [vmem:[#allocation4] sm:$0xff] %vm335, %v462
      %464 = vst.msk [vmem:[#allocation2] sm:$0xff] %vm405, %v387
      %v466 = vunpack.c.l.b16 %v325
      %v467 = vpack.c.b16 %v466, %v466
      %468 = vrot.lane.b32.xlu0 %v467, 112
      %v469 = vpop.permute.xlu0 %468
      %v471 = vunpack.c.l.b16 %v326
      %v472 = vpack.c.b16 %v471, %v471
      %473 = vrot.lane.b32.xlu0 %v472, 112
      %v474 = vpop.permute.xlu0 %473
      %v476 = vsel %vm335, %v469, 0
      %v479 = vsel %vm335, %v474, 0
      %481 = vmatprep.subr.bf16.mxu0 0
      %482 = vmatpush1.bf16.xpose.msra.mxu0 %v479
      %483 = vmatprep.subr.bf16.mxu0 0
      %484 = vmatpush1.bf16.xpose.msra.mxu0 0
      %485 = vmatprep.subr.bf16.mxu0 0
      %486 = vmatpush1.bf16.xpose.msra.mxu0 0
      %487 = vmatprep.subr.bf16.mxu0 0
      %488 = vmatpush1.bf16.xpose.msra.mxu0 0
      %489 = vmatprep.subr.bf16.mxu0 0
      %490 = vmatpush1.bf16.xpose.msra.mxu0 0
      %491 = vmatprep.subr.bf16.mxu0 0
      %492 = vmatpush1.bf16.xpose.msra.mxu0 0
      %493 = vmatprep.subr.bf16.mxu0 0
      %494 = vmatpush1.bf16.xpose.msra.mxu0 0
      %495 = vmatprep.subr.bf16.mxu0 0
      %496 = vmatpush1.bf16.xpose.msra.mxu0 0
      %497 = vmatprep.subr.bf16.mxu0 0
      %498 = vmatpush1.bf16.xpose.msra.mxu0 0
      %499 = vmatprep.subr.bf16.mxu0 0
      %500 = vmatpush1.bf16.xpose.msra.mxu0 0
      %501 = vmatprep.subr.bf16.mxu0 0
      %502 = vmatpush1.bf16.xpose.msra.mxu0 0
      %503 = vmatprep.subr.bf16.mxu0 0
      %504 = vmatpush1.bf16.xpose.msra.mxu0 0
      %505 = vmatprep.subr.bf16.mxu0 0
      %506 = vmatpush1.bf16.xpose.msra.mxu0 0
      %507 = vmatprep.subr.bf16.mxu0 0
      %508 = vmatpush1.bf16.xpose.msra.mxu0 0
      %509 = vmatprep.subr.bf16.mxu0 0
      %510 = vmatpush1.bf16.xpose.msra.mxu0 0
      %511 = vmatprep.subr.bf16.mxu0 0
      %512 = vmatpush1.bf16.xpose.msra.mxu0 0
      %513 = vmatprep.mubr.bf16.mxu0 0
      %514 = vmatmul.mubr.bf16.gmra.mrb[0].mxu0 %v476
      %v515 = vpop.f32.mrb[0].mxu0
      %v516 = vadd.f32 %v333, %v515
      %v517 = vpop.f32.mrb[0].mxu0
      %v518 = vpop.f32.mrb[0].mxu0
      %v519 = vpop.f32.mrb[0].mxu0
      %520 = vdwg.mxu0
      %s521 = scalar_lea.vmem [#allocation2], 8
      %v522 = vld [vmem:[%s521] sm:$0xff]
      %v523 = vsel %vm383, %v516, -inf
      %524 = vmax.xlane.f32.xlu0 %v523
      %v525 = vpop.xlane.xlu0 %524
      %v526 = vmax.f32 %v522, %v525
      %v527 = vsub.f32 %v522, %v526
      %v528 = vmul.f32 %v527, 1.442695
      %v529 = vpow.pop %v528
      %531 = vset.pattern.permute.xlu0 0
      %532 = vperm.xlu0 %531, %v526
      %v533 = vpop.permute.xlu0 %532
      %v535 = vsub.f32 %v516, %v533
      %v536 = vmul.f32 %v535, 1.442695
      %v537 = vpow.pop %v536
      %s538 = scalar_lea.vmem [#allocation3], 8
      %v539 = vld [vmem:[%s538] sm:$0xff]
      %v540 = vmul.f32 %v529, %v539
      %v541 = vsel %vm383, %v537, 0.0
      %542 = vadd.xlane.f32.xlu0 %v541
      %v543 = vpop.xlane.xlu0 %542
      %v544 = vadd.f32 %v540, %v543
      %545 = vst.msk [vmem:[%s538] sm:$0xff] %vm405, %v544
      %s546 = scalar_lea.vmem [#allocation4], 8
      %v547 = vld [vmem:[%s546] sm:$0xff]
      %549 = vset.pattern.permute.xlu0 0
      %550 = vperm.xlu0 %549, %v529
      %v551 = vpop.permute.xlu0 %550
      %v553 = vmul.f32 %v551, %v547
      %v554 = vpack.c.bf16 %v537, %v537
      %v556 = vunpack.c.l.b16 %v327
      %v557 = vpack.c.b16 %v556, %v556
      %558 = vrot.lane.b32.xlu0 %v557, 112
      %v559 = vpop.permute.xlu0 %558
      %v561 = vsel %vm383, %v554, 0
      %v564 = vsel %vm418, %v559, 0
      %566 = vmatprep.subr.bf16.mxu0 0
      %567 = vmatpush1.bf16.msra.mxu0 %v564
      %568 = vmatprep.subr.bf16.mxu0 0
      %569 = vmatpush1.bf16.msra.mxu0 0
      %570 = vmatprep.subr.bf16.mxu0 0
      %571 = vmatpush1.bf16.msra.mxu0 0
      %572 = vmatprep.subr.bf16.mxu0 0
      %573 = vmatpush1.bf16.msra.mxu0 0
      %574 = vmatprep.subr.bf16.mxu0 0
      %575 = vmatpush1.bf16.msra.mxu0 0
      %576 = vmatprep.subr.bf16.mxu0 0
      %577 = vmatpush1.bf16.msra.mxu0 0
      %578 = vmatprep.subr.bf16.mxu0 0
      %579 = vmatpush1.bf16.msra.mxu0 0
      %580 = vmatprep.subr.bf16.mxu0 0
      %581 = vmatpush1.bf16.msra.mxu0 0
      %582 = vmatprep.subr.bf16.mxu0 0
      %583 = vmatpush1.bf16.msra.mxu0 0
      %584 = vmatprep.subr.bf16.mxu0 0
      %585 = vmatpush1.bf16.msra.mxu0 0
      %586 = vmatprep.subr.bf16.mxu0 0
      %587 = vmatpush1.bf16.msra.mxu0 0
      %588 = vmatprep.subr.bf16.mxu0 0
      %589 = vmatpush1.bf16.msra.mxu0 0
      %590 = vmatprep.subr.bf16.mxu0 0
      %591 = vmatpush1.bf16.msra.mxu0 0
      %592 = vmatprep.subr.bf16.mxu0 0
      %593 = vmatpush1.bf16.msra.mxu0 0
      %594 = vmatprep.subr.bf16.mxu0 0
      %595 = vmatpush1.bf16.msra.mxu0 0
      %596 = vmatprep.subr.bf16.mxu0 0
      %597 = vmatpush1.bf16.msra.mxu0 0
      %598 = vmatprep.mubr.bf16.mxu0 0
      %599 = vmatmul.mubr.bf16.gmra.mrb[0].mxu0 %v561
      %v600 = vpop.f32.mrb[0].mxu0
      %v601 = vadd.f32 0.0, %v600
      %v602 = vpop.f32.mrb[0].mxu0
      %v603 = vpop.f32.mrb[0].mxu0
      %v604 = vpop.f32.mrb[0].mxu0
      %605 = vdwg.mxu0
      %v606 = vadd.f32 %v553, %v601
      %607 = vst.msk [vmem:[%s546] sm:$0xff] %vm335, %v606
      %608 = vst.msk [vmem:[%s521] sm:$0xff] %vm405, %v526
      // Predicated region
      $region41: #{pgen_forward.30} parent=35 // pred_check
        %p609 = pneg %p313
      $region42: #{pgen_forward.30} parent=35 // pred_check_branch
        %611 = sbr.rel (%p609) target = $region44
      $region43: #{pgen_forward.30} parent=35 // pred_region
        %v612 = vld [vmem:[#allocation4] sm:$0xff]
        %v613 = vld [vmem:[#allocation3] sm:$0xff]
        %v614 = vrcp.pop %v613
        %616 = vset.pattern.permute.xlu0 0
        %617 = vperm.xlu0 %616, %v614
        %v618 = vpop.permute.xlu0 %617
        %v620 = vmul.f32 %v612, %v618
        %v621 = vld [vmem:[%s546] sm:$0xff]
        %v622 = vld [vmem:[%s538] sm:$0xff]
        %v623 = vrcp.pop %v622
        %625 = vset.pattern.permute.xlu0 0
        %626 = vperm.xlu0 %625, %v623
        %v627 = vpop.permute.xlu0 %626
        %v629 = vmul.f32 %v621, %v627
        %631 = vrot.lane.b32.xlu0 %v629, 16
        %v632 = vpop.permute.xlu0 %631
        %v634 = vsel %vm335, %v620, %v632
        %v635 = vpack.c.bf16 %v634, %v634
        %vm636 = vcmask 257024
        %637 = vst.msk [vmem:[%s311] sm:$0xf] %vm636, %v635
      $region44: #{pgen_forward.30} parent=35 // pred_fallthru
        _
      %p638 = scmp.lt.s32.totalorder %s20, 1
      %s639 = scalar_select %p638, %s20, 1
      %p640 = scmp.lt.s32.totalorder %s21, 0
      %s641 = scalar_select %p640, %s21, 0
      %s642 = sadd.s32 %s641, %s639
      %s643 = smul.addr %s642, 4
      %s644 = scalar_lea.vmem %s4, %s643
      // Predicated region
      $region45: #{pgen_forward.30} parent=35 // pred_check
        %p645 = pneg %p166
      $region46: #{pgen_forward.30} parent=35 // pred_check_branch
        %647 = sbr.rel (%p645) target = $region48
      $region47: #{pgen_forward.30} parent=35 // pred_region
        _
      $region48: #{pgen_forward.30} parent=35 // pred_fallthru
        _
    $region36: #{pgen_forward.30} parent=5 // pred_fallthru
      _
    %p648 = scmp.le.s32.totalorder 2, %s10
    // Predicated region
    $region49: #{pgen_forward.30} parent=5 // pred_check
      %p649 = pneg %p648
    $region50: #{pgen_forward.30} parent=5 // pred_check_branch
      %651 = sbr.rel (%p649) target = $region52
    $region51: #{pgen_forward.30} parent=5 // pred_region
      %s652 = ssub.s32 %s10, 2
      // Predicated region
      $region53: #{pgen_forward.30} parent=51 // pred_check
        %p653 = pneg %p172
      $region54: #{pgen_forward.30} parent=51 // pred_check_branch
        %655 = sbr.rel (%p653) target = $region56
      $region55: #{pgen_forward.30} parent=51 // pred_region
        %p656 = scmp.lt.s32.totalorder %s23, 1
        %s657 = scalar_select %p656, %s23, 1
        %p658 = scmp.lt.s32.totalorder %s24, 0
        %s659 = scalar_select %p658, %s24, 0
        %s660 = sadd.s32 %s659, %s657
        %s661 = smul.addr %s660, 4
        %s662 = scalar_lea.vmem %s4, %s661
      $region56: #{pgen_forward.30} parent=51 // pred_fallthru
        _
    $region52: #{pgen_forward.30} parent=5 // pred_fallthru
      _
  $region6: #{pgen_forward.30} parent=0 // loop_footer
    %s14 = sadd.s32 1, %s10
  $region7: #{pgen_forward.30} parent=0 // loop_footer_branch
    %9 = sbr.rel target = $region3
  $region8: #{pgen_forward.30} parent=0 // loop_exit
    _

// kernel: pgen_forward.34
$region0: #{pgen_forward.34}
  #allocation0 [shape = 'u32[]', space=smem, size = 0x4, offset = 0x4, fixed_abs, tag = 'smem constant byte address 0x4 - core index']
  #allocation1 [shape = 'u32[144,128]{1,0:T(1,128)}', space=vmem, size = 0x12000, scoped, tag = 'internal scratch']
  #allocation2 [shape = 'f32[16,32]{1,0:T(8,128)}', space=vmem, size = 0x2000, scoped, tag = 'scratch operand']
  %s0 = inlined_call_operand.vmem [shape: bf16[16,64], index: 0, kind: input, shape index: {}]
  %s1 = inlined_call_operand.vmem [shape: bf16[64,32], index: 1, kind: input, shape index: {}]
  %s2 = inlined_call_operand.vmem [shape: f32[1,32], index: 2, kind: input, shape index: {}]
  %s3 = inlined_call_operand.vmem [shape: bf16[16,32], index: 3, kind: output, shape index: {}]
  %s4 = sld [smem:[#allocation0]]
  $region30: #{pgen_forward.34} parent=0
    _
  %s6 = ssub.s32 1, %s4
  %s7 = scalar_select 0, %s6, %s4
  // Predicated region
  $region2: #{pgen_forward.34} parent=0 // pred_check
    _
  $region3: #{pgen_forward.34} parent=0 // pred_check_branch
    %9 = sbr.rel (0) target = $region5
  $region4: #{pgen_forward.34} parent=0 // pred_region
    _
  $region5: #{pgen_forward.34} parent=0 // pred_fallthru
    _
  // Predicated region
  $region6: #{pgen_forward.34} parent=0 // pred_check
    _
  $region7: #{pgen_forward.34} parent=0 // pred_check_branch
    %11 = sbr.rel (0) target = $region9
  $region8: #{pgen_forward.34} parent=0 // pred_region
    _
  $region9: #{pgen_forward.34} parent=0 // pred_fallthru
    _
  // Predicated region
  $region10: #{pgen_forward.34} parent=0 // pred_check
    _
  $region11: #{pgen_forward.34} parent=0 // pred_check_branch
    %13 = sbr.rel (0) target = $region13
  $region12: #{pgen_forward.34} parent=0 // pred_region
    _
  $region13: #{pgen_forward.34} parent=0 // pred_fallthru
    _
  %p15 = scmp.eq.s32.totalorder 0, 0
  // Predicated region
  $region14: #{pgen_forward.34} parent=0 // pred_check
    %p16 = pneg %p15
  $region15: #{pgen_forward.34} parent=0 // pred_check_branch
    %18 = sbr.rel (%p16) target = $region17
  $region16: #{pgen_forward.34} parent=0 // pred_region
    %vm19 = vcmask 261120
    %20 = vst.msk [vmem:[#allocation2] sm:$0xff] %vm19, 0.0
    %21 = vst.msk [vmem:[#allocation2 + $0x8] sm:$0xff] %vm19, 0.0
  $region17: #{pgen_forward.34} parent=0 // pred_fallthru
    _
  %v22 = vld [vmem:[#allocation2] sm:$0xff]
  %v23 = vld [vmem:[#allocation2 + $0x8] sm:$0xff]
  %v24 = vld [vmem:[%s0] sm:$0xf]
  %v25 = vld [vmem:[%s0 + $0x4] sm:$0xf]
  %v26 = vld [vmem:[%s1] sm:$0xf]
  %v27 = vld [vmem:[%s1 + $0x4] sm:$0xf]
  %v28 = vld [vmem:[%s1 + $0x8] sm:$0xf]
  %v29 = vld [vmem:[%s1 + $0xc] sm:$0xf]
  %v30 = vld [vmem:[%s1 + $0x10] sm:$0xf]
  %v31 = vld [vmem:[%s1 + $0x14] sm:$0xf]
  %v32 = vld [vmem:[%s1 + $0x18] sm:$0xf]
  %v33 = vld [vmem:[%s1 + $0x1c] sm:$0xf]
  %v36 = vunpack.c.l.b16 %v24
  %v37 = vunpack.c.l.b16 %v25
  %v38 = vpack.c.b16 %v37, %v36
  %v47 = vunpack.c.l.b16 %v26
  %v48 = vunpack.c.l.b16 %v27
  %v49 = vunpack.c.l.b16 %v28
  %v50 = vunpack.c.l.b16 %v29
  %v51 = vunpack.c.l.b16 %v30
  %v52 = vunpack.c.l.b16 %v31
  %v53 = vunpack.c.l.b16 %v32
  %v54 = vunpack.c.l.b16 %v33
  %v55 = vpack.c.b16 %v48, %v47
  %v56 = vpack.c.b16 %v50, %v49
  %v57 = vpack.c.b16 %v52, %v51
  %v58 = vpack.c.b16 %v54, %v53
  %vm63 = vcmask 523264
  %v65 = vsel %vm63, %v38, 0
  %67 = vmatprep.subr.bf16.mxu0 0
  %68 = vmatpush1.bf16.msra.mxu0 %v55
  %69 = vmatprep.subr.bf16.mxu0 0
  %70 = vmatpush1.bf16.msra.mxu0 %v56
  %71 = vmatprep.subr.bf16.mxu0 0
  %72 = vmatpush1.bf16.msra.mxu0 %v57
  %73 = vmatprep.subr.bf16.mxu0 0
  %74 = vmatpush1.bf16.msra.mxu0 %v58
  %75 = vmatprep.subr.bf16.mxu0 0
  %76 = vmatpush1.bf16.msra.mxu0 0
  %77 = vmatprep.subr.bf16.mxu0 0
  %78 = vmatpush1.bf16.msra.mxu0 0
  %79 = vmatprep.subr.bf16.mxu0 0
  %80 = vmatpush1.bf16.msra.mxu0 0
  %81 = vmatprep.subr.bf16.mxu0 0
  %82 = vmatpush1.bf16.msra.mxu0 0
  %83 = vmatprep.subr.bf16.mxu0 0
  %84 = vmatpush1.bf16.msra.mxu0 0
  %85 = vmatprep.subr.bf16.mxu0 0
  %86 = vmatpush1.bf16.msra.mxu0 0
  %87 = vmatprep.subr.bf16.mxu0 0
  %88 = vmatpush1.bf16.msra.mxu0 0
  %89 = vmatprep.subr.bf16.mxu0 0
  %90 = vmatpush1.bf16.msra.mxu0 0
  %91 = vmatprep.subr.bf16.mxu0 0
  %92 = vmatpush1.bf16.msra.mxu0 0
  %93 = vmatprep.subr.bf16.mxu0 0
  %94 = vmatpush1.bf16.msra.mxu0 0
  %95 = vmatprep.subr.bf16.mxu0 0
  %96 = vmatpush1.bf16.msra.mxu0 0
  %97 = vmatprep.subr.bf16.mxu0 0
  %98 = vmatpush1.bf16.msra.mxu0 0
  %99 = vmatprep.mubr.bf16.mxu0 0
  %100 = vmatmul.mubr.bf16.gmra.mrb[0].mxu0 %v65
  %v101 = vpop.f32.mrb[0].mxu0
  %v102 = vadd.f32 0.0, %v101
  %v103 = vpop.f32.mrb[0].mxu0
  %v104 = vpop.f32.mrb[0].mxu0
  %v105 = vadd.f32 0.0, %v104
  %v106 = vpop.f32.mrb[0].mxu0
  %107 = vdwg.mxu0
  %v108 = vadd.f32 %v22, %v102
  %v109 = vadd.f32 %v23, %v105
  %vm110 = vcmask 261120
  %111 = vst.msk [vmem:[#allocation2] sm:$0xff] %vm110, %v108
  %112 = vst.msk [vmem:[#allocation2 + $0x8] sm:$0xff] %vm110, %v109
  // Predicated region
  $region18: #{pgen_forward.34} parent=0 // pred_check
    %p113 = pneg %p15
  $region19: #{pgen_forward.34} parent=0 // pred_check_branch
    %115 = sbr.rel (%p113) target = $region21
  $region20: #{pgen_forward.34} parent=0 // pred_region
    %v116 = vld [vmem:[#allocation2] sm:$0xff]
    %v117 = vld [vmem:[#allocation2 + $0x8] sm:$0xff]
    %v118 = vld [vmem:[%s2] sm:$0x1]
    %v120 = vlaneseq
    %v121 = vshrl.u32 %v120, 7
    %v122 = vsub.s32 0, %v121
    %v123 = vrot.slane %v118, %v122
    %v125 = vadd.f32 %v116, %v123
    %v126 = vadd.f32 %v117, %v123
    %v127 = vpack.c.bf16 %v126, %v125
    %v129 = vunpack.c.l.b16 %v127
    %v130 = vunpack.c.h.b16 %v127
    %v131 = vpack.c.b16 %v129, %v129
    %v132 = vpack.c.b16 %v130, %v130
    %vm135 = vcmask 257024
    %136 = vst.msk [vmem:[%s3] sm:$0xf] %vm135, %v131
    %137 = vst.msk [vmem:[%s3 + $0x4] sm:$0xf] %vm135, %v132
  $region21: #{pgen_forward.34} parent=0 // pred_fallthru
    _
  // Predicated region
  $region22: #{pgen_forward.34} parent=0 // pred_check
    _
  $region23: #{pgen_forward.34} parent=0 // pred_check_branch
    %139 = sbr.rel (0) target = $region25
  $region24: #{pgen_forward.34} parent=0 // pred_region
    _
  $region25: #{pgen_forward.34} parent=0 // pred_fallthru
    _
  // Predicated region
  $region26: #{pgen_forward.34} parent=0 // pred_check
    _
  $region27: #{pgen_forward.34} parent=0 // pred_check_branch
    %141 = sbr.rel (0) target = $region29
  $region28: #{pgen_forward.34} parent=0 // pred_region
    _
  $region29: #{pgen_forward.34} parent=0 // pred_fallthru
    _

</llo_original>
